<compile_context>
chip_gen: v7x
topology: tpu7x:2x2x1
jax: 0.10.0
libtpu: 0.0.40
codegen_flags: <defaults>
</compile_context>

<pallas_src>
import functools

import jax
import jax.numpy as jnp
from jax import lax
from jax.experimental import pallas as pl
from jax.experimental.pallas import tpu as pltpu


# ---------------------------------------------------------------------------
# Parameter setup (deterministic, mirrors __init__ + normalize_weights)
# ---------------------------------------------------------------------------
def _l1_normalize_rows(w, eps=1e-12):
    return w / jnp.maximum(jnp.sum(jnp.abs(w), axis=1, keepdims=True), eps)


def normalize_weights(w, threshold=1e-5):
    # F.normalize(p=1, dim=1) -> clamp_min(threshold) -> F.normalize(p=1, dim=1)
    w = _l1_normalize_rows(w)
    w = jnp.maximum(w, threshold)
    w = _l1_normalize_rows(w)
    return w


def init_params(key, seq_len, features, heads):
    fh = features // heads
    k1, k2, k3, k4 = jax.random.split(key, 4)
    local_weight = jax.random.uniform(k1, (fh, fh), jnp.float32)        # U(0,1)
    global_weight = jax.random.uniform(k2, (seq_len, seq_len), jnp.float32)
    bound = 1.0 / (features ** 0.5)
    out_w = jax.random.uniform(k3, (features, features), jnp.float32,
                               minval=-bound, maxval=bound)
    out_b = jax.random.uniform(k4, (features,), jnp.float32,
                               minval=-bound, maxval=bound)
    return {
        "local_weight": normalize_weights(local_weight),
        "global_weight": normalize_weights(global_weight),
        "out_w": out_w,
        "out_b": out_b,
    }


# ---------------------------------------------------------------------------
# Fused Pallas kernel: NNMF iterations + output projection, one batch per step
# ---------------------------------------------------------------------------
def _nnmf_fused_kernel(*refs, n_iterations, inv_fh, apply_out_proj,
                       approx_recip, unroll):
    if apply_out_proj:
        (x_ref, g_ref, gt_ref, wlb_ref, wlbt_ref, sum_ref, bcast_ref,
         wout_t_ref, bout_ref, o_ref) = refs
    else:
        (x_ref, g_ref, gt_ref, wlb_ref, wlbt_ref, sum_ref, bcast_ref,
         o_ref) = refs
        wout_t_ref = bout_ref = None

    f32 = jnp.float32
    x = x_ref[...].astype(f32)        # (L, C) non-negative input, C lane-dense
    g = g_ref[...]                    # (L, L)  global_weight            (mm dtype)
    gt = gt_ref[...]                  # (L, L)  global_weight^T          (mm dtype)
    wlb = wlb_ref[...]                # (C, C)  blockdiag(local_weight)  (mm dtype)
    wlbt = wlbt_ref[...]              # (C, C)  blockdiag(local_weight)^T
    ones_sum = sum_ref[...]           # (C, H)  per-head column-sum matrix (f32)
    ones_bcast = bcast_ref[...]       # (H, C)  per-head broadcast matrix  (f32)

    mm_dtype = g.dtype                # f32 or bf16 (set by the wrapper)

    def mm(a, b):
        # BOTH operands cast to the matmul dtype so the dominant G matmuls hit the
        # bf16 MXU path on the fast path; accumulation is always f32.
        return jnp.dot(a.astype(mm_dtype), b.astype(mm_dtype),
                       preferred_element_type=f32)

    def recip(v):
        if approx_recip:
            return pl.reciprocal(v, approx=True)   # EUP slot, otherwise idle
        return 1.0 / v                             # exact (strict f32 path)

    def head_sums(v):
        # (L, C) -> (L, H) per-head sums.  Kept in f32 (N = H is tiny) so the L1
        # denominators are never bf16-rounded.
        return jnp.dot(v, ones_sum, preferred_element_type=f32)

    def head_broadcast(s):
        # (L, H) -> (L, C): replicate each head's scalar across its Fh lanes via a
        # tiny MXU matmul (no cross-lane XLU relayout).
        return jnp.dot(s, ones_bcast, preferred_element_type=f32)

    def seg_l1_normalize(v, nonneg):
        s = head_sums(v if nonneg else jnp.abs(v))
        return v * head_broadcast(recip(jnp.maximum(s, 1e-20)))

    # F.normalize(input, p=1, dim=-1) per head.
    x = seg_l1_normalize(x, nonneg=False)

    # _reset_h: L1-normalized ones -> 1/Fh everywhere.
    h0 = jnp.full(x.shape, inv_fh, dtype=f32)

    def body(h):
        # _reconstruct: X_r = G^T @ h @ blockdiag(Wl)   (all transposes hoisted)
        xr = mm(gt, mm(h, wlb))
        xr = jnp.maximum(xr, 1e-4)
        # Fused "normalize X_r, then divide":
        #   input / (X_r/s + 1e-12) == input * s / (X_r + 1e-12*s) ~= input * s / X_r
        # (X_r >= 1e-4, so dropping the 1e-12*s term is a <=1e-8*s relative error).
        s = head_sums(xr)                         # X_r already non-negative
        u = x * head_broadcast(s) * recip(xr)
        # _forward: G @ (U @ blockdiag(Wl)^T); multiplicative update (rate = 1).
        h = h * mm(g, mm(u, wlbt))
        # _process_h: per-head L1 normalize (h non-negative by construction).
        return seg_l1_normalize(h, nonneg=True)

    if unroll:
        h = h0
        for _ in range(n_iterations):     # short static unroll (LLO visibility)
            h = body(h)
    else:
        h = lax.fori_loop(0, n_iterations, lambda _, hh: body(hh), h0)

    if apply_out_proj:
        # Fused nn.Linear epilogue: h @ Wout^T + b (Wout pre-transposed).
        out = mm(h, wout_t_ref[...]) + bout_ref[...].astype(f32)
    else:
        out = h
    o_ref[...] = out.astype(o_ref.dtype)


def nnmf_attention_forward(x, params, heads, n_iterations, *,
                           use_out_proj=True, matmul_dtype=jnp.float32):
    """x: (B, L, C) non-negative, NLC layout. Returns (B, L, C)."""
    B, L, C = x.shape
    Fh = C // heads
    assert heads * Fh == C

    gw = params["global_weight"].astype(jnp.float32)   # (L, L)
    lw = params["local_weight"].astype(jnp.float32)    # (Fh, Fh)

    # Grid-invariant operands built ONCE in the wrapper (no transposes or
    # re-materialization inside the kernel's iteration loop).
    eye_h = jnp.eye(heads, dtype=jnp.float32)
    wl_block = jnp.kron(eye_h, lw)                                   # (C, C)
    wl_block_t = wl_block.T                                          # blockdiag(Wl^T)
    ones_sum = jnp.kron(eye_h, jnp.ones((Fh, 1), jnp.float32))       # (C, H)
    ones_bcast = jnp.kron(eye_h, jnp.ones((1, Fh), jnp.float32))     # (H, C)
    g = gw
    gt = gw.T

    # Cast the static matmul operands once.  bf16 is the fast path on v5e/v6e/v7x
    # (all MXUs are bf16-native); f32 keeps strict reference numerics.
    mmd = jnp.dtype(matmul_dtype)
    itm = mmd.itemsize
    g, gt, wl_block, wl_block_t = (a.astype(mmd)
                                   for a in (g, gt, wl_block, wl_block_t))

    operands = [x, g, gt, wl_block, wl_block_t, ones_sum, ones_bcast]
    if use_out_proj:
        wout_t = params["out_w"].T.astype(mmd)                       # nn.Linear W^T
        bout = params["out_b"].reshape(1, C).astype(jnp.float32)
        operands += [wout_t, bout]

    approx_recip = (mmd != jnp.dtype(jnp.float32))
    # Static unroll only for small iteration counts AND small tiles; otherwise a
    # fori_loop bounds live ranges (VMEM safety on v7x's 64 MiB).
    unroll = (n_iterations <= 4) and (L * C <= 128 * 1024)

    kernel = functools.partial(
        _nnmf_fused_kernel,
        n_iterations=n_iterations,
        inv_fh=1.0 / Fh,
        apply_out_proj=use_out_proj,
        approx_recip=approx_recip,
        unroll=unroll,
    )

    # Physical VMEM of this generation (64 MiB per TensorCore on v7x).
    try:
        hw_vmem = int(pltpu.get_tpu_info().vmem_capacity_bytes)
    except Exception:
        hw_vmem = 64 << 20   # conservative fallback

    def _run(invariant_mode):
        kw = {} if invariant_mode is None else dict(pipeline_mode=invariant_mode)
        in_specs = [
            pl.BlockSpec((pl.Squeezed(), L, C), lambda b: (b, 0, 0)),        # x
            pl.BlockSpec((L, L), lambda b: (0, 0), **kw),                    # G
            pl.BlockSpec((L, L), lambda b: (0, 0), **kw),                    # G^T
            pl.BlockSpec((C, C), lambda b: (0, 0), **kw),                    # blockdiag Wl
            pl.BlockSpec((C, C), lambda b: (0, 0), **kw),                    # blockdiag Wl^T
            pl.BlockSpec((C, heads), lambda b: (0, 0), **kw),                # head-sum ones
            pl.BlockSpec((heads, C), lambda b: (0, 0), **kw),                # head-bcast ones
        ]
        if use_out_proj:
            in_specs += [
                pl.BlockSpec((C, C), lambda b: (0, 0), **kw),                # Wout^T
                pl.BlockSpec((1, C), lambda b: (0, 0), **kw),                # bias
            ]

        nbuf = 1 if invariant_mode is not None else 2
        n_wout = 1 if use_out_proj else 0
        const_bytes = (itm * (2 * L * L + (2 + n_wout) * C * C)
                       + 4 * (2 * C * heads + C))
        est = (4 * L * C * 4                 # x + out blocks (double-buffered)
               + nbuf * const_bytes          # grid-invariant operands
               + 12 * L * C * 4              # live f32 temporaries
               + (8 << 20))                  # compiler scratch margin
        vmem_limit = int(min(hw_vmem - (8 << 20), max(32 << 20, est)))
        vmem_limit = max(vmem_limit, 16 << 20)

        # TODO(synk): for realistic L (>=2048), stream the L contraction of the two G
        # matmuls over an extra 'arbitrary' grid axis (bf16 G kept in HBM), and when
        # B == 1 add a head-split 'parallel' axis so both v7x TensorCores stay busy and
        # the (L,L)/(C,C) operands never need to fit the 64 MiB VMEM whole.
        # TODO(synk): when Fh is an MXU tile (>=256 on v6e/v7x, >=128 on v5e), split the
        # Wl matmuls per head group to avoid the (H-1)/H zero-block waste of blockdiag(Wl).
        return pl.pallas_call(
            kernel,
            out_shape=jax.ShapeDtypeStruct((B, L, C), x.dtype),
            grid_spec=pltpu.PrefetchScalarGridSpec(
                num_scalar_prefetch=0,
                grid=(B,),
                in_specs=in_specs,
                out_specs=pl.BlockSpec((pl.Squeezed(), L, C), lambda b: (b, 0, 0)),
            ),
            compiler_params=pltpu.CompilerParams(
                dimension_semantics=("parallel",),   # batch steps across v7x cores
                vmem_limit_bytes=vmem_limit,
            ),
        )(*operands)

    try:
        # Single-buffer the grid-invariant operands (pure VMEM saving).
        return _run(pl.Buffered(1))
    except Exception:
        # Fallback: default double-buffering if Buffered(1) is not supported here.
        return _run(None)


# ---------------------------------------------------------------------------
# Pure-JAX reference (literal transcription of the PyTorch forward, f32 precision)
# ---------------------------------------------------------------------------
def reference_forward(x, params, heads, n_iterations, use_out_proj=True):
    HI = jax.lax.Precision.HIGHEST
    B, L, C = x.shape
    Fh = C // heads
    gw = params["global_weight"]
    lw = params["local_weight"]
    xr = x.reshape(B, L, heads, Fh)
    xr = xr / jnp.maximum(jnp.sum(jnp.abs(xr), -1, keepdims=True), 1e-20)
    h = jnp.full_like(xr, 1.0 / Fh)
    for _ in range(n_iterations):
        x_rec = jnp.einsum('bohf,oi->bihf', h, gw, precision=HI)
        x_rec = jnp.einsum('bihf,fg->bihg', x_rec, lw, precision=HI)   # F.linear(., Wl.T)
        x_rec = jnp.maximum(x_rec, 1e-4)
        x_rec = x_rec / jnp.maximum(jnp.sum(x_rec, -1, keepdims=True), 1e-20)
        u = xr / (x_rec + 1e-12)
        fwd = jnp.einsum('bihg,fg->bihf', u, lw, precision=HI)         # F.linear(., Wl)
        fwd = jnp.einsum('bihf,oi->bohf', fwd, gw, precision=HI)
        h = h * fwd
        h = h / jnp.maximum(jnp.sum(jnp.abs(h), -1, keepdims=True), 1e-20)
    h = h.reshape(B, L, C)
    if use_out_proj:
        h = jnp.einsum('blc,dc->bld', h, params["out_w"], precision=HI) + params["out_b"]
    return h


if __name__ == "__main__":
    # Small deterministic example: B=2, seq_len=8, features=32, heads=4
    B, L, C, H = 2, 8, 32, 4
    N_ITER = 3  # n_iterations multiplicative updates (training / 'all_grads' path)

    key = jax.random.PRNGKey(0)
    kx, kp = jax.random.split(key)
    # _check_forward asserts the input is non-negative.
    x = jax.random.uniform(kx, (B, L, C), jnp.float32)
    params = init_params(kp, seq_len=L, features=C, heads=H)

    # Strict f32 path: exact reciprocals + f32 MXU accumulation (expected error ~1e-5).
    out = nnmf_attention_forward(x, params, heads=H, n_iterations=N_ITER)
    out = jax.block_until_ready(out)
    ref = reference_forward(x, params, heads=H, n_iterations=N_ITER)
    assert out.shape == (B, L, C)
    max_err = float(jnp.max(jnp.abs(out - ref)))
    assert max_err < 5e-4, max_err

    # bf16 matmul-input fast path (all generations); elementwise update math,
    # normalization sums and accumulation stay f32 -> loose tolerance expected.
    out_bf16 = nnmf_attention_forward(x, params, heads=H, n_iterations=N_ITER,
                                      matmul_dtype=jnp.bfloat16)
    out_bf16 = jax.block_until_ready(out_bf16)
    assert bool(jnp.all(jnp.isfinite(out_bf16)))
    assert jnp.allclose(out_bf16, ref, rtol=1e-1, atol=1e-1), \
        float(jnp.max(jnp.abs(out_bf16 - ref)))

    print("KERNEL_OK")
</pallas_src>

<mosaic_0001>
module attributes {stable_mosaic.version = 11 : i64} {
  func.func @_nnmf_fused_kernel(%arg0: i32, %arg1: memref<1x8x32xf32, #tpu.memory_space<vmem>>, %arg2: memref<8x8xf32, #tpu.memory_space<vmem>>, %arg3: memref<8x8xf32, #tpu.memory_space<vmem>>, %arg4: memref<32x32xf32, #tpu.memory_space<vmem>>, %arg5: memref<32x32xf32, #tpu.memory_space<vmem>>, %arg6: memref<32x4xf32, #tpu.memory_space<vmem>>, %arg7: memref<4x32xf32, #tpu.memory_space<vmem>>, %arg8: memref<32x32xf32, #tpu.memory_space<vmem>>, %arg9: memref<1x32xf32, #tpu.memory_space<vmem>>, %arg10: memref<1x8x32xf32, #tpu.memory_space<vmem>>) attributes {dimension_semantics = [#tpu.dimension_semantics<parallel>], iteration_bounds = array<i64: 2>, scalar_prefetch = 0 : i64, scratch_operands = 0 : i64, tpu.core_type = #tpu.core_type<tc>, window_params = [{transform_indices = @transform_0, window_bounds = array<i64: 1, 8, 32>}, {pipeline_mode = #tpu.pipeline_mode<synchronous>, transform_indices = @transform_1, window_bounds = array<i64: 8, 8>}, {pipeline_mode = #tpu.pipeline_mode<synchronous>, transform_indices = @transform_2, window_bounds = array<i64: 8, 8>}, {pipeline_mode = #tpu.pipeline_mode<synchronous>, transform_indices = @transform_3, window_bounds = array<i64: 32, 32>}, {pipeline_mode = #tpu.pipeline_mode<synchronous>, transform_indices = @transform_4, window_bounds = array<i64: 32, 32>}, {pipeline_mode = #tpu.pipeline_mode<synchronous>, transform_indices = @transform_5, window_bounds = array<i64: 32, 4>}, {pipeline_mode = #tpu.pipeline_mode<synchronous>, transform_indices = @transform_6, window_bounds = array<i64: 4, 32>}, {pipeline_mode = #tpu.pipeline_mode<synchronous>, transform_indices = @transform_7, window_bounds = array<i64: 32, 32>}, {pipeline_mode = #tpu.pipeline_mode<synchronous>, transform_indices = @transform_8, window_bounds = array<i64: 1, 32>}, {transform_indices = @transform_9, window_bounds = array<i64: 1, 8, 32>}]} {
    %c0 = arith.constant 0 : index
    %c0_0 = arith.constant 0 : index
    %c0_1 = arith.constant 0 : index
    %0 = vector.load %arg1[%c0, %c0_0, %c0_1] : memref<1x8x32xf32, #tpu.memory_space<vmem>>, vector<1x8x32xf32>
    %1 = vector.shape_cast %0 : vector<1x8x32xf32> to vector<8x32xf32>
    %c0_2 = arith.constant 0 : index
    %c0_3 = arith.constant 0 : index
    %2 = vector.load %arg2[%c0_2, %c0_3] : memref<8x8xf32, #tpu.memory_space<vmem>>, vector<8x8xf32>
    %c0_4 = arith.constant 0 : index
    %c0_5 = arith.constant 0 : index
    %3 = vector.load %arg3[%c0_4, %c0_5] : memref<8x8xf32, #tpu.memory_space<vmem>>, vector<8x8xf32>
    %c0_6 = arith.constant 0 : index
    %c0_7 = arith.constant 0 : index
    %4 = vector.load %arg4[%c0_6, %c0_7] : memref<32x32xf32, #tpu.memory_space<vmem>>, vector<32x32xf32>
    %c0_8 = arith.constant 0 : index
    %c0_9 = arith.constant 0 : index
    %5 = vector.load %arg5[%c0_8, %c0_9] : memref<32x32xf32, #tpu.memory_space<vmem>>, vector<32x32xf32>
    %c0_10 = arith.constant 0 : index
    %c0_11 = arith.constant 0 : index
    %6 = vector.load %arg6[%c0_10, %c0_11] : memref<32x4xf32, #tpu.memory_space<vmem>>, vector<32x4xf32>
    %c0_12 = arith.constant 0 : index
    %c0_13 = arith.constant 0 : index
    %7 = vector.load %arg7[%c0_12, %c0_13] : memref<4x32xf32, #tpu.memory_space<vmem>>, vector<4x32xf32>
    %8 = math.absf %1 : vector<8x32xf32>
    %cst = arith.constant dense<0.000000e+00> : vector<8x4xf32>
    %9 = tpu.matmul %8, %6, %cst {dimension_numbers = #tpu.dot_dimension_numbers<[1], [0], [0], [1], [0, 0, 1, 1], [], []>} : vector<8x32xf32>, vector<32x4xf32>, vector<8x4xf32> -> vector<8x4xf32>
    %cst_14 = arith.constant 9.99999968E-21 : f32
    %10 = vector.broadcast %cst_14 : f32 to vector<8x4xf32>
    %11 = arith.maximumf %9, %10 : vector<8x4xf32>
    %cst_15 = arith.constant 1.000000e+00 : f32
    %12 = vector.broadcast %cst_15 : f32 to vector<8x4xf32>
    %13 = arith.divf %12, %11 : vector<8x4xf32>
    %cst_16 = arith.constant dense<0.000000e+00> : vector<8x32xf32>
    %14 = tpu.matmul %13, %7, %cst_16 {dimension_numbers = #tpu.dot_dimension_numbers<[1], [0], [0], [1], [0, 0, 1, 1], [], []>} : vector<8x4xf32>, vector<4x32xf32>, vector<8x32xf32> -> vector<8x32xf32>
    %15 = arith.mulf %1, %14 : vector<8x32xf32>
    %cst_17 = arith.constant 1.250000e-01 : f32
    %16 = vector.broadcast %cst_17 : f32 to vector<8x32xf32>
    %cst_18 = arith.constant dense<0.000000e+00> : vector<8x32xf32>
    %17 = tpu.matmul %16, %4, %cst_18 {dimension_numbers = #tpu.dot_dimension_numbers<[1], [0], [0], [1], [0, 0, 1, 1], [], []>} : vector<8x32xf32>, vector<32x32xf32>, vector<8x32xf32> -> vector<8x32xf32>
    %cst_19 = arith.constant dense<0.000000e+00> : vector<8x32xf32>
    %18 = tpu.matmul %3, %17, %cst_19 {dimension_numbers = #tpu.dot_dimension_numbers<[1], [0], [0], [1], [0, 0, 1, 1], [], []>} : vector<8x8xf32>, vector<8x32xf32>, vector<8x32xf32> -> vector<8x32xf32>
    %cst_20 = arith.constant 9.99999974E-5 : f32
    %19 = vector.broadcast %cst_20 : f32 to vector<8x32xf32>
    %20 = arith.maximumf %18, %19 : vector<8x32xf32>
    %cst_21 = arith.constant dense<0.000000e+00> : vector<8x4xf32>
    %21 = tpu.matmul %20, %6, %cst_21 {dimension_numbers = #tpu.dot_dimension_numbers<[1], [0], [0], [1], [0, 0, 1, 1], [], []>} : vector<8x32xf32>, vector<32x4xf32>, vector<8x4xf32> -> vector<8x4xf32>
    %cst_22 = arith.constant dense<0.000000e+00> : vector<8x32xf32>
    %22 = tpu.matmul %21, %7, %cst_22 {dimension_numbers = #tpu.dot_dimension_numbers<[1], [0], [0], [1], [0, 0, 1, 1], [], []>} : vector<8x4xf32>, vector<4x32xf32>, vector<8x32xf32> -> vector<8x32xf32>
    %23 = arith.mulf %15, %22 : vector<8x32xf32>
    %cst_23 = arith.constant 1.000000e+00 : f32
    %24 = vector.broadcast %cst_23 : f32 to vector<8x32xf32>
    %25 = arith.divf %24, %20 : vector<8x32xf32>
    %26 = arith.mulf %23, %25 : vector<8x32xf32>
    %cst_24 = arith.constant dense<0.000000e+00> : vector<8x32xf32>
    %27 = tpu.matmul %26, %5, %cst_24 {dimension_numbers = #tpu.dot_dimension_numbers<[1], [0], [0], [1], [0, 0, 1, 1], [], []>} : vector<8x32xf32>, vector<32x32xf32>, vector<8x32xf32> -> vector<8x32xf32>
    %cst_25 = arith.constant dense<0.000000e+00> : vector<8x32xf32>
    %28 = tpu.matmul %2, %27, %cst_25 {dimension_numbers = #tpu.dot_dimension_numbers<[1], [0], [0], [1], [0, 0, 1, 1], [], []>} : vector<8x8xf32>, vector<8x32xf32>, vector<8x32xf32> -> vector<8x32xf32>
    %29 = arith.mulf %16, %28 : vector<8x32xf32>
    %cst_26 = arith.constant dense<0.000000e+00> : vector<8x4xf32>
    %30 = tpu.matmul %29, %6, %cst_26 {dimension_numbers = #tpu.dot_dimension_numbers<[1], [0], [0], [1], [0, 0, 1, 1], [], []>} : vector<8x32xf32>, vector<32x4xf32>, vector<8x4xf32> -> vector<8x4xf32>
    %cst_27 = arith.constant 9.99999968E-21 : f32
    %31 = vector.broadcast %cst_27 : f32 to vector<8x4xf32>
    %32 = arith.maximumf %30, %31 : vector<8x4xf32>
    %cst_28 = arith.constant 1.000000e+00 : f32
    %33 = vector.broadcast %cst_28 : f32 to vector<8x4xf32>
    %34 = arith.divf %33, %32 : vector<8x4xf32>
    %cst_29 = arith.constant dense<0.000000e+00> : vector<8x32xf32>
    %35 = tpu.matmul %34, %7, %cst_29 {dimension_numbers = #tpu.dot_dimension_numbers<[1], [0], [0], [1], [0, 0, 1, 1], [], []>} : vector<8x4xf32>, vector<4x32xf32>, vector<8x32xf32> -> vector<8x32xf32>
    %36 = arith.mulf %29, %35 : vector<8x32xf32>
    %cst_30 = arith.constant dense<0.000000e+00> : vector<8x32xf32>
    %37 = tpu.matmul %36, %4, %cst_30 {dimension_numbers = #tpu.dot_dimension_numbers<[1], [0], [0], [1], [0, 0, 1, 1], [], []>} : vector<8x32xf32>, vector<32x32xf32>, vector<8x32xf32> -> vector<8x32xf32>
    %cst_31 = arith.constant dense<0.000000e+00> : vector<8x32xf32>
    %38 = tpu.matmul %3, %37, %cst_31 {dimension_numbers = #tpu.dot_dimension_numbers<[1], [0], [0], [1], [0, 0, 1, 1], [], []>} : vector<8x8xf32>, vector<8x32xf32>, vector<8x32xf32> -> vector<8x32xf32>
    %cst_32 = arith.constant 9.99999974E-5 : f32
    %39 = vector.broadcast %cst_32 : f32 to vector<8x32xf32>
    %40 = arith.maximumf %38, %39 : vector<8x32xf32>
    %cst_33 = arith.constant dense<0.000000e+00> : vector<8x4xf32>
    %41 = tpu.matmul %40, %6, %cst_33 {dimension_numbers = #tpu.dot_dimension_numbers<[1], [0], [0], [1], [0, 0, 1, 1], [], []>} : vector<8x32xf32>, vector<32x4xf32>, vector<8x4xf32> -> vector<8x4xf32>
    %cst_34 = arith.constant dense<0.000000e+00> : vector<8x32xf32>
    %42 = tpu.matmul %41, %7, %cst_34 {dimension_numbers = #tpu.dot_dimension_numbers<[1], [0], [0], [1], [0, 0, 1, 1], [], []>} : vector<8x4xf32>, vector<4x32xf32>, vector<8x32xf32> -> vector<8x32xf32>
    %43 = arith.mulf %15, %42 : vector<8x32xf32>
    %cst_35 = arith.constant 1.000000e+00 : f32
    %44 = vector.broadcast %cst_35 : f32 to vector<8x32xf32>
    %45 = arith.divf %44, %40 : vector<8x32xf32>
    %46 = arith.mulf %43, %45 : vector<8x32xf32>
    %cst_36 = arith.constant dense<0.000000e+00> : vector<8x32xf32>
    %47 = tpu.matmul %46, %5, %cst_36 {dimension_numbers = #tpu.dot_dimension_numbers<[1], [0], [0], [1], [0, 0, 1, 1], [], []>} : vector<8x32xf32>, vector<32x32xf32>, vector<8x32xf32> -> vector<8x32xf32>
    %cst_37 = arith.constant dense<0.000000e+00> : vector<8x32xf32>
    %48 = tpu.matmul %2, %47, %cst_37 {dimension_numbers = #tpu.dot_dimension_numbers<[1], [0], [0], [1], [0, 0, 1, 1], [], []>} : vector<8x8xf32>, vector<8x32xf32>, vector<8x32xf32> -> vector<8x32xf32>
    %49 = arith.mulf %36, %48 : vector<8x32xf32>
    %cst_38 = arith.constant dense<0.000000e+00> : vector<8x4xf32>
    %50 = tpu.matmul %49, %6, %cst_38 {dimension_numbers = #tpu.dot_dimension_numbers<[1], [0], [0], [1], [0, 0, 1, 1], [], []>} : vector<8x32xf32>, vector<32x4xf32>, vector<8x4xf32> -> vector<8x4xf32>
    %cst_39 = arith.constant 9.99999968E-21 : f32
    %51 = vector.broadcast %cst_39 : f32 to vector<8x4xf32>
    %52 = arith.maximumf %50, %51 : vector<8x4xf32>
    %cst_40 = arith.constant 1.000000e+00 : f32
    %53 = vector.broadcast %cst_40 : f32 to vector<8x4xf32>
    %54 = arith.divf %53, %52 : vector<8x4xf32>
    %cst_41 = arith.constant dense<0.000000e+00> : vector<8x32xf32>
    %55 = tpu.matmul %54, %7, %cst_41 {dimension_numbers = #tpu.dot_dimension_numbers<[1], [0], [0], [1], [0, 0, 1, 1], [], []>} : vector<8x4xf32>, vector<4x32xf32>, vector<8x32xf32> -> vector<8x32xf32>
    %56 = arith.mulf %49, %55 : vector<8x32xf32>
    %cst_42 = arith.constant dense<0.000000e+00> : vector<8x32xf32>
    %57 = tpu.matmul %56, %4, %cst_42 {dimension_numbers = #tpu.dot_dimension_numbers<[1], [0], [0], [1], [0, 0, 1, 1], [], []>} : vector<8x32xf32>, vector<32x32xf32>, vector<8x32xf32> -> vector<8x32xf32>
    %cst_43 = arith.constant dense<0.000000e+00> : vector<8x32xf32>
    %58 = tpu.matmul %3, %57, %cst_43 {dimension_numbers = #tpu.dot_dimension_numbers<[1], [0], [0], [1], [0, 0, 1, 1], [], []>} : vector<8x8xf32>, vector<8x32xf32>, vector<8x32xf32> -> vector<8x32xf32>
    %cst_44 = arith.constant 9.99999974E-5 : f32
    %59 = vector.broadcast %cst_44 : f32 to vector<8x32xf32>
    %60 = arith.maximumf %58, %59 : vector<8x32xf32>
    %cst_45 = arith.constant dense<0.000000e+00> : vector<8x4xf32>
    %61 = tpu.matmul %60, %6, %cst_45 {dimension_numbers = #tpu.dot_dimension_numbers<[1], [0], [0], [1], [0, 0, 1, 1], [], []>} : vector<8x32xf32>, vector<32x4xf32>, vector<8x4xf32> -> vector<8x4xf32>
    %cst_46 = arith.constant dense<0.000000e+00> : vector<8x32xf32>
    %62 = tpu.matmul %61, %7, %cst_46 {dimension_numbers = #tpu.dot_dimension_numbers<[1], [0], [0], [1], [0, 0, 1, 1], [], []>} : vector<8x4xf32>, vector<4x32xf32>, vector<8x32xf32> -> vector<8x32xf32>
    %63 = arith.mulf %15, %62 : vector<8x32xf32>
    %cst_47 = arith.constant 1.000000e+00 : f32
    %64 = vector.broadcast %cst_47 : f32 to vector<8x32xf32>
    %65 = arith.divf %64, %60 : vector<8x32xf32>
    %66 = arith.mulf %63, %65 : vector<8x32xf32>
    %cst_48 = arith.constant dense<0.000000e+00> : vector<8x32xf32>
    %67 = tpu.matmul %66, %5, %cst_48 {dimension_numbers = #tpu.dot_dimension_numbers<[1], [0], [0], [1], [0, 0, 1, 1], [], []>} : vector<8x32xf32>, vector<32x32xf32>, vector<8x32xf32> -> vector<8x32xf32>
    %cst_49 = arith.constant dense<0.000000e+00> : vector<8x32xf32>
    %68 = tpu.matmul %2, %67, %cst_49 {dimension_numbers = #tpu.dot_dimension_numbers<[1], [0], [0], [1], [0, 0, 1, 1], [], []>} : vector<8x8xf32>, vector<8x32xf32>, vector<8x32xf32> -> vector<8x32xf32>
    %69 = arith.mulf %56, %68 : vector<8x32xf32>
    %cst_50 = arith.constant dense<0.000000e+00> : vector<8x4xf32>
    %70 = tpu.matmul %69, %6, %cst_50 {dimension_numbers = #tpu.dot_dimension_numbers<[1], [0], [0], [1], [0, 0, 1, 1], [], []>} : vector<8x32xf32>, vector<32x4xf32>, vector<8x4xf32> -> vector<8x4xf32>
    %cst_51 = arith.constant 9.99999968E-21 : f32
    %71 = vector.broadcast %cst_51 : f32 to vector<8x4xf32>
    %72 = arith.maximumf %70, %71 : vector<8x4xf32>
    %cst_52 = arith.constant 1.000000e+00 : f32
    %73 = vector.broadcast %cst_52 : f32 to vector<8x4xf32>
    %74 = arith.divf %73, %72 : vector<8x4xf32>
    %cst_53 = arith.constant dense<0.000000e+00> : vector<8x32xf32>
    %75 = tpu.matmul %74, %7, %cst_53 {dimension_numbers = #tpu.dot_dimension_numbers<[1], [0], [0], [1], [0, 0, 1, 1], [], []>} : vector<8x4xf32>, vector<4x32xf32>, vector<8x32xf32> -> vector<8x32xf32>
    %76 = arith.mulf %69, %75 : vector<8x32xf32>
    %c0_54 = arith.constant 0 : index
    %c0_55 = arith.constant 0 : index
    %77 = vector.load %arg8[%c0_54, %c0_55] : memref<32x32xf32, #tpu.memory_space<vmem>>, vector<32x32xf32>
    %cst_56 = arith.constant dense<0.000000e+00> : vector<8x32xf32>
    %78 = tpu.matmul %76, %77, %cst_56 {dimension_numbers = #tpu.dot_dimension_numbers<[1], [0], [0], [1], [0, 0, 1, 1], [], []>} : vector<8x32xf32>, vector<32x32xf32>, vector<8x32xf32> -> vector<8x32xf32>
    %c0_57 = arith.constant 0 : index
    %c0_58 = arith.constant 0 : index
    %79 = vector.load %arg9[%c0_57, %c0_58] : memref<1x32xf32, #tpu.memory_space<vmem>>, vector<1x32xf32>
    %80 = vector.broadcast %79 : vector<1x32xf32> to vector<8x32xf32>
    %81 = arith.addf %78, %80 : vector<8x32xf32>
    %c0_59 = arith.constant 0 : index
    %c0_60 = arith.constant 0 : index
    %c0_61 = arith.constant 0 : index
    %82 = vector.load %arg10[%c0_59, %c0_60, %c0_61] : memref<1x8x32xf32, #tpu.memory_space<vmem>>, vector<1x8x32xf32>
    %83 = vector.shape_cast %82 : vector<1x8x32xf32> to vector<8x32xf32>
    %84 = vector.shape_cast %81 : vector<8x32xf32> to vector<1x8x32xf32>
    tpu.vector_store %arg10[%c0_59, %c0_60, %c0_61], %84 {strides = array<i32>} : memref<1x8x32xf32, #tpu.memory_space<vmem>>, vector<1x8x32xf32>,
    return
  }
  func.func @transform_0(%arg0: i32) -> (i32, i32, i32) {
    %c0_i32 = arith.constant 0 : i32
    %c0_i32_0 = arith.constant 0 : i32
    %c0_i32_1 = arith.constant 0 : i32
    return %arg0, %c0_i32, %c0_i32_0 : i32, i32, i32
  }
  func.func @transform_1(%arg0: i32) -> (i32, i32) {
    %c0_i32 = arith.constant 0 : i32
    %c0_i32_0 = arith.constant 0 : i32
    %c0_i32_1 = arith.constant 0 : i32
    return %c0_i32, %c0_i32_0 : i32, i32
  }
  func.func @transform_2(%arg0: i32) -> (i32, i32) {
    %c0_i32 = arith.constant 0 : i32
    %c0_i32_0 = arith.constant 0 : i32
    %c0_i32_1 = arith.constant 0 : i32
    return %c0_i32, %c0_i32_0 : i32, i32
  }
  func.func @transform_3(%arg0: i32) -> (i32, i32) {
    %c0_i32 = arith.constant 0 : i32
    %c0_i32_0 = arith.constant 0 : i32
    %c0_i32_1 = arith.constant 0 : i32
    return %c0_i32, %c0_i32_0 : i32, i32
  }
  func.func @transform_4(%arg0: i32) -> (i32, i32) {
    %c0_i32 = arith.constant 0 : i32
    %c0_i32_0 = arith.constant 0 : i32
    %c0_i32_1 = arith.constant 0 : i32
    return %c0_i32, %c0_i32_0 : i32, i32
  }
  func.func @transform_5(%arg0: i32) -> (i32, i32) {
    %c0_i32 = arith.constant 0 : i32
    %c0_i32_0 = arith.constant 0 : i32
    %c0_i32_1 = arith.constant 0 : i32
    return %c0_i32, %c0_i32_0 : i32, i32
  }
  func.func @transform_6(%arg0: i32) -> (i32, i32) {
    %c0_i32 = arith.constant 0 : i32
    %c0_i32_0 = arith.constant 0 : i32
    %c0_i32_1 = arith.constant 0 : i32
    return %c0_i32, %c0_i32_0 : i32, i32
  }
  func.func @transform_7(%arg0: i32) -> (i32, i32) {
    %c0_i32 = arith.constant 0 : i32
    %c0_i32_0 = arith.constant 0 : i32
    %c0_i32_1 = arith.constant 0 : i32
    return %c0_i32, %c0_i32_0 : i32, i32
  }
  func.func @transform_8(%arg0: i32) -> (i32, i32) {
    %c0_i32 = arith.constant 0 : i32
    %c0_i32_0 = arith.constant 0 : i32
    %c0_i32_1 = arith.constant 0 : i32
    return %c0_i32, %c0_i32_0 : i32, i32
  }
  func.func @transform_9(%arg0: i32) -> (i32, i32, i32) {
    %c0_i32 = arith.constant 0 : i32
    %c0_i32_0 = arith.constant 0 : i32
    %c0_i32_1 = arith.constant 0 : i32
    return %arg0, %c0_i32, %c0_i32_0 : i32, i32, i32
  }
}

module attributes {stable_mosaic.version = 11 : i64} {
  func.func @_nnmf_fused_kernel(%arg0: i32, %arg1: memref<1x8x32xf32, #tpu.memory_space<vmem>>, %arg2: memref<8x8xf32, #tpu.memory_space<vmem>>, %arg3: memref<8x8xf32, #tpu.memory_space<vmem>>, %arg4: memref<32x32xf32, #tpu.memory_space<vmem>>, %arg5: memref<32x32xf32, #tpu.memory_space<vmem>>, %arg6: memref<32x4xf32, #tpu.memory_space<vmem>>, %arg7: memref<4x32xf32, #tpu.memory_space<vmem>>, %arg8: memref<32x32xf32, #tpu.memory_space<vmem>>, %arg9: memref<1x32xf32, #tpu.memory_space<vmem>>, %arg10: memref<1x8x32xf32, #tpu.memory_space<vmem>>) attributes {dimension_semantics = [#tpu.dimension_semantics<parallel>], iteration_bounds = array<i64: 2>, scalar_prefetch = 0 : i64, scratch_operands = 0 : i64, tpu.core_type = #tpu.core_type<tc>, window_params = [{transform_indices = @transform_0, window_bounds = array<i64: 1, 8, 32>}, {pipeline_mode = #tpu.pipeline_mode<synchronous>, transform_indices = @transform_1, window_bounds = array<i64: 8, 8>}, {pipeline_mode = #tpu.pipeline_mode<synchronous>, transform_indices = @transform_2, window_bounds = array<i64: 8, 8>}, {pipeline_mode = #tpu.pipeline_mode<synchronous>, transform_indices = @transform_3, window_bounds = array<i64: 32, 32>}, {pipeline_mode = #tpu.pipeline_mode<synchronous>, transform_indices = @transform_4, window_bounds = array<i64: 32, 32>}, {pipeline_mode = #tpu.pipeline_mode<synchronous>, transform_indices = @transform_5, window_bounds = array<i64: 32, 4>}, {pipeline_mode = #tpu.pipeline_mode<synchronous>, transform_indices = @transform_6, window_bounds = array<i64: 4, 32>}, {pipeline_mode = #tpu.pipeline_mode<synchronous>, transform_indices = @transform_7, window_bounds = array<i64: 32, 32>}, {pipeline_mode = #tpu.pipeline_mode<synchronous>, transform_indices = @transform_8, window_bounds = array<i64: 1, 32>}, {transform_indices = @transform_9, window_bounds = array<i64: 1, 8, 32>}]} {
    %c0 = arith.constant 0 : index
    %c0_0 = arith.constant 0 : index
    %c0_1 = arith.constant 0 : index
    %0 = vector.load %arg1[%c0, %c0_0, %c0_1] : memref<1x8x32xf32, #tpu.memory_space<vmem>>, vector<1x8x32xf32>
    %1 = vector.shape_cast %0 : vector<1x8x32xf32> to vector<8x32xf32>
    %c0_2 = arith.constant 0 : index
    %c0_3 = arith.constant 0 : index
    %2 = vector.load %arg2[%c0_2, %c0_3] : memref<8x8xf32, #tpu.memory_space<vmem>>, vector<8x8xf32>
    %c0_4 = arith.constant 0 : index
    %c0_5 = arith.constant 0 : index
    %3 = vector.load %arg3[%c0_4, %c0_5] : memref<8x8xf32, #tpu.memory_space<vmem>>, vector<8x8xf32>
    %c0_6 = arith.constant 0 : index
    %c0_7 = arith.constant 0 : index
    %4 = vector.load %arg4[%c0_6, %c0_7] : memref<32x32xf32, #tpu.memory_space<vmem>>, vector<32x32xf32>
    %c0_8 = arith.constant 0 : index
    %c0_9 = arith.constant 0 : index
    %5 = vector.load %arg5[%c0_8, %c0_9] : memref<32x32xf32, #tpu.memory_space<vmem>>, vector<32x32xf32>
    %c0_10 = arith.constant 0 : index
    %c0_11 = arith.constant 0 : index
    %6 = vector.load %arg6[%c0_10, %c0_11] : memref<32x4xf32, #tpu.memory_space<vmem>>, vector<32x4xf32>
    %c0_12 = arith.constant 0 : index
    %c0_13 = arith.constant 0 : index
    %7 = vector.load %arg7[%c0_12, %c0_13] : memref<4x32xf32, #tpu.memory_space<vmem>>, vector<4x32xf32>
    %8 = math.absf %1 : vector<8x32xf32>
    %cst = arith.constant dense<0.000000e+00> : vector<8x4xf32>
    %9 = tpu.matmul %8, %6, %cst {dimension_numbers = #tpu.dot_dimension_numbers<[1], [0], [0], [1], [0, 0, 1, 1], [], []>} : vector<8x32xf32>, vector<32x4xf32>, vector<8x4xf32> -> vector<8x4xf32>
    %cst_14 = arith.constant 9.99999968E-21 : f32
    %10 = vector.broadcast %cst_14 : f32 to vector<8x4xf32>
    %11 = arith.maximumf %9, %10 : vector<8x4xf32>
    %cst_15 = arith.constant 1.000000e+00 : f32
    %12 = vector.broadcast %cst_15 : f32 to vector<8x4xf32>
    %13 = arith.divf %12, %11 : vector<8x4xf32>
    %cst_16 = arith.constant dense<0.000000e+00> : vector<8x32xf32>
    %14 = tpu.matmul %13, %7, %cst_16 {dimension_numbers = #tpu.dot_dimension_numbers<[1], [0], [0], [1], [0, 0, 1, 1], [], []>} : vector<8x4xf32>, vector<4x32xf32>, vector<8x32xf32> -> vector<8x32xf32>
    %15 = arith.mulf %1, %14 : vector<8x32xf32>
    %cst_17 = arith.constant 1.250000e-01 : f32
    %16 = vector.broadcast %cst_17 : f32 to vector<8x32xf32>
    %cst_18 = arith.constant dense<0.000000e+00> : vector<8x32xf32>
    %17 = tpu.matmul %16, %4, %cst_18 {dimension_numbers = #tpu.dot_dimension_numbers<[1], [0], [0], [1], [0, 0, 1, 1], [], []>} : vector<8x32xf32>, vector<32x32xf32>, vector<8x32xf32> -> vector<8x32xf32>
    %cst_19 = arith.constant dense<0.000000e+00> : vector<8x32xf32>
    %18 = tpu.matmul %3, %17, %cst_19 {dimension_numbers = #tpu.dot_dimension_numbers<[1], [0], [0], [1], [0, 0, 1, 1], [], []>} : vector<8x8xf32>, vector<8x32xf32>, vector<8x32xf32> -> vector<8x32xf32>
    %cst_20 = arith.constant 9.99999974E-5 : f32
    %19 = vector.broadcast %cst_20 : f32 to vector<8x32xf32>
    %20 = arith.maximumf %18, %19 : vector<8x32xf32>
    %cst_21 = arith.constant dense<0.000000e+00> : vector<8x4xf32>
    %21 = tpu.matmul %20, %6, %cst_21 {dimension_numbers = #tpu.dot_dimension_numbers<[1], [0], [0], [1], [0, 0, 1, 1], [], []>} : vector<8x32xf32>, vector<32x4xf32>, vector<8x4xf32> -> vector<8x4xf32>
    %cst_22 = arith.constant dense<0.000000e+00> : vector<8x32xf32>
    %22 = tpu.matmul %21, %7, %cst_22 {dimension_numbers = #tpu.dot_dimension_numbers<[1], [0], [0], [1], [0, 0, 1, 1], [], []>} : vector<8x4xf32>, vector<4x32xf32>, vector<8x32xf32> -> vector<8x32xf32>
    %23 = arith.mulf %15, %22 : vector<8x32xf32>
    %cst_23 = arith.constant 1.000000e+00 : f32
    %24 = vector.broadcast %cst_23 : f32 to vector<8x32xf32>
    %25 = arith.divf %24, %20 : vector<8x32xf32>
    %26 = arith.mulf %23, %25 : vector<8x32xf32>
    %cst_24 = arith.constant dense<0.000000e+00> : vector<8x32xf32>
    %27 = tpu.matmul %26, %5, %cst_24 {dimension_numbers = #tpu.dot_dimension_numbers<[1], [0], [0], [1], [0, 0, 1, 1], [], []>} : vector<8x32xf32>, vector<32x32xf32>, vector<8x32xf32> -> vector<8x32xf32>
    %cst_25 = arith.constant dense<0.000000e+00> : vector<8x32xf32>
    %28 = tpu.matmul %2, %27, %cst_25 {dimension_numbers = #tpu.dot_dimension_numbers<[1], [0], [0], [1], [0, 0, 1, 1], [], []>} : vector<8x8xf32>, vector<8x32xf32>, vector<8x32xf32> -> vector<8x32xf32>
    %29 = arith.mulf %16, %28 : vector<8x32xf32>
    %cst_26 = arith.constant dense<0.000000e+00> : vector<8x4xf32>
    %30 = tpu.matmul %29, %6, %cst_26 {dimension_numbers = #tpu.dot_dimension_numbers<[1], [0], [0], [1], [0, 0, 1, 1], [], []>} : vector<8x32xf32>, vector<32x4xf32>, vector<8x4xf32> -> vector<8x4xf32>
    %cst_27 = arith.constant 9.99999968E-21 : f32
    %31 = vector.broadcast %cst_27 : f32 to vector<8x4xf32>
    %32 = arith.maximumf %30, %31 : vector<8x4xf32>
    %cst_28 = arith.constant 1.000000e+00 : f32
    %33 = vector.broadcast %cst_28 : f32 to vector<8x4xf32>
    %34 = arith.divf %33, %32 : vector<8x4xf32>
    %cst_29 = arith.constant dense<0.000000e+00> : vector<8x32xf32>
    %35 = tpu.matmul %34, %7, %cst_29 {dimension_numbers = #tpu.dot_dimension_numbers<[1], [0], [0], [1], [0, 0, 1, 1], [], []>} : vector<8x4xf32>, vector<4x32xf32>, vector<8x32xf32> -> vector<8x32xf32>
    %36 = arith.mulf %29, %35 : vector<8x32xf32>
    %cst_30 = arith.constant dense<0.000000e+00> : vector<8x32xf32>
    %37 = tpu.matmul %36, %4, %cst_30 {dimension_numbers = #tpu.dot_dimension_numbers<[1], [0], [0], [1], [0, 0, 1, 1], [], []>} : vector<8x32xf32>, vector<32x32xf32>, vector<8x32xf32> -> vector<8x32xf32>
    %cst_31 = arith.constant dense<0.000000e+00> : vector<8x32xf32>
    %38 = tpu.matmul %3, %37, %cst_31 {dimension_numbers = #tpu.dot_dimension_numbers<[1], [0], [0], [1], [0, 0, 1, 1], [], []>} : vector<8x8xf32>, vector<8x32xf32>, vector<8x32xf32> -> vector<8x32xf32>
    %cst_32 = arith.constant 9.99999974E-5 : f32
    %39 = vector.broadcast %cst_32 : f32 to vector<8x32xf32>
    %40 = arith.maximumf %38, %39 : vector<8x32xf32>
    %cst_33 = arith.constant dense<0.000000e+00> : vector<8x4xf32>
    %41 = tpu.matmul %40, %6, %cst_33 {dimension_numbers = #tpu.dot_dimension_numbers<[1], [0], [0], [1], [0, 0, 1, 1], [], []>} : vector<8x32xf32>, vector<32x4xf32>, vector<8x4xf32> -> vector<8x4xf32>
    %cst_34 = arith.constant dense<0.000000e+00> : vector<8x32xf32>
    %42 = tpu.matmul %41, %7, %cst_34 {dimension_numbers = #tpu.dot_dimension_numbers<[1], [0], [0], [1], [0, 0, 1, 1], [], []>} : vector<8x4xf32>, vector<4x32xf32>, vector<8x32xf32> -> vector<8x32xf32>
    %43 = arith.mulf %15, %42 : vector<8x32xf32>
    %cst_35 = arith.constant 1.000000e+00 : f32
    %44 = vector.broadcast %cst_35 : f32 to vector<8x32xf32>
    %45 = arith.divf %44, %40 : vector<8x32xf32>
    %46 = arith.mulf %43, %45 : vector<8x32xf32>
    %cst_36 = arith.constant dense<0.000000e+00> : vector<8x32xf32>
    %47 = tpu.matmul %46, %5, %cst_36 {dimension_numbers = #tpu.dot_dimension_numbers<[1], [0], [0], [1], [0, 0, 1, 1], [], []>} : vector<8x32xf32>, vector<32x32xf32>, vector<8x32xf32> -> vector<8x32xf32>
    %cst_37 = arith.constant dense<0.000000e+00> : vector<8x32xf32>
    %48 = tpu.matmul %2, %47, %cst_37 {dimension_numbers = #tpu.dot_dimension_numbers<[1], [0], [0], [1], [0, 0, 1, 1], [], []>} : vector<8x8xf32>, vector<8x32xf32>, vector<8x32xf32> -> vector<8x32xf32>
    %49 = arith.mulf %36, %48 : vector<8x32xf32>
    %cst_38 = arith.constant dense<0.000000e+00> : vector<8x4xf32>
    %50 = tpu.matmul %49, %6, %cst_38 {dimension_numbers = #tpu.dot_dimension_numbers<[1], [0], [0], [1], [0, 0, 1, 1], [], []>} : vector<8x32xf32>, vector<32x4xf32>, vector<8x4xf32> -> vector<8x4xf32>
    %cst_39 = arith.constant 9.99999968E-21 : f32
    %51 = vector.broadcast %cst_39 : f32 to vector<8x4xf32>
    %52 = arith.maximumf %50, %51 : vector<8x4xf32>
    %cst_40 = arith.constant 1.000000e+00 : f32
    %53 = vector.broadcast %cst_40 : f32 to vector<8x4xf32>
    %54 = arith.divf %53, %52 : vector<8x4xf32>
    %cst_41 = arith.constant dense<0.000000e+00> : vector<8x32xf32>
    %55 = tpu.matmul %54, %7, %cst_41 {dimension_numbers = #tpu.dot_dimension_numbers<[1], [0], [0], [1], [0, 0, 1, 1], [], []>} : vector<8x4xf32>, vector<4x32xf32>, vector<8x32xf32> -> vector<8x32xf32>
    %56 = arith.mulf %49, %55 : vector<8x32xf32>
    %cst_42 = arith.constant dense<0.000000e+00> : vector<8x32xf32>
    %57 = tpu.matmul %56, %4, %cst_42 {dimension_numbers = #tpu.dot_dimension_numbers<[1], [0], [0], [1], [0, 0, 1, 1], [], []>} : vector<8x32xf32>, vector<32x32xf32>, vector<8x32xf32> -> vector<8x32xf32>
    %cst_43 = arith.constant dense<0.000000e+00> : vector<8x32xf32>
    %58 = tpu.matmul %3, %57, %cst_43 {dimension_numbers = #tpu.dot_dimension_numbers<[1], [0], [0], [1], [0, 0, 1, 1], [], []>} : vector<8x8xf32>, vector<8x32xf32>, vector<8x32xf32> -> vector<8x32xf32>
    %cst_44 = arith.constant 9.99999974E-5 : f32
    %59 = vector.broadcast %cst_44 : f32 to vector<8x32xf32>
    %60 = arith.maximumf %58, %59 : vector<8x32xf32>
    %cst_45 = arith.constant dense<0.000000e+00> : vector<8x4xf32>
    %61 = tpu.matmul %60, %6, %cst_45 {dimension_numbers = #tpu.dot_dimension_numbers<[1], [0], [0], [1], [0, 0, 1, 1], [], []>} : vector<8x32xf32>, vector<32x4xf32>, vector<8x4xf32> -> vector<8x4xf32>
    %cst_46 = arith.constant dense<0.000000e+00> : vector<8x32xf32>
    %62 = tpu.matmul %61, %7, %cst_46 {dimension_numbers = #tpu.dot_dimension_numbers<[1], [0], [0], [1], [0, 0, 1, 1], [], []>} : vector<8x4xf32>, vector<4x32xf32>, vector<8x32xf32> -> vector<8x32xf32>
    %63 = arith.mulf %15, %62 : vector<8x32xf32>
    %cst_47 = arith.constant 1.000000e+00 : f32
    %64 = vector.broadcast %cst_47 : f32 to vector<8x32xf32>
    %65 = arith.divf %64, %60 : vector<8x32xf32>
    %66 = arith.mulf %63, %65 : vector<8x32xf32>
    %cst_48 = arith.constant dense<0.000000e+00> : vector<8x32xf32>
    %67 = tpu.matmul %66, %5, %cst_48 {dimension_numbers = #tpu.dot_dimension_numbers<[1], [0], [0], [1], [0, 0, 1, 1], [], []>} : vector<8x32xf32>, vector<32x32xf32>, vector<8x32xf32> -> vector<8x32xf32>
    %cst_49 = arith.constant dense<0.000000e+00> : vector<8x32xf32>
    %68 = tpu.matmul %2, %67, %cst_49 {dimension_numbers = #tpu.dot_dimension_numbers<[1], [0], [0], [1], [0, 0, 1, 1], [], []>} : vector<8x8xf32>, vector<8x32xf32>, vector<8x32xf32> -> vector<8x32xf32>
    %69 = arith.mulf %56, %68 : vector<8x32xf32>
    %cst_50 = arith.constant dense<0.000000e+00> : vector<8x4xf32>
    %70 = tpu.matmul %69, %6, %cst_50 {dimension_numbers = #tpu.dot_dimension_numbers<[1], [0], [0], [1], [0, 0, 1, 1], [], []>} : vector<8x32xf32>, vector<32x4xf32>, vector<8x4xf32> -> vector<8x4xf32>
    %cst_51 = arith.constant 9.99999968E-21 : f32
    %71 = vector.broadcast %cst_51 : f32 to vector<8x4xf32>
    %72 = arith.maximumf %70, %71 : vector<8x4xf32>
    %cst_52 = arith.constant 1.000000e+00 : f32
    %73 = vector.broadcast %cst_52 : f32 to vector<8x4xf32>
    %74 = arith.divf %73, %72 : vector<8x4xf32>
    %cst_53 = arith.constant dense<0.000000e+00> : vector<8x32xf32>
    %75 = tpu.matmul %74, %7, %cst_53 {dimension_numbers = #tpu.dot_dimension_numbers<[1], [0], [0], [1], [0, 0, 1, 1], [], []>} : vector<8x4xf32>, vector<4x32xf32>, vector<8x32xf32> -> vector<8x32xf32>
    %76 = arith.mulf %69, %75 : vector<8x32xf32>
    %c0_54 = arith.constant 0 : index
    %c0_55 = arith.constant 0 : index
    %77 = vector.load %arg8[%c0_54, %c0_55] : memref<32x32xf32, #tpu.memory_space<vmem>>, vector<32x32xf32>
    %cst_56 = arith.constant dense<0.000000e+00> : vector<8x32xf32>
    %78 = tpu.matmul %76, %77, %cst_56 {dimension_numbers = #tpu.dot_dimension_numbers<[1], [0], [0], [1], [0, 0, 1, 1], [], []>} : vector<8x32xf32>, vector<32x32xf32>, vector<8x32xf32> -> vector<8x32xf32>
    %c0_57 = arith.constant 0 : index
    %c0_58 = arith.constant 0 : index
    %79 = vector.load %arg9[%c0_57, %c0_58] : memref<1x32xf32, #tpu.memory_space<vmem>>, vector<1x32xf32>
    %80 = vector.broadcast %79 : vector<1x32xf32> to vector<8x32xf32>
    %81 = arith.addf %78, %80 : vector<8x32xf32>
    %c0_59 = arith.constant 0 : index
    %c0_60 = arith.constant 0 : index
    %c0_61 = arith.constant 0 : index
    %82 = vector.load %arg10[%c0_59, %c0_60, %c0_61] : memref<1x8x32xf32, #tpu.memory_space<vmem>>, vector<1x8x32xf32>
    %83 = vector.shape_cast %82 : vector<1x8x32xf32> to vector<8x32xf32>
    %84 = vector.shape_cast %81 : vector<8x32xf32> to vector<1x8x32xf32>
    tpu.vector_store %arg10[%c0_59, %c0_60, %c0_61], %84 {strides = array<i32>} : memref<1x8x32xf32, #tpu.memory_space<vmem>>, vector<1x8x32xf32>,
    return
  }
  func.func @transform_0(%arg0: i32) -> (i32, i32, i32) {
    %c0_i32 = arith.constant 0 : i32
    %c0_i32_0 = arith.constant 0 : i32
    %c0_i32_1 = arith.constant 0 : i32
    return %arg0, %c0_i32, %c0_i32_0 : i32, i32, i32
  }
  func.func @transform_1(%arg0: i32) -> (i32, i32) {
    %c0_i32 = arith.constant 0 : i32
    %c0_i32_0 = arith.constant 0 : i32
    %c0_i32_1 = arith.constant 0 : i32
    return %c0_i32, %c0_i32_0 : i32, i32
  }
  func.func @transform_2(%arg0: i32) -> (i32, i32) {
    %c0_i32 = arith.constant 0 : i32
    %c0_i32_0 = arith.constant 0 : i32
    %c0_i32_1 = arith.constant 0 : i32
    return %c0_i32, %c0_i32_0 : i32, i32
  }
  func.func @transform_3(%arg0: i32) -> (i32, i32) {
    %c0_i32 = arith.constant 0 : i32
    %c0_i32_0 = arith.constant 0 : i32
    %c0_i32_1 = arith.constant 0 : i32
    return %c0_i32, %c0_i32_0 : i32, i32
  }
  func.func @transform_4(%arg0: i32) -> (i32, i32) {
    %c0_i32 = arith.constant 0 : i32
    %c0_i32_0 = arith.constant 0 : i32
    %c0_i32_1 = arith.constant 0 : i32
    return %c0_i32, %c0_i32_0 : i32, i32
  }
  func.func @transform_5(%arg0: i32) -> (i32, i32) {
    %c0_i32 = arith.constant 0 : i32
    %c0_i32_0 = arith.constant 0 : i32
    %c0_i32_1 = arith.constant 0 : i32
    return %c0_i32, %c0_i32_0 : i32, i32
  }
  func.func @transform_6(%arg0: i32) -> (i32, i32) {
    %c0_i32 = arith.constant 0 : i32
    %c0_i32_0 = arith.constant 0 : i32
    %c0_i32_1 = arith.constant 0 : i32
    return %c0_i32, %c0_i32_0 : i32, i32
  }
  func.func @transform_7(%arg0: i32) -> (i32, i32) {
    %c0_i32 = arith.constant 0 : i32
    %c0_i32_0 = arith.constant 0 : i32
    %c0_i32_1 = arith.constant 0 : i32
    return %c0_i32, %c0_i32_0 : i32, i32
  }
  func.func @transform_8(%arg0: i32) -> (i32, i32) {
    %c0_i32 = arith.constant 0 : i32
    %c0_i32_0 = arith.constant 0 : i32
    %c0_i32_1 = arith.constant 0 : i32
    return %c0_i32, %c0_i32_0 : i32, i32
  }
  func.func @transform_9(%arg0: i32) -> (i32, i32, i32) {
    %c0_i32 = arith.constant 0 : i32
    %c0_i32_0 = arith.constant 0 : i32
    %c0_i32_1 = arith.constant 0 : i32
    return %arg0, %c0_i32, %c0_i32_0 : i32, i32, i32
  }
}

</mosaic_0001>

<llo_original>
// kernel: tpu_custom_call.1
$region0: #{tpu_custom_call.1}
  #allocation0 [shape = 'u32[]', space=smem, size = 0x4, offset = 0x4, fixed_abs, tag = 'smem constant byte address 0x4 - core index']
  #allocation1 [shape = 'u32[144,128]{1,0:T(1,128)}', space=vmem, size = 0x12000, scoped, tag = 'internal scratch']
  %s0 = inlined_call_operand.hbm [shape: f32[2,8,32], index: 0, kind: input, shape index: {}]
  %s1 = inlined_call_operand.vmem [shape: f32[8,8], index: 1, kind: input, shape index: {}]
  %s2 = inlined_call_operand.hbm [shape: f32[8,8], index: 2, kind: input, shape index: {}]
  %s3 = inlined_call_operand.vmem [shape: f32[32,32], index: 3, kind: input, shape index: {}]
  %s4 = inlined_call_operand.hbm [shape: f32[32,32], index: 4, kind: input, shape index: {}]
  %s5 = inlined_call_operand.vmem [shape: f32[32,4], index: 5, kind: input, shape index: {}]
  %s6 = inlined_call_operand.vmem [shape: f32[4,32], index: 6, kind: input, shape index: {}]
  %s7 = inlined_call_operand.hbm [shape: f32[32,32], index: 7, kind: input, shape index: {}]
  %s8 = inlined_call_operand.vmem [shape: f32[1,32], index: 8, kind: input, shape index: {}]
  %s9 = inlined_call_operand.hbm [shape: f32[2,8,32], index: 9, kind: output, shape index: {}]
  %s10 = sld [smem:[#allocation0]]
  $region85: #{tpu_custom_call.1} parent=0
    _
  %s12 = ssub.s32 1, %s10
  %s13 = scalar_select 0, %s12, %s10
  $region1: #{tpu_custom_call.1} parent=0
    #allocation2 [shape = 'u8[8192]{0}', space=vmem, size = 0x2000, scoped, tag = 'input window, operand 0']
    #allocation3 [shape = 's32[2]{0}', space=sflag, size = 0x8, scoped, tag = 'scoped memory for tpu_custom_call.1']
    #allocation4 [shape = 's32[2]{0}', space=sflag, size = 0x8, scoped, tag = 'scoped memory for tpu_custom_call.1']
    #allocation5 [shape = 'u8[4096]{0}', space=vmem, size = 0x1000, scoped, tag = 'input window, operand 2, single buffered']
    #allocation6 [shape = 's32[1]{0}', space=sflag, size = 0x4, scoped, tag = 'scoped memory for tpu_custom_call.1']
    #allocation7 [shape = 'u8[16384]{0}', space=vmem, size = 0x4000, scoped, tag = 'input window, operand 4, single buffered']
    #allocation8 [shape = 'u8[16384]{0}', space=vmem, size = 0x4000, scoped, tag = 'input window, operand 7, single buffered']
    #allocation9 [shape = 's32[1]{0}', space=sflag, size = 0x4, scoped, tag = 'scoped memory for tpu_custom_call.1']
    #allocation10 [shape = 'u8[8192]{0}', space=vmem, size = 0x2000, scoped, tag = 'output window, operand 0']
    %14 = vsyncpa [#allocation3], 0
    %s15 = scalar_lea.sflag [#allocation3], 1
    %16 = vsyncpa %s15, 0
    %17 = vsyncpa [#allocation6], 0
    %18 = vsyncpa [#allocation9], 0
    %19 = vsyncpa [#allocation4], 0
    %s20 = scalar_lea.sflag [#allocation4], 1
    %21 = vsyncpa %s20, 0
    loop: start=0, step=1, limit=4
    $region2: #{tpu_custom_call.1} parent=1 // loop_pre_header
      _
    $region3: #{tpu_custom_call.1} parent=1 // loop_header
      %s23 = sphi 0, %s27
      %p24 = scmp.ge.s32.totalorder %s23, 4
      %s33 = sphi 0, %s35
      %s36 = sphi 0, %s33
      %s37 = sphi 0, %s36
      %s53 = sphi 0, %s37
      %s57 = sphi 0, %s57
      %s59 = sphi 0, %s57
      %s60 = sphi 0, %s59
      %s74 = sphi 0, %s60
      %s78 = sphi 0, %s78
      %s80 = sphi 0, %s78
      %s81 = sphi 0, %s80
      %s95 = sphi 0, %s81
      %s99 = sphi 0, %s99
      %s101 = sphi 0, %s99
      %s102 = sphi 0, %s101
      %s116 = sphi 0, %s102
      %s120 = sphi 0, %s120
      %s122 = sphi 0, %s120
      %s123 = sphi 0, %s122
      %s137 = sphi 0, %s123
      %s141 = sphi 0, %s141
      %s143 = sphi 0, %s141
      %s144 = sphi 0, %s143
      %s158 = sphi 0, %s144
      %s162 = sphi 0, %s162
      %s164 = sphi 0, %s162
      %s165 = sphi 0, %s164
      %s179 = sphi 0, %s165
      %s183 = sphi 0, %s183
      %s185 = sphi 0, %s183
      %s186 = sphi 0, %s185
      %s200 = sphi 0, %s186
      %s204 = sphi 0, %s204
      %s206 = sphi 0, %s204
      %s207 = sphi 0, %s206
      %s221 = sphi 0, %s207
      %s227 = sphi 0, %s229
      %s230 = sphi 0, %s227
      %s231 = sphi 0, %s230
      %s247 = sphi 0, %s231
    $region4: #{tpu_custom_call.1} parent=1 // loop_header_branch
      %26 = sbr.rel (%p24) target = $region8
    $region5: #{tpu_custom_call.1} parent=1 // loop_body
      %s28 = ssub.s32 %s23, 1
      %s29 = ssub.s32 %s23, 2
      %s30 = sadd.s32 %s23, 1
      %s31 = ssub.s32 %s23, %s30
      %p32 = scmp.eq.s32.totalorder %s31, 0
      %s34 = sadd.s32 %s33, 1
      %s35 = scalar_select %p32, %s33, %s34
      %p38 = pneg %p32
      %p39 = scmp.eq.s32.totalorder %s23, 1
      %p40 = por %p38, %p39
      %p41 = scmp.ne.s32.totalorder %s33, %s36
      %p42 = scmp.eq.s32.totalorder %s23, 0
      %p43 = por %p41, %p42
      %p44 = scmp.ne.s32.totalorder %s33, %s36
      %p45 = scmp.eq.s32.totalorder %s28, 1
      %p46 = por %p44, %p45
      %p47 = scmp.ne.s32.totalorder %s36, %s37
      %p48 = scmp.eq.s32.totalorder %s28, 0
      %p49 = por %p47, %p48
      %p50 = scmp.ne.s32.totalorder %s36, %s37
      %p51 = scmp.eq.s32.totalorder %s29, 1
      %p52 = por %p50, %p51
      %p54 = scmp.ne.s32.totalorder %s37, %s53
      %p55 = scmp.eq.s32.totalorder %s29, 0
      %p56 = por %p54, %p55
      %s58 = sadd.s32 %s57, 1
      %p61 = scmp.eq.s32.totalorder %s23, 1
      %p62 = scmp.ne.s32.totalorder %s57, %s59
      %p63 = scmp.eq.s32.totalorder %s23, 0
      %p64 = por %p62, %p63
      %p65 = scmp.ne.s32.totalorder %s57, %s59
      %p66 = scmp.eq.s32.totalorder %s28, 1
      %p67 = por %p65, %p66
      %p68 = scmp.ne.s32.totalorder %s59, %s60
      %p69 = scmp.eq.s32.totalorder %s28, 0
      %p70 = por %p68, %p69
      %p71 = scmp.ne.s32.totalorder %s59, %s60
      %p72 = scmp.eq.s32.totalorder %s29, 1
      %p73 = por %p71, %p72
      %p75 = scmp.ne.s32.totalorder %s60, %s74
      %p76 = scmp.eq.s32.totalorder %s29, 0
      %p77 = por %p75, %p76
      %s79 = sadd.s32 %s78, 1
      %p82 = scmp.eq.s32.totalorder %s23, 1
      %p83 = scmp.ne.s32.totalorder %s78, %s80
      %p84 = scmp.eq.s32.totalorder %s23, 0
      %p85 = por %p83, %p84
      %p86 = scmp.ne.s32.totalorder %s78, %s80
      %p87 = scmp.eq.s32.totalorder %s28, 1
      %p88 = por %p86, %p87
      %p89 = scmp.ne.s32.totalorder %s80, %s81
      %p90 = scmp.eq.s32.totalorder %s28, 0
      %p91 = por %p89, %p90
      %p92 = scmp.ne.s32.totalorder %s80, %s81
      %p93 = scmp.eq.s32.totalorder %s29, 1
      %p94 = por %p92, %p93
      %p96 = scmp.ne.s32.totalorder %s81, %s95
      %p97 = scmp.eq.s32.totalorder %s29, 0
      %p98 = por %p96, %p97
      %s100 = sadd.s32 %s99, 1
      %p103 = scmp.eq.s32.totalorder %s23, 1
      %p104 = scmp.ne.s32.totalorder %s99, %s101
      %p105 = scmp.eq.s32.totalorder %s23, 0
      %p106 = por %p104, %p105
      %p107 = scmp.ne.s32.totalorder %s99, %s101
      %p108 = scmp.eq.s32.totalorder %s28, 1
      %p109 = por %p107, %p108
      %p110 = scmp.ne.s32.totalorder %s101, %s102
      %p111 = scmp.eq.s32.totalorder %s28, 0
      %p112 = por %p110, %p111
      %p113 = scmp.ne.s32.totalorder %s101, %s102
      %p114 = scmp.eq.s32.totalorder %s29, 1
      %p115 = por %p113, %p114
      %p117 = scmp.ne.s32.totalorder %s102, %s116
      %p118 = scmp.eq.s32.totalorder %s29, 0
      %p119 = por %p117, %p118
      %s121 = sadd.s32 %s120, 1
      %p124 = scmp.eq.s32.totalorder %s23, 1
      %p125 = scmp.ne.s32.totalorder %s120, %s122
      %p126 = scmp.eq.s32.totalorder %s23, 0
      %p127 = por %p125, %p126
      %p128 = scmp.ne.s32.totalorder %s120, %s122
      %p129 = scmp.eq.s32.totalorder %s28, 1
      %p130 = por %p128, %p129
      %p131 = scmp.ne.s32.totalorder %s122, %s123
      %p132 = scmp.eq.s32.totalorder %s28, 0
      %p133 = por %p131, %p132
      %p134 = scmp.ne.s32.totalorder %s122, %s123
      %p135 = scmp.eq.s32.totalorder %s29, 1
      %p136 = por %p134, %p135
      %p138 = scmp.ne.s32.totalorder %s123, %s137
      %p139 = scmp.eq.s32.totalorder %s29, 0
      %p140 = por %p138, %p139
      %s142 = sadd.s32 %s141, 1
      %p145 = scmp.eq.s32.totalorder %s23, 1
      %p146 = scmp.ne.s32.totalorder %s141, %s143
      %p147 = scmp.eq.s32.totalorder %s23, 0
      %p148 = por %p146, %p147
      %p149 = scmp.ne.s32.totalorder %s141, %s143
      %p150 = scmp.eq.s32.totalorder %s28, 1
      %p151 = por %p149, %p150
      %p152 = scmp.ne.s32.totalorder %s143, %s144
      %p153 = scmp.eq.s32.totalorder %s28, 0
      %p154 = por %p152, %p153
      %p155 = scmp.ne.s32.totalorder %s143, %s144
      %p156 = scmp.eq.s32.totalorder %s29, 1
      %p157 = por %p155, %p156
      %p159 = scmp.ne.s32.totalorder %s144, %s158
      %p160 = scmp.eq.s32.totalorder %s29, 0
      %p161 = por %p159, %p160
      %s163 = sadd.s32 %s162, 1
      %p166 = scmp.eq.s32.totalorder %s23, 1
      %p167 = scmp.ne.s32.totalorder %s162, %s164
      %p168 = scmp.eq.s32.totalorder %s23, 0
      %p169 = por %p167, %p168
      %p170 = scmp.ne.s32.totalorder %s162, %s164
      %p171 = scmp.eq.s32.totalorder %s28, 1
      %p172 = por %p170, %p171
      %p173 = scmp.ne.s32.totalorder %s164, %s165
      %p174 = scmp.eq.s32.totalorder %s28, 0
      %p175 = por %p173, %p174
      %p176 = scmp.ne.s32.totalorder %s164, %s165
      %p177 = scmp.eq.s32.totalorder %s29, 1
      %p178 = por %p176, %p177
      %p180 = scmp.ne.s32.totalorder %s165, %s179
      %p181 = scmp.eq.s32.totalorder %s29, 0
      %p182 = por %p180, %p181
      %s184 = sadd.s32 %s183, 1
      %p187 = scmp.eq.s32.totalorder %s23, 1
      %p188 = scmp.ne.s32.totalorder %s183, %s185
      %p189 = scmp.eq.s32.totalorder %s23, 0
      %p190 = por %p188, %p189
      %p191 = scmp.ne.s32.totalorder %s183, %s185
      %p192 = scmp.eq.s32.totalorder %s28, 1
      %p193 = por %p191, %p192
      %p194 = scmp.ne.s32.totalorder %s185, %s186
      %p195 = scmp.eq.s32.totalorder %s28, 0
      %p196 = por %p194, %p195
      %p197 = scmp.ne.s32.totalorder %s185, %s186
      %p198 = scmp.eq.s32.totalorder %s29, 1
      %p199 = por %p197, %p198
      %p201 = scmp.ne.s32.totalorder %s186, %s200
      %p202 = scmp.eq.s32.totalorder %s29, 0
      %p203 = por %p201, %p202
      %s205 = sadd.s32 %s204, 1
      %p208 = scmp.eq.s32.totalorder %s23, 1
      %p209 = scmp.ne.s32.totalorder %s204, %s206
      %p210 = scmp.eq.s32.totalorder %s23, 0
      %p211 = por %p209, %p210
      %p212 = scmp.ne.s32.totalorder %s204, %s206
      %p213 = scmp.eq.s32.totalorder %s28, 1
      %p214 = por %p212, %p213
      %p215 = scmp.ne.s32.totalorder %s206, %s207
      %p216 = scmp.eq.s32.totalorder %s28, 0
      %p217 = por %p215, %p216
      %p218 = scmp.ne.s32.totalorder %s206, %s207
      %p219 = scmp.eq.s32.totalorder %s29, 1
      %p220 = por %p218, %p219
      %p222 = scmp.ne.s32.totalorder %s207, %s221
      %p223 = scmp.eq.s32.totalorder %s29, 0
      %p224 = por %p222, %p223
      %s225 = ssub.s32 %s23, %s30
      %p226 = scmp.eq.s32.totalorder %s225, 0
      %s228 = sadd.s32 %s227, 1
      %s229 = scalar_select %p226, %s227, %s228
      %p232 = pneg %p226
      %p233 = scmp.eq.s32.totalorder %s23, 1
      %p234 = por %p232, %p233
      %p235 = scmp.ne.s32.totalorder %s227, %s230
      %p236 = scmp.eq.s32.totalorder %s23, 0
      %p237 = por %p235, %p236
      %p238 = scmp.ne.s32.totalorder %s227, %s230
      %p239 = scmp.eq.s32.totalorder %s28, 1
      %p240 = por %p238, %p239
      %p241 = scmp.ne.s32.totalorder %s230, %s231
      %p242 = scmp.eq.s32.totalorder %s28, 0
      %p243 = por %p241, %p242
      %p244 = scmp.ne.s32.totalorder %s230, %s231
      %p245 = scmp.eq.s32.totalorder %s29, 1
      %p246 = por %p244, %p245
      %p248 = scmp.ne.s32.totalorder %s231, %s247
      %p249 = scmp.eq.s32.totalorder %s29, 0
      %p250 = por %p248, %p249
      %p251 = scmp.le.s32.totalorder 1, %s23
      %p252 = scmp.lt.s32.totalorder %s23, 3
      %p253 = pnand %p251, %p252
      %p254 = pneg %p253
      // Predicated region
      $region9: #{tpu_custom_call.1} parent=5 // pred_check
        _
      $region10: #{tpu_custom_call.1} parent=5 // pred_check_branch
        %256 = sbr.rel (%p253) target = $region12
      $region11: #{tpu_custom_call.1} parent=5 // pred_region
        %s257 = ssub.s32 %s23, 1
        // Predicated region
        $region13: #{tpu_custom_call.1} parent=11 // pred_check
          %p258 = pneg %p70
        $region14: #{tpu_custom_call.1} parent=11 // pred_check_branch
          %260 = sbr.rel (%p258) target = $region16
        $region15: #{tpu_custom_call.1} parent=11 // pred_region
          _
        $region16: #{tpu_custom_call.1} parent=11 // pred_fallthru
          _
        // Predicated region
        $region17: #{tpu_custom_call.1} parent=11 // pred_check
          %p261 = pneg %p91
        $region18: #{tpu_custom_call.1} parent=11 // pred_check_branch
          %263 = sbr.rel (%p261) target = $region20
        $region19: #{tpu_custom_call.1} parent=11 // pred_region
          %s265 = ssub.s32 128, 128
          %266 = vsyncadd [#allocation6], %s265
          %s268 = sshll.u32 [#allocation5], 4
          %s269 = int_to_ptr.vmem [resolvable:$true] %s268
          %271 = dma.hbm_to_vmem [thread:$0]  %s2, 128, %s269, [#allocation6]
        $region20: #{tpu_custom_call.1} parent=11 // pred_fallthru
          _
        // Predicated region
        $region21: #{tpu_custom_call.1} parent=11 // pred_check
          %p272 = pneg %p112
        $region22: #{tpu_custom_call.1} parent=11 // pred_check_branch
          %274 = sbr.rel (%p272) target = $region24
        $region23: #{tpu_custom_call.1} parent=11 // pred_region
          _
        $region24: #{tpu_custom_call.1} parent=11 // pred_fallthru
          _
        // Predicated region
        $region25: #{tpu_custom_call.1} parent=11 // pred_check
          %p275 = pneg %p133
        $region26: #{tpu_custom_call.1} parent=11 // pred_check_branch
          %277 = sbr.rel (%p275) target = $region28
        $region27: #{tpu_custom_call.1} parent=11 // pred_region
          %s279 = ssub.s32 512, 512
          %280 = vsyncadd [#allocation6], %s279
          %s281 = sshll.u32 [#allocation7], 4
          %s282 = int_to_ptr.vmem [resolvable:$true] %s281
          %287 = dma.hbm_to_vmem [thread:$0]  %s4, 512, %s282, [#allocation6], 128, 128, 8
        $region28: #{tpu_custom_call.1} parent=11 // pred_fallthru
          _
        // Predicated region
        $region29: #{tpu_custom_call.1} parent=11 // pred_check
          %p288 = pneg %p154
        $region30: #{tpu_custom_call.1} parent=11 // pred_check_branch
          %290 = sbr.rel (%p288) target = $region32
        $region31: #{tpu_custom_call.1} parent=11 // pred_region
          _
        $region32: #{tpu_custom_call.1} parent=11 // pred_fallthru
          _
        // Predicated region
        $region33: #{tpu_custom_call.1} parent=11 // pred_check
          %p291 = pneg %p175
        $region34: #{tpu_custom_call.1} parent=11 // pred_check_branch
          %293 = sbr.rel (%p291) target = $region36
        $region35: #{tpu_custom_call.1} parent=11 // pred_region
          _
        $region36: #{tpu_custom_call.1} parent=11 // pred_fallthru
          _
        // Predicated region
        $region37: #{tpu_custom_call.1} parent=11 // pred_check
          %p294 = pneg %p196
        $region38: #{tpu_custom_call.1} parent=11 // pred_check_branch
          %296 = sbr.rel (%p294) target = $region40
        $region39: #{tpu_custom_call.1} parent=11 // pred_region
          %s298 = ssub.s32 512, 512
          %299 = vsyncadd [#allocation9], %s298
          %s300 = sshll.u32 [#allocation8], 4
          %s301 = int_to_ptr.vmem [resolvable:$true] %s300
          %306 = dma.hbm_to_vmem [thread:$0]  %s7, 512, %s301, [#allocation9], 128, 128, 8
        $region40: #{tpu_custom_call.1} parent=11 // pred_fallthru
          _
        // Predicated region
        $region41: #{tpu_custom_call.1} parent=11 // pred_check
          %p307 = pneg %p217
        $region42: #{tpu_custom_call.1} parent=11 // pred_check_branch
          %309 = sbr.rel (%p307) target = $region44
        $region43: #{tpu_custom_call.1} parent=11 // pred_region
          _
        $region44: #{tpu_custom_call.1} parent=11 // pred_fallthru
          _
      $region12: #{tpu_custom_call.1} parent=5 // pred_fallthru
        _
      %p310 = scmp.lt.s32.totalorder %s23, 2
      // Predicated region
      $region45: #{tpu_custom_call.1} parent=5 // pred_check
        %p311 = pneg %p310
      $region46: #{tpu_custom_call.1} parent=5 // pred_check_branch
        %313 = sbr.rel (%p311) target = $region48
      $region47: #{tpu_custom_call.1} parent=5 // pred_region
        // Predicated region
        $region49: #{tpu_custom_call.1} parent=47 // pred_check
          %p314 = pneg %p43
        $region50: #{tpu_custom_call.1} parent=47 // pred_check_branch
          %316 = sbr.rel (%p314) target = $region52
        $region51: #{tpu_custom_call.1} parent=47 // pred_region
          %s317 = sand.u32 %s33, 1
          %s318 = scalar_lea.sflag [#allocation3], %s317
          %s319 = sand.u32 %s33, 1
          %s320 = smul.addr %s319, 8
          %s321 = scalar_lea.vmem [#allocation2], %s320
          %s323 = ssub.s32 128, 128
          %324 = vsyncadd %s318, %s323
          %s325 = smul.addr %s23, 128
          %s326 = scalar_lea.hbm %s0, %s325
          %s328 = sshll.u32 %s321, 4
          %s329 = int_to_ptr.vmem [resolvable:$true] %s328
          %331 = dma.hbm_to_vmem [thread:$0]  %s326, 128, %s329, %s318
        $region52: #{tpu_custom_call.1} parent=47 // pred_fallthru
          _
      $region48: #{tpu_custom_call.1} parent=5 // pred_fallthru
        _
      %p332 = scmp.le.s32.totalorder 1, %s23
      %p333 = scmp.lt.s32.totalorder %s23, 3
      %p334 = pnand %p332, %p333
      %p335 = pneg %p334
      // Predicated region
      $region53: #{tpu_custom_call.1} parent=5 // pred_check
        _
      $region54: #{tpu_custom_call.1} parent=5 // pred_check_branch
        %337 = sbr.rel (%p334) target = $region56
      $region55: #{tpu_custom_call.1} parent=5 // pred_region
        %s338 = ssub.s32 %s23, 1
        %s339 = sand.u32 %s36, 1
        %s340 = scalar_lea.sflag [#allocation3], %s339
        %s341 = sand.u32 %s36, 1
        %s342 = smul.addr %s341, 8
        %s343 = scalar_lea.vmem [#allocation2], %s342
        // Predicated region
        $region57: #{tpu_custom_call.1} parent=55 // pred_check
          %p344 = pneg %p49
        $region58: #{tpu_custom_call.1} parent=55 // pred_check_branch
          %346 = sbr.rel (%p344) target = $region60
        $region59: #{tpu_custom_call.1} parent=55 // pred_region
          %347 = dma.done %s340, 128
        $region60: #{tpu_custom_call.1} parent=55 // pred_fallthru
          _
        // Predicated region
        $region61: #{tpu_custom_call.1} parent=55 // pred_check
          %p348 = pneg %p91
        $region62: #{tpu_custom_call.1} parent=55 // pred_check_branch
          %350 = sbr.rel (%p348) target = $region64
        $region63: #{tpu_custom_call.1} parent=55 // pred_region
          %351 = dma.done [#allocation6], 128
        $region64: #{tpu_custom_call.1} parent=55 // pred_fallthru
          _
        // Predicated region
        $region65: #{tpu_custom_call.1} parent=55 // pred_check
          %p352 = pneg %p133
        $region66: #{tpu_custom_call.1} parent=55 // pred_check_branch
          %354 = sbr.rel (%p352) target = $region68
        $region67: #{tpu_custom_call.1} parent=55 // pred_region
          %355 = dma.done [#allocation6], 512
        $region68: #{tpu_custom_call.1} parent=55 // pred_fallthru
          _
        // Predicated region
        $region69: #{tpu_custom_call.1} parent=55 // pred_check
          %p356 = pneg %p196
        $region70: #{tpu_custom_call.1} parent=55 // pred_check_branch
          %358 = sbr.rel (%p356) target = $region72
        $region71: #{tpu_custom_call.1} parent=55 // pred_region
          %359 = dma.done [#allocation9], 512
        $region72: #{tpu_custom_call.1} parent=55 // pred_fallthru
          _
        %s360 = sand.u32 %s36, 1
        %s361 = scalar_lea.sflag [#allocation3], %s360
        %s362 = sand.u32 %s36, 1
        %s363 = smul.addr %s362, 8
        %s364 = scalar_lea.vmem [#allocation2], %s363
        %p365 = pneg %p49
        %p366 = pneg %p46
        %p367 = pneg %p70
        %p368 = pneg %p67
        %p369 = pneg %p91
        %p370 = pneg %p88
        %p371 = pneg %p112
        %p372 = pneg %p109
        %p373 = pneg %p133
        %p374 = pneg %p130
        %p375 = pneg %p154
        %p376 = pneg %p151
        %p377 = pneg %p175
        %p378 = pneg %p172
        %p379 = pneg %p196
        %p380 = pneg %p193
        %p381 = pneg %p217
        %p382 = pneg %p214
        %p383 = pneg %p243
        %p384 = pneg %p240
        %s385 = sand.u32 %s230, 1
        %s386 = scalar_lea.sflag [#allocation4], %s385
        %s387 = sand.u32 %s230, 1
        %s388 = smul.addr %s387, 8
        %s389 = scalar_lea.vmem [#allocation10], %s388
        %v390 = vld [vmem:[%s343] sm:$0xff]
        %v391 = vld [vmem:[%s1] sm:$0xff]
        %v392 = vld [vmem:[#allocation5] sm:$0xff]
        %v393 = vld [vmem:[%s3] sm:$0xff]
        %v394 = vld [vmem:[%s3 + $0x8] sm:$0xff]
        %v395 = vld [vmem:[%s3 + $0x10] sm:$0xff]
        %v396 = vld [vmem:[%s3 + $0x18] sm:$0xff]
        %v397 = vld [vmem:[#allocation7] sm:$0xff]
        %v398 = vld [vmem:[#allocation7 + $0x8] sm:$0xff]
        %v399 = vld [vmem:[#allocation7 + $0x10] sm:$0xff]
        %v400 = vld [vmem:[#allocation7 + $0x18] sm:$0xff]
        %v401 = vld [vmem:[%s5] sm:$0xff]
        %v402 = vld [vmem:[%s5 + $0x8] sm:$0xff]
        %v403 = vld [vmem:[%s5 + $0x10] sm:$0xff]
        %v404 = vld [vmem:[%s5 + $0x18] sm:$0xff]
        %v405 = vld [vmem:[%s6] sm:$0xf]
        %v406 = vand.u32 2147483647, %v390
        %vm407 = vcmask 261120
        %v409 = vsel %vm407, %v406, 0
        %411 = vmatprep.subr.mxu0 0.0
        %412 = vmatpush1.msra.mxu0 %v401
        %413 = vmatprep.subr.mxu0 0.0
        %414 = vmatpush1.msra.mxu0 %v402
        %415 = vmatprep.subr.mxu0 0.0
        %416 = vmatpush1.msra.mxu0 %v403
        %417 = vmatprep.subr.mxu0 0.0
        %418 = vmatpush1.msra.mxu0 %v404
        %419 = vmatprep.subr.mxu0 0.0
        %420 = vmatpush1.msra.mxu0 0.0
        %421 = vmatprep.subr.mxu0 0.0
        %422 = vmatpush1.msra.mxu0 0.0
        %423 = vmatprep.subr.mxu0 0.0
        %424 = vmatpush1.msra.mxu0 0.0
        %425 = vmatprep.subr.mxu0 0.0
        %426 = vmatpush1.msra.mxu0 0.0
        %427 = vmatprep.subr.mxu0 0.0
        %428 = vmatpush1.msra.mxu0 0.0
        %429 = vmatprep.subr.mxu0 0.0
        %430 = vmatpush1.msra.mxu0 0.0
        %431 = vmatprep.subr.mxu0 0.0
        %432 = vmatpush1.msra.mxu0 0.0
        %433 = vmatprep.subr.mxu0 0.0
        %434 = vmatpush1.msra.mxu0 0.0
        %435 = vmatprep.subr.mxu0 0.0
        %436 = vmatpush1.msra.mxu0 0.0
        %437 = vmatprep.subr.mxu0 0.0
        %438 = vmatpush1.msra.mxu0 0.0
        %439 = vmatprep.subr.mxu0 0.0
        %440 = vmatpush1.msra.mxu0 0.0
        %441 = vmatprep.subr.mxu0 0.0
        %442 = vmatpush1.msra.mxu0 0.0
        %443 = vmatprep.subr.mxu0 0.0
        %444 = vmatpush1.msra.mxu0 0.0
        %445 = vmatprep.subr.mxu0 0.0
        %446 = vmatpush1.msra.mxu0 0.0
        %447 = vmatprep.subr.mxu0 0.0
        %448 = vmatpush1.msra.mxu0 0.0
        %449 = vmatprep.subr.mxu0 0.0
        %450 = vmatpush1.msra.mxu0 0.0
        %451 = vmatprep.subr.mxu0 0.0
        %452 = vmatpush1.msra.mxu0 0.0
        %453 = vmatprep.subr.mxu0 0.0
        %454 = vmatpush1.msra.mxu0 0.0
        %455 = vmatprep.subr.mxu0 0.0
        %456 = vmatpush1.msra.mxu0 0.0
        %457 = vmatprep.subr.mxu0 0.0
        %458 = vmatpush1.msra.mxu0 0.0
        %459 = vmatprep.subr.mxu0 0.0
        %460 = vmatpush1.msra.mxu0 0.0
        %461 = vmatprep.subr.mxu0 0.0
        %462 = vmatpush1.msra.mxu0 0.0
        %463 = vmatprep.subr.mxu0 0.0
        %464 = vmatpush1.msra.mxu0 0.0
        %465 = vmatprep.subr.mxu0 0.0
        %466 = vmatpush1.msra.mxu0 0.0
        %467 = vmatprep.subr.mxu0 0.0
        %468 = vmatpush1.msra.mxu0 0.0
        %469 = vmatprep.subr.mxu0 0.0
        %470 = vmatpush1.msra.mxu0 0.0
        %471 = vmatprep.subr.mxu0 0.0
        %472 = vmatpush1.msra.mxu0 0.0
        %473 = vmatprep.subr.mxu0 0.0
        %474 = vmatpush1.msra.mxu0 0.0
        %475 = vmatprep.mubr.f32.mxu0 0.0
        %476 = vmatmul.mubr.f32.gmra.mrb[0].mxu0 %v409
        %v477 = vpop.f32.mrb[0].mxu0
        %v478 = vadd.f32 0.0, %v477
        %v479 = vpop.f32.mrb[0].mxu0
        %480 = vdwg.mxu0
        %v481 = vmax.f32 %v478, 1e-20
        %v482 = vrcp.pop %v481
        %v483 = vmul.f32 1.0, %v482
        %vm484 = vcmask 31744
        %v486 = vsel %vm484, %v483, 0
        %vm488 = vcmask 1043456
        %v490 = vsel %vm488, %v405, 0
        %492 = vmatprep.subr.mxu0 0.0
        %493 = vmatpush1.msra.mxu0 %v490
        %494 = vmatprep.subr.mxu0 0.0
        %495 = vmatpush1.msra.mxu0 0.0
        %496 = vmatprep.subr.mxu0 0.0
        %497 = vmatpush1.msra.mxu0 0.0
        %498 = vmatprep.subr.mxu0 0.0
        %499 = vmatpush1.msra.mxu0 0.0
        %500 = vmatprep.subr.mxu0 0.0
        %501 = vmatpush1.msra.mxu0 0.0
        %502 = vmatprep.subr.mxu0 0.0
        %503 = vmatpush1.msra.mxu0 0.0
        %504 = vmatprep.subr.mxu0 0.0
        %505 = vmatpush1.msra.mxu0 0.0
        %506 = vmatprep.subr.mxu0 0.0
        %507 = vmatpush1.msra.mxu0 0.0
        %508 = vmatprep.subr.mxu0 0.0
        %509 = vmatpush1.msra.mxu0 0.0
        %510 = vmatprep.subr.mxu0 0.0
        %511 = vmatpush1.msra.mxu0 0.0
        %512 = vmatprep.subr.mxu0 0.0
        %513 = vmatpush1.msra.mxu0 0.0
        %514 = vmatprep.subr.mxu0 0.0
        %515 = vmatpush1.msra.mxu0 0.0
        %516 = vmatprep.subr.mxu0 0.0
        %517 = vmatpush1.msra.mxu0 0.0
        %518 = vmatprep.subr.mxu0 0.0
        %519 = vmatpush1.msra.mxu0 0.0
        %520 = vmatprep.subr.mxu0 0.0
        %521 = vmatpush1.msra.mxu0 0.0
        %522 = vmatprep.subr.mxu0 0.0
        %523 = vmatpush1.msra.mxu0 0.0
        %524 = vmatprep.subr.mxu0 0.0
        %525 = vmatpush1.msra.mxu0 0.0
        %526 = vmatprep.subr.mxu0 0.0
        %527 = vmatpush1.msra.mxu0 0.0
        %528 = vmatprep.subr.mxu0 0.0
        %529 = vmatpush1.msra.mxu0 0.0
        %530 = vmatprep.subr.mxu0 0.0
        %531 = vmatpush1.msra.mxu0 0.0
        %532 = vmatprep.subr.mxu0 0.0
        %533 = vmatpush1.msra.mxu0 0.0
        %534 = vmatprep.subr.mxu0 0.0
        %535 = vmatpush1.msra.mxu0 0.0
        %536 = vmatprep.subr.mxu0 0.0
        %537 = vmatpush1.msra.mxu0 0.0
        %538 = vmatprep.subr.mxu0 0.0
        %539 = vmatpush1.msra.mxu0 0.0
        %540 = vmatprep.subr.mxu0 0.0
        %541 = vmatpush1.msra.mxu0 0.0
        %542 = vmatprep.subr.mxu0 0.0
        %543 = vmatpush1.msra.mxu0 0.0
        %544 = vmatprep.subr.mxu0 0.0
        %545 = vmatpush1.msra.mxu0 0.0
        %546 = vmatprep.subr.mxu0 0.0
        %547 = vmatpush1.msra.mxu0 0.0
        %548 = vmatprep.subr.mxu0 0.0
        %549 = vmatpush1.msra.mxu0 0.0
        %550 = vmatprep.subr.mxu0 0.0
        %551 = vmatpush1.msra.mxu0 0.0
        %552 = vmatprep.subr.mxu0 0.0
        %553 = vmatpush1.msra.mxu0 0.0
        %554 = vmatprep.subr.mxu0 0.0
        %555 = vmatpush1.msra.mxu0 0.0
        %556 = vmatprep.mubr.f32.mxu0 0.0
        %557 = vmatmul.mubr.f32.gmra.mrb[0].mxu0 %v486
        %v558 = vpop.f32.mrb[0].mxu0
        %v559 = vadd.f32 0.0, %v558
        %v560 = vpop.f32.mrb[0].mxu0
        %561 = vdwg.mxu0
        %v562 = vmul.f32 %v390, %v559
        %v564 = vsel %vm407, 0.125, 0
        %566 = vmatprep.subr.mxu0 0.0
        %567 = vmatpush1.msra.mxu0 %v393
        %568 = vmatprep.subr.mxu0 0.0
        %569 = vmatpush1.msra.mxu0 %v394
        %570 = vmatprep.subr.mxu0 0.0
        %571 = vmatpush1.msra.mxu0 %v395
        %572 = vmatprep.subr.mxu0 0.0
        %573 = vmatpush1.msra.mxu0 %v396
        %574 = vmatprep.subr.mxu0 0.0
        %575 = vmatpush1.msra.mxu0 0.0
        %576 = vmatprep.subr.mxu0 0.0
        %577 = vmatpush1.msra.mxu0 0.0
        %578 = vmatprep.subr.mxu0 0.0
        %579 = vmatpush1.msra.mxu0 0.0
        %580 = vmatprep.subr.mxu0 0.0
        %581 = vmatpush1.msra.mxu0 0.0
        %582 = vmatprep.subr.mxu0 0.0
        %583 = vmatpush1.msra.mxu0 0.0
        %584 = vmatprep.subr.mxu0 0.0
        %585 = vmatpush1.msra.mxu0 0.0
        %586 = vmatprep.subr.mxu0 0.0
        %587 = vmatpush1.msra.mxu0 0.0
        %588 = vmatprep.subr.mxu0 0.0
        %589 = vmatpush1.msra.mxu0 0.0
        %590 = vmatprep.subr.mxu0 0.0
        %591 = vmatpush1.msra.mxu0 0.0
        %592 = vmatprep.subr.mxu0 0.0
        %593 = vmatpush1.msra.mxu0 0.0
        %594 = vmatprep.subr.mxu0 0.0
        %595 = vmatpush1.msra.mxu0 0.0
        %596 = vmatprep.subr.mxu0 0.0
        %597 = vmatpush1.msra.mxu0 0.0
        %598 = vmatprep.subr.mxu0 0.0
        %599 = vmatpush1.msra.mxu0 0.0
        %600 = vmatprep.subr.mxu0 0.0
        %601 = vmatpush1.msra.mxu0 0.0
        %602 = vmatprep.subr.mxu0 0.0
        %603 = vmatpush1.msra.mxu0 0.0
        %604 = vmatprep.subr.mxu0 0.0
        %605 = vmatpush1.msra.mxu0 0.0
        %606 = vmatprep.subr.mxu0 0.0
        %607 = vmatpush1.msra.mxu0 0.0
        %608 = vmatprep.subr.mxu0 0.0
        %609 = vmatpush1.msra.mxu0 0.0
        %610 = vmatprep.subr.mxu0 0.0
        %611 = vmatpush1.msra.mxu0 0.0
        %612 = vmatprep.subr.mxu0 0.0
        %613 = vmatpush1.msra.mxu0 0.0
        %614 = vmatprep.subr.mxu0 0.0
        %615 = vmatpush1.msra.mxu0 0.0
        %616 = vmatprep.subr.mxu0 0.0
        %617 = vmatpush1.msra.mxu0 0.0
        %618 = vmatprep.subr.mxu0 0.0
        %619 = vmatpush1.msra.mxu0 0.0
        %620 = vmatprep.subr.mxu0 0.0
        %621 = vmatpush1.msra.mxu0 0.0
        %622 = vmatprep.subr.mxu0 0.0
        %623 = vmatpush1.msra.mxu0 0.0
        %624 = vmatprep.subr.mxu0 0.0
        %625 = vmatpush1.msra.mxu0 0.0
        %626 = vmatprep.subr.mxu0 0.0
        %627 = vmatpush1.msra.mxu0 0.0
        %628 = vmatprep.subr.mxu0 0.0
        %629 = vmatpush1.msra.mxu0 0.0
        %630 = vmatprep.mubr.f32.mxu0 0.0
        %631 = vmatmul.mubr.f32.gmra.mrb[0].mxu0 %v564
        %v632 = vpop.f32.mrb[0].mxu0
        %v633 = vadd.f32 0.0, %v632
        %v634 = vpop.f32.mrb[0].mxu0
        %635 = vdwg.mxu0
        %vm636 = vcmask 64512
        %v638 = vsel %vm636, %v392, 0
        %640 = vmatprep.subr.mxu0 0.0
        %641 = vmatpush1.msra.mxu0 %v633
        %642 = vmatprep.subr.mxu0 0.0
        %643 = vmatpush1.msra.mxu0 0.0
        %644 = vmatprep.subr.mxu0 0.0
        %645 = vmatpush1.msra.mxu0 0.0
        %646 = vmatprep.subr.mxu0 0.0
        %647 = vmatpush1.msra.mxu0 0.0
        %648 = vmatprep.subr.mxu0 0.0
        %649 = vmatpush1.msra.mxu0 0.0
        %650 = vmatprep.subr.mxu0 0.0
        %651 = vmatpush1.msra.mxu0 0.0
        %652 = vmatprep.subr.mxu0 0.0
        %653 = vmatpush1.msra.mxu0 0.0
        %654 = vmatprep.subr.mxu0 0.0
        %655 = vmatpush1.msra.mxu0 0.0
        %656 = vmatprep.subr.mxu0 0.0
        %657 = vmatpush1.msra.mxu0 0.0
        %658 = vmatprep.subr.mxu0 0.0
        %659 = vmatpush1.msra.mxu0 0.0
        %660 = vmatprep.subr.mxu0 0.0
        %661 = vmatpush1.msra.mxu0 0.0
        %662 = vmatprep.subr.mxu0 0.0
        %663 = vmatpush1.msra.mxu0 0.0
        %664 = vmatprep.subr.mxu0 0.0
        %665 = vmatpush1.msra.mxu0 0.0
        %666 = vmatprep.subr.mxu0 0.0
        %667 = vmatpush1.msra.mxu0 0.0
        %668 = vmatprep.subr.mxu0 0.0
        %669 = vmatpush1.msra.mxu0 0.0
        %670 = vmatprep.subr.mxu0 0.0
        %671 = vmatpush1.msra.mxu0 0.0
        %672 = vmatprep.subr.mxu0 0.0
        %673 = vmatpush1.msra.mxu0 0.0
        %674 = vmatprep.subr.mxu0 0.0
        %675 = vmatpush1.msra.mxu0 0.0
        %676 = vmatprep.subr.mxu0 0.0
        %677 = vmatpush1.msra.mxu0 0.0
        %678 = vmatprep.subr.mxu0 0.0
        %679 = vmatpush1.msra.mxu0 0.0
        %680 = vmatprep.subr.mxu0 0.0
        %681 = vmatpush1.msra.mxu0 0.0
        %682 = vmatprep.subr.mxu0 0.0
        %683 = vmatpush1.msra.mxu0 0.0
        %684 = vmatprep.subr.mxu0 0.0
        %685 = vmatpush1.msra.mxu0 0.0
        %686 = vmatprep.subr.mxu0 0.0
        %687 = vmatpush1.msra.mxu0 0.0
        %688 = vmatprep.subr.mxu0 0.0
        %689 = vmatpush1.msra.mxu0 0.0
        %690 = vmatprep.subr.mxu0 0.0
        %691 = vmatpush1.msra.mxu0 0.0
        %692 = vmatprep.subr.mxu0 0.0
        %693 = vmatpush1.msra.mxu0 0.0
        %694 = vmatprep.subr.mxu0 0.0
        %695 = vmatpush1.msra.mxu0 0.0
        %696 = vmatprep.subr.mxu0 0.0
        %697 = vmatpush1.msra.mxu0 0.0
        %698 = vmatprep.subr.mxu0 0.0
        %699 = vmatpush1.msra.mxu0 0.0
        %700 = vmatprep.subr.mxu0 0.0
        %701 = vmatpush1.msra.mxu0 0.0
        %702 = vmatprep.subr.mxu0 0.0
        %703 = vmatpush1.msra.mxu0 0.0
        %704 = vmatprep.mubr.f32.mxu0 0.0
        %705 = vmatmul.mubr.f32.gmra.mrb[0].mxu0 %v638
        %v706 = vpop.f32.mrb[0].mxu0
        %v707 = vadd.f32 0.0, %v706
        %v708 = vpop.f32.mrb[0].mxu0
        %709 = vdwg.mxu0
        %v710 = vmax.f32 %v707, 0.0001
        %v712 = vsel %vm407, %v710, 0
        %714 = vmatprep.subr.mxu0 0.0
        %715 = vmatpush1.msra.mxu0 %v401
        %716 = vmatprep.subr.mxu0 0.0
        %717 = vmatpush1.msra.mxu0 %v402
        %718 = vmatprep.subr.mxu0 0.0
        %719 = vmatpush1.msra.mxu0 %v403
        %720 = vmatprep.subr.mxu0 0.0
        %721 = vmatpush1.msra.mxu0 %v404
        %722 = vmatprep.subr.mxu0 0.0
        %723 = vmatpush1.msra.mxu0 0.0
        %724 = vmatprep.subr.mxu0 0.0
        %725 = vmatpush1.msra.mxu0 0.0
        %726 = vmatprep.subr.mxu0 0.0
        %727 = vmatpush1.msra.mxu0 0.0
        %728 = vmatprep.subr.mxu0 0.0
        %729 = vmatpush1.msra.mxu0 0.0
        %730 = vmatprep.subr.mxu0 0.0
        %731 = vmatpush1.msra.mxu0 0.0
        %732 = vmatprep.subr.mxu0 0.0
        %733 = vmatpush1.msra.mxu0 0.0
        %734 = vmatprep.subr.mxu0 0.0
        %735 = vmatpush1.msra.mxu0 0.0
        %736 = vmatprep.subr.mxu0 0.0
        %737 = vmatpush1.msra.mxu0 0.0
        %738 = vmatprep.subr.mxu0 0.0
        %739 = vmatpush1.msra.mxu0 0.0
        %740 = vmatprep.subr.mxu0 0.0
        %741 = vmatpush1.msra.mxu0 0.0
        %742 = vmatprep.subr.mxu0 0.0
        %743 = vmatpush1.msra.mxu0 0.0
        %744 = vmatprep.subr.mxu0 0.0
        %745 = vmatpush1.msra.mxu0 0.0
        %746 = vmatprep.subr.mxu0 0.0
        %747 = vmatpush1.msra.mxu0 0.0
        %748 = vmatprep.subr.mxu0 0.0
        %749 = vmatpush1.msra.mxu0 0.0
        %750 = vmatprep.subr.mxu0 0.0
        %751 = vmatpush1.msra.mxu0 0.0
        %752 = vmatprep.subr.mxu0 0.0
        %753 = vmatpush1.msra.mxu0 0.0
        %754 = vmatprep.subr.mxu0 0.0
        %755 = vmatpush1.msra.mxu0 0.0
        %756 = vmatprep.subr.mxu0 0.0
        %757 = vmatpush1.msra.mxu0 0.0
        %758 = vmatprep.subr.mxu0 0.0
        %759 = vmatpush1.msra.mxu0 0.0
        %760 = vmatprep.subr.mxu0 0.0
        %761 = vmatpush1.msra.mxu0 0.0
        %762 = vmatprep.subr.mxu0 0.0
        %763 = vmatpush1.msra.mxu0 0.0
        %764 = vmatprep.subr.mxu0 0.0
        %765 = vmatpush1.msra.mxu0 0.0
        %766 = vmatprep.subr.mxu0 0.0
        %767 = vmatpush1.msra.mxu0 0.0
        %768 = vmatprep.subr.mxu0 0.0
        %769 = vmatpush1.msra.mxu0 0.0
        %770 = vmatprep.subr.mxu0 0.0
        %771 = vmatpush1.msra.mxu0 0.0
        %772 = vmatprep.subr.mxu0 0.0
        %773 = vmatpush1.msra.mxu0 0.0
        %774 = vmatprep.subr.mxu0 0.0
        %775 = vmatpush1.msra.mxu0 0.0
        %776 = vmatprep.subr.mxu0 0.0
        %777 = vmatpush1.msra.mxu0 0.0
        %778 = vmatprep.mubr.f32.mxu0 0.0
        %779 = vmatmul.mubr.f32.gmra.mrb[0].mxu0 %v712
        %v780 = vpop.f32.mrb[0].mxu0
        %v781 = vadd.f32 0.0, %v780
        %v782 = vpop.f32.mrb[0].mxu0
        %783 = vdwg.mxu0
        %v785 = vsel %vm484, %v781, 0
        %787 = vmatprep.subr.mxu0 0.0
        %788 = vmatpush1.msra.mxu0 %v490
        %789 = vmatprep.subr.mxu0 0.0
        %790 = vmatpush1.msra.mxu0 0.0
        %791 = vmatprep.subr.mxu0 0.0
        %792 = vmatpush1.msra.mxu0 0.0
        %793 = vmatprep.subr.mxu0 0.0
        %794 = vmatpush1.msra.mxu0 0.0
        %795 = vmatprep.subr.mxu0 0.0
        %796 = vmatpush1.msra.mxu0 0.0
        %797 = vmatprep.subr.mxu0 0.0
        %798 = vmatpush1.msra.mxu0 0.0
        %799 = vmatprep.subr.mxu0 0.0
        %800 = vmatpush1.msra.mxu0 0.0
        %801 = vmatprep.subr.mxu0 0.0
        %802 = vmatpush1.msra.mxu0 0.0
        %803 = vmatprep.subr.mxu0 0.0
        %804 = vmatpush1.msra.mxu0 0.0
        %805 = vmatprep.subr.mxu0 0.0
        %806 = vmatpush1.msra.mxu0 0.0
        %807 = vmatprep.subr.mxu0 0.0
        %808 = vmatpush1.msra.mxu0 0.0
        %809 = vmatprep.subr.mxu0 0.0
        %810 = vmatpush1.msra.mxu0 0.0
        %811 = vmatprep.subr.mxu0 0.0
        %812 = vmatpush1.msra.mxu0 0.0
        %813 = vmatprep.subr.mxu0 0.0
        %814 = vmatpush1.msra.mxu0 0.0
        %815 = vmatprep.subr.mxu0 0.0
        %816 = vmatpush1.msra.mxu0 0.0
        %817 = vmatprep.subr.mxu0 0.0
        %818 = vmatpush1.msra.mxu0 0.0
        %819 = vmatprep.subr.mxu0 0.0
        %820 = vmatpush1.msra.mxu0 0.0
        %821 = vmatprep.subr.mxu0 0.0
        %822 = vmatpush1.msra.mxu0 0.0
        %823 = vmatprep.subr.mxu0 0.0
        %824 = vmatpush1.msra.mxu0 0.0
        %825 = vmatprep.subr.mxu0 0.0
        %826 = vmatpush1.msra.mxu0 0.0
        %827 = vmatprep.subr.mxu0 0.0
        %828 = vmatpush1.msra.mxu0 0.0
        %829 = vmatprep.subr.mxu0 0.0
        %830 = vmatpush1.msra.mxu0 0.0
        %831 = vmatprep.subr.mxu0 0.0
        %832 = vmatpush1.msra.mxu0 0.0
        %833 = vmatprep.subr.mxu0 0.0
        %834 = vmatpush1.msra.mxu0 0.0
        %835 = vmatprep.subr.mxu0 0.0
        %836 = vmatpush1.msra.mxu0 0.0
        %837 = vmatprep.subr.mxu0 0.0
        %838 = vmatpush1.msra.mxu0 0.0
        %839 = vmatprep.subr.mxu0 0.0
        %840 = vmatpush1.msra.mxu0 0.0
        %841 = vmatprep.subr.mxu0 0.0
        %842 = vmatpush1.msra.mxu0 0.0
        %843 = vmatprep.subr.mxu0 0.0
        %844 = vmatpush1.msra.mxu0 0.0
        %845 = vmatprep.subr.mxu0 0.0
        %846 = vmatpush1.msra.mxu0 0.0
        %847 = vmatprep.subr.mxu0 0.0
        %848 = vmatpush1.msra.mxu0 0.0
        %849 = vmatprep.subr.mxu0 0.0
        %850 = vmatpush1.msra.mxu0 0.0
        %851 = vmatprep.mubr.f32.mxu0 0.0
        %852 = vmatmul.mubr.f32.gmra.mrb[0].mxu0 %v785
        %v853 = vpop.f32.mrb[0].mxu0
        %v854 = vadd.f32 0.0, %v853
        %v855 = vpop.f32.mrb[0].mxu0
        %856 = vdwg.mxu0
        %v857 = vmul.f32 %v562, %v854
        %v858 = vrcp.pop %v710
        %v859 = vmul.f32 1.0, %v858
        %v860 = vmul.f32 %v857, %v859
        %v862 = vsel %vm407, %v860, 0
        %864 = vmatprep.subr.mxu0 0.0
        %865 = vmatpush1.msra.mxu0 %v397
        %866 = vmatprep.subr.mxu0 0.0
        %867 = vmatpush1.msra.mxu0 %v398
        %868 = vmatprep.subr.mxu0 0.0
        %869 = vmatpush1.msra.mxu0 %v399
        %870 = vmatprep.subr.mxu0 0.0
        %871 = vmatpush1.msra.mxu0 %v400
        %872 = vmatprep.subr.mxu0 0.0
        %873 = vmatpush1.msra.mxu0 0.0
        %874 = vmatprep.subr.mxu0 0.0
        %875 = vmatpush1.msra.mxu0 0.0
        %876 = vmatprep.subr.mxu0 0.0
        %877 = vmatpush1.msra.mxu0 0.0
        %878 = vmatprep.subr.mxu0 0.0
        %879 = vmatpush1.msra.mxu0 0.0
        %880 = vmatprep.subr.mxu0 0.0
        %881 = vmatpush1.msra.mxu0 0.0
        %882 = vmatprep.subr.mxu0 0.0
        %883 = vmatpush1.msra.mxu0 0.0
        %884 = vmatprep.subr.mxu0 0.0
        %885 = vmatpush1.msra.mxu0 0.0
        %886 = vmatprep.subr.mxu0 0.0
        %887 = vmatpush1.msra.mxu0 0.0
        %888 = vmatprep.subr.mxu0 0.0
        %889 = vmatpush1.msra.mxu0 0.0
        %890 = vmatprep.subr.mxu0 0.0
        %891 = vmatpush1.msra.mxu0 0.0
        %892 = vmatprep.subr.mxu0 0.0
        %893 = vmatpush1.msra.mxu0 0.0
        %894 = vmatprep.subr.mxu0 0.0
        %895 = vmatpush1.msra.mxu0 0.0
        %896 = vmatprep.subr.mxu0 0.0
        %897 = vmatpush1.msra.mxu0 0.0
        %898 = vmatprep.subr.mxu0 0.0
        %899 = vmatpush1.msra.mxu0 0.0
        %900 = vmatprep.subr.mxu0 0.0
        %901 = vmatpush1.msra.mxu0 0.0
        %902 = vmatprep.subr.mxu0 0.0
        %903 = vmatpush1.msra.mxu0 0.0
        %904 = vmatprep.subr.mxu0 0.0
        %905 = vmatpush1.msra.mxu0 0.0
        %906 = vmatprep.subr.mxu0 0.0
        %907 = vmatpush1.msra.mxu0 0.0
        %908 = vmatprep.subr.mxu0 0.0
        %909 = vmatpush1.msra.mxu0 0.0
        %910 = vmatprep.subr.mxu0 0.0
        %911 = vmatpush1.msra.mxu0 0.0
        %912 = vmatprep.subr.mxu0 0.0
        %913 = vmatpush1.msra.mxu0 0.0
        %914 = vmatprep.subr.mxu0 0.0
        %915 = vmatpush1.msra.mxu0 0.0
        %916 = vmatprep.subr.mxu0 0.0
        %917 = vmatpush1.msra.mxu0 0.0
        %918 = vmatprep.subr.mxu0 0.0
        %919 = vmatpush1.msra.mxu0 0.0
        %920 = vmatprep.subr.mxu0 0.0
        %921 = vmatpush1.msra.mxu0 0.0
        %922 = vmatprep.subr.mxu0 0.0
        %923 = vmatpush1.msra.mxu0 0.0
        %924 = vmatprep.subr.mxu0 0.0
        %925 = vmatpush1.msra.mxu0 0.0
        %926 = vmatprep.subr.mxu0 0.0
        %927 = vmatpush1.msra.mxu0 0.0
        %928 = vmatprep.mubr.f32.mxu0 0.0
        %929 = vmatmul.mubr.f32.gmra.mrb[0].mxu0 %v862
        %v930 = vpop.f32.mrb[0].mxu0
        %v931 = vadd.f32 0.0, %v930
        %v932 = vpop.f32.mrb[0].mxu0
        %933 = vdwg.mxu0
        %v935 = vsel %vm636, %v391, 0
        %937 = vmatprep.subr.mxu0 0.0
        %938 = vmatpush1.msra.mxu0 %v931
        %939 = vmatprep.subr.mxu0 0.0
        %940 = vmatpush1.msra.mxu0 0.0
        %941 = vmatprep.subr.mxu0 0.0
        %942 = vmatpush1.msra.mxu0 0.0
        %943 = vmatprep.subr.mxu0 0.0
        %944 = vmatpush1.msra.mxu0 0.0
        %945 = vmatprep.subr.mxu0 0.0
        %946 = vmatpush1.msra.mxu0 0.0
        %947 = vmatprep.subr.mxu0 0.0
        %948 = vmatpush1.msra.mxu0 0.0
        %949 = vmatprep.subr.mxu0 0.0
        %950 = vmatpush1.msra.mxu0 0.0
        %951 = vmatprep.subr.mxu0 0.0
        %952 = vmatpush1.msra.mxu0 0.0
        %953 = vmatprep.subr.mxu0 0.0
        %954 = vmatpush1.msra.mxu0 0.0
        %955 = vmatprep.subr.mxu0 0.0
        %956 = vmatpush1.msra.mxu0 0.0
        %957 = vmatprep.subr.mxu0 0.0
        %958 = vmatpush1.msra.mxu0 0.0
        %959 = vmatprep.subr.mxu0 0.0
        %960 = vmatpush1.msra.mxu0 0.0
        %961 = vmatprep.subr.mxu0 0.0
        %962 = vmatpush1.msra.mxu0 0.0
        %963 = vmatprep.subr.mxu0 0.0
        %964 = vmatpush1.msra.mxu0 0.0
        %965 = vmatprep.subr.mxu0 0.0
        %966 = vmatpush1.msra.mxu0 0.0
        %967 = vmatprep.subr.mxu0 0.0
        %968 = vmatpush1.msra.mxu0 0.0
        %969 = vmatprep.subr.mxu0 0.0
        %970 = vmatpush1.msra.mxu0 0.0
        %971 = vmatprep.subr.mxu0 0.0
        %972 = vmatpush1.msra.mxu0 0.0
        %973 = vmatprep.subr.mxu0 0.0
        %974 = vmatpush1.msra.mxu0 0.0
        %975 = vmatprep.subr.mxu0 0.0
        %976 = vmatpush1.msra.mxu0 0.0
        %977 = vmatprep.subr.mxu0 0.0
        %978 = vmatpush1.msra.mxu0 0.0
        %979 = vmatprep.subr.mxu0 0.0
        %980 = vmatpush1.msra.mxu0 0.0
        %981 = vmatprep.subr.mxu0 0.0
        %982 = vmatpush1.msra.mxu0 0.0
        %983 = vmatprep.subr.mxu0 0.0
        %984 = vmatpush1.msra.mxu0 0.0
        %985 = vmatprep.subr.mxu0 0.0
        %986 = vmatpush1.msra.mxu0 0.0
        %987 = vmatprep.subr.mxu0 0.0
        %988 = vmatpush1.msra.mxu0 0.0
        %989 = vmatprep.subr.mxu0 0.0
        %990 = vmatpush1.msra.mxu0 0.0
        %991 = vmatprep.subr.mxu0 0.0
        %992 = vmatpush1.msra.mxu0 0.0
        %993 = vmatprep.subr.mxu0 0.0
        %994 = vmatpush1.msra.mxu0 0.0
        %995 = vmatprep.subr.mxu0 0.0
        %996 = vmatpush1.msra.mxu0 0.0
        %997 = vmatprep.subr.mxu0 0.0
        %998 = vmatpush1.msra.mxu0 0.0
        %999 = vmatprep.subr.mxu0 0.0
        %1000 = vmatpush1.msra.mxu0 0.0
        %1001 = vmatprep.mubr.f32.mxu0 0.0
        %1002 = vmatmul.mubr.f32.gmra.mrb[0].mxu0 %v935
        %v1003 = vpop.f32.mrb[0].mxu0
        %v1004 = vadd.f32 0.0, %v1003
        %v1005 = vpop.f32.mrb[0].mxu0
        %1006 = vdwg.mxu0
        %v1007 = vmul.f32 %v1004, 0.125
        %v1009 = vsel %vm407, %v1007, 0
        %1011 = vmatprep.subr.mxu0 0.0
        %1012 = vmatpush1.msra.mxu0 %v401
        %1013 = vmatprep.subr.mxu0 0.0
        %1014 = vmatpush1.msra.mxu0 %v402
        %1015 = vmatprep.subr.mxu0 0.0
        %1016 = vmatpush1.msra.mxu0 %v403
        %1017 = vmatprep.subr.mxu0 0.0
        %1018 = vmatpush1.msra.mxu0 %v404
        %1019 = vmatprep.subr.mxu0 0.0
        %1020 = vmatpush1.msra.mxu0 0.0
        %1021 = vmatprep.subr.mxu0 0.0
        %1022 = vmatpush1.msra.mxu0 0.0
        %1023 = vmatprep.subr.mxu0 0.0
        %1024 = vmatpush1.msra.mxu0 0.0
        %1025 = vmatprep.subr.mxu0 0.0
        %1026 = vmatpush1.msra.mxu0 0.0
        %1027 = vmatprep.subr.mxu0 0.0
        %1028 = vmatpush1.msra.mxu0 0.0
        %1029 = vmatprep.subr.mxu0 0.0
        %1030 = vmatpush1.msra.mxu0 0.0
        %1031 = vmatprep.subr.mxu0 0.0
        %1032 = vmatpush1.msra.mxu0 0.0
        %1033 = vmatprep.subr.mxu0 0.0
        %1034 = vmatpush1.msra.mxu0 0.0
        %1035 = vmatprep.subr.mxu0 0.0
        %1036 = vmatpush1.msra.mxu0 0.0
        %1037 = vmatprep.subr.mxu0 0.0
        %1038 = vmatpush1.msra.mxu0 0.0
        %1039 = vmatprep.subr.mxu0 0.0
        %1040 = vmatpush1.msra.mxu0 0.0
        %1041 = vmatprep.subr.mxu0 0.0
        %1042 = vmatpush1.msra.mxu0 0.0
        %1043 = vmatprep.subr.mxu0 0.0
        %1044 = vmatpush1.msra.mxu0 0.0
        %1045 = vmatprep.subr.mxu0 0.0
        %1046 = vmatpush1.msra.mxu0 0.0
        %1047 = vmatprep.subr.mxu0 0.0
        %1048 = vmatpush1.msra.mxu0 0.0
        %1049 = vmatprep.subr.mxu0 0.0
        %1050 = vmatpush1.msra.mxu0 0.0
        %1051 = vmatprep.subr.mxu0 0.0
        %1052 = vmatpush1.msra.mxu0 0.0
        %1053 = vmatprep.subr.mxu0 0.0
        %1054 = vmatpush1.msra.mxu0 0.0
        %1055 = vmatprep.subr.mxu0 0.0
        %1056 = vmatpush1.msra.mxu0 0.0
        %1057 = vmatprep.subr.mxu0 0.0
        %1058 = vmatpush1.msra.mxu0 0.0
        %1059 = vmatprep.subr.mxu0 0.0
        %1060 = vmatpush1.msra.mxu0 0.0
        %1061 = vmatprep.subr.mxu0 0.0
        %1062 = vmatpush1.msra.mxu0 0.0
        %1063 = vmatprep.subr.mxu0 0.0
        %1064 = vmatpush1.msra.mxu0 0.0
        %1065 = vmatprep.subr.mxu0 0.0
        %1066 = vmatpush1.msra.mxu0 0.0
        %1067 = vmatprep.subr.mxu0 0.0
        %1068 = vmatpush1.msra.mxu0 0.0
        %1069 = vmatprep.subr.mxu0 0.0
        %1070 = vmatpush1.msra.mxu0 0.0
        %1071 = vmatprep.subr.mxu0 0.0
        %1072 = vmatpush1.msra.mxu0 0.0
        %1073 = vmatprep.subr.mxu0 0.0
        %1074 = vmatpush1.msra.mxu0 0.0
        %1075 = vmatprep.mubr.f32.mxu0 0.0
        %1076 = vmatmul.mubr.f32.gmra.mrb[0].mxu0 %v1009
        %v1077 = vpop.f32.mrb[0].mxu0
        %v1078 = vadd.f32 0.0, %v1077
        %v1079 = vpop.f32.mrb[0].mxu0
        %1080 = vdwg.mxu0
        %v1081 = vmax.f32 %v1078, 1e-20
        %v1082 = vrcp.pop %v1081
        %v1083 = vmul.f32 1.0, %v1082
        %v1085 = vsel %vm484, %v1083, 0
        %1087 = vmatprep.subr.mxu0 0.0
        %1088 = vmatpush1.msra.mxu0 %v490
        %1089 = vmatprep.subr.mxu0 0.0
        %1090 = vmatpush1.msra.mxu0 0.0
        %1091 = vmatprep.subr.mxu0 0.0
        %1092 = vmatpush1.msra.mxu0 0.0
        %1093 = vmatprep.subr.mxu0 0.0
        %1094 = vmatpush1.msra.mxu0 0.0
        %1095 = vmatprep.subr.mxu0 0.0
        %1096 = vmatpush1.msra.mxu0 0.0
        %1097 = vmatprep.subr.mxu0 0.0
        %1098 = vmatpush1.msra.mxu0 0.0
        %1099 = vmatprep.subr.mxu0 0.0
        %1100 = vmatpush1.msra.mxu0 0.0
        %1101 = vmatprep.subr.mxu0 0.0
        %1102 = vmatpush1.msra.mxu0 0.0
        %1103 = vmatprep.subr.mxu0 0.0
        %1104 = vmatpush1.msra.mxu0 0.0
        %1105 = vmatprep.subr.mxu0 0.0
        %1106 = vmatpush1.msra.mxu0 0.0
        %1107 = vmatprep.subr.mxu0 0.0
        %1108 = vmatpush1.msra.mxu0 0.0
        %1109 = vmatprep.subr.mxu0 0.0
        %1110 = vmatpush1.msra.mxu0 0.0
        %1111 = vmatprep.subr.mxu0 0.0
        %1112 = vmatpush1.msra.mxu0 0.0
        %1113 = vmatprep.subr.mxu0 0.0
        %1114 = vmatpush1.msra.mxu0 0.0
        %1115 = vmatprep.subr.mxu0 0.0
        %1116 = vmatpush1.msra.mxu0 0.0
        %1117 = vmatprep.subr.mxu0 0.0
        %1118 = vmatpush1.msra.mxu0 0.0
        %1119 = vmatprep.subr.mxu0 0.0
        %1120 = vmatpush1.msra.mxu0 0.0
        %1121 = vmatprep.subr.mxu0 0.0
        %1122 = vmatpush1.msra.mxu0 0.0
        %1123 = vmatprep.subr.mxu0 0.0
        %1124 = vmatpush1.msra.mxu0 0.0
        %1125 = vmatprep.subr.mxu0 0.0
        %1126 = vmatpush1.msra.mxu0 0.0
        %1127 = vmatprep.subr.mxu0 0.0
        %1128 = vmatpush1.msra.mxu0 0.0
        %1129 = vmatprep.subr.mxu0 0.0
        %1130 = vmatpush1.msra.mxu0 0.0
        %1131 = vmatprep.subr.mxu0 0.0
        %1132 = vmatpush1.msra.mxu0 0.0
        %1133 = vmatprep.subr.mxu0 0.0
        %1134 = vmatpush1.msra.mxu0 0.0
        %1135 = vmatprep.subr.mxu0 0.0
        %1136 = vmatpush1.msra.mxu0 0.0
        %1137 = vmatprep.subr.mxu0 0.0
        %1138 = vmatpush1.msra.mxu0 0.0
        %1139 = vmatprep.subr.mxu0 0.0
        %1140 = vmatpush1.msra.mxu0 0.0
        %1141 = vmatprep.subr.mxu0 0.0
        %1142 = vmatpush1.msra.mxu0 0.0
        %1143 = vmatprep.subr.mxu0 0.0
        %1144 = vmatpush1.msra.mxu0 0.0
        %1145 = vmatprep.subr.mxu0 0.0
        %1146 = vmatpush1.msra.mxu0 0.0
        %1147 = vmatprep.subr.mxu0 0.0
        %1148 = vmatpush1.msra.mxu0 0.0
        %1149 = vmatprep.subr.mxu0 0.0
        %1150 = vmatpush1.msra.mxu0 0.0
        %1151 = vmatprep.mubr.f32.mxu0 0.0
        %1152 = vmatmul.mubr.f32.gmra.mrb[0].mxu0 %v1085
        %v1153 = vpop.f32.mrb[0].mxu0
        %v1154 = vadd.f32 0.0, %v1153
        %v1155 = vpop.f32.mrb[0].mxu0
        %1156 = vdwg.mxu0
        %v1157 = vmul.f32 %v1007, %v1154
        %v1159 = vsel %vm407, %v1157, 0
        %1161 = vmatprep.subr.mxu0 0.0
        %1162 = vmatpush1.msra.mxu0 %v393
        %1163 = vmatprep.subr.mxu0 0.0
        %1164 = vmatpush1.msra.mxu0 %v394
        %1165 = vmatprep.subr.mxu0 0.0
        %1166 = vmatpush1.msra.mxu0 %v395
        %1167 = vmatprep.subr.mxu0 0.0
        %1168 = vmatpush1.msra.mxu0 %v396
        %1169 = vmatprep.subr.mxu0 0.0
        %1170 = vmatpush1.msra.mxu0 0.0
        %1171 = vmatprep.subr.mxu0 0.0
        %1172 = vmatpush1.msra.mxu0 0.0
        %1173 = vmatprep.subr.mxu0 0.0
        %1174 = vmatpush1.msra.mxu0 0.0
        %1175 = vmatprep.subr.mxu0 0.0
        %1176 = vmatpush1.msra.mxu0 0.0
        %1177 = vmatprep.subr.mxu0 0.0
        %1178 = vmatpush1.msra.mxu0 0.0
        %1179 = vmatprep.subr.mxu0 0.0
        %1180 = vmatpush1.msra.mxu0 0.0
        %1181 = vmatprep.subr.mxu0 0.0
        %1182 = vmatpush1.msra.mxu0 0.0
        %1183 = vmatprep.subr.mxu0 0.0
        %1184 = vmatpush1.msra.mxu0 0.0
        %1185 = vmatprep.subr.mxu0 0.0
        %1186 = vmatpush1.msra.mxu0 0.0
        %1187 = vmatprep.subr.mxu0 0.0
        %1188 = vmatpush1.msra.mxu0 0.0
        %1189 = vmatprep.subr.mxu0 0.0
        %1190 = vmatpush1.msra.mxu0 0.0
        %1191 = vmatprep.subr.mxu0 0.0
        %1192 = vmatpush1.msra.mxu0 0.0
        %1193 = vmatprep.subr.mxu0 0.0
        %1194 = vmatpush1.msra.mxu0 0.0
        %1195 = vmatprep.subr.mxu0 0.0
        %1196 = vmatpush1.msra.mxu0 0.0
        %1197 = vmatprep.subr.mxu0 0.0
        %1198 = vmatpush1.msra.mxu0 0.0
        %1199 = vmatprep.subr.mxu0 0.0
        %1200 = vmatpush1.msra.mxu0 0.0
        %1201 = vmatprep.subr.mxu0 0.0
        %1202 = vmatpush1.msra.mxu0 0.0
        %1203 = vmatprep.subr.mxu0 0.0
        %1204 = vmatpush1.msra.mxu0 0.0
        %1205 = vmatprep.subr.mxu0 0.0
        %1206 = vmatpush1.msra.mxu0 0.0
        %1207 = vmatprep.subr.mxu0 0.0
        %1208 = vmatpush1.msra.mxu0 0.0
        %1209 = vmatprep.subr.mxu0 0.0
        %1210 = vmatpush1.msra.mxu0 0.0
        %1211 = vmatprep.subr.mxu0 0.0
        %1212 = vmatpush1.msra.mxu0 0.0
        %1213 = vmatprep.subr.mxu0 0.0
        %1214 = vmatpush1.msra.mxu0 0.0
        %1215 = vmatprep.subr.mxu0 0.0
        %1216 = vmatpush1.msra.mxu0 0.0
        %1217 = vmatprep.subr.mxu0 0.0
        %1218 = vmatpush1.msra.mxu0 0.0
        %1219 = vmatprep.subr.mxu0 0.0
        %1220 = vmatpush1.msra.mxu0 0.0
        %1221 = vmatprep.subr.mxu0 0.0
        %1222 = vmatpush1.msra.mxu0 0.0
        %1223 = vmatprep.subr.mxu0 0.0
        %1224 = vmatpush1.msra.mxu0 0.0
        %1225 = vmatprep.mubr.f32.mxu0 0.0
        %1226 = vmatmul.mubr.f32.gmra.mrb[0].mxu0 %v1159
        %v1227 = vpop.f32.mrb[0].mxu0
        %v1228 = vadd.f32 0.0, %v1227
        %v1229 = vpop.f32.mrb[0].mxu0
        %1230 = vdwg.mxu0
        %1231 = vmatprep.subr.mxu0 0.0
        %1232 = vmatpush1.msra.mxu0 %v1228
        %1233 = vmatprep.subr.mxu0 0.0
        %1234 = vmatpush1.msra.mxu0 0.0
        %1235 = vmatprep.subr.mxu0 0.0
        %1236 = vmatpush1.msra.mxu0 0.0
        %1237 = vmatprep.subr.mxu0 0.0
        %1238 = vmatpush1.msra.mxu0 0.0
        %1239 = vmatprep.subr.mxu0 0.0
        %1240 = vmatpush1.msra.mxu0 0.0
        %1241 = vmatprep.subr.mxu0 0.0
        %1242 = vmatpush1.msra.mxu0 0.0
        %1243 = vmatprep.subr.mxu0 0.0
        %1244 = vmatpush1.msra.mxu0 0.0
        %1245 = vmatprep.subr.mxu0 0.0
        %1246 = vmatpush1.msra.mxu0 0.0
        %1247 = vmatprep.subr.mxu0 0.0
        %1248 = vmatpush1.msra.mxu0 0.0
        %1249 = vmatprep.subr.mxu0 0.0
        %1250 = vmatpush1.msra.mxu0 0.0
        %1251 = vmatprep.subr.mxu0 0.0
        %1252 = vmatpush1.msra.mxu0 0.0
        %1253 = vmatprep.subr.mxu0 0.0
        %1254 = vmatpush1.msra.mxu0 0.0
        %1255 = vmatprep.subr.mxu0 0.0
        %1256 = vmatpush1.msra.mxu0 0.0
        %1257 = vmatprep.subr.mxu0 0.0
        %1258 = vmatpush1.msra.mxu0 0.0
        %1259 = vmatprep.subr.mxu0 0.0
        %1260 = vmatpush1.msra.mxu0 0.0
        %1261 = vmatprep.subr.mxu0 0.0
        %1262 = vmatpush1.msra.mxu0 0.0
        %1263 = vmatprep.subr.mxu0 0.0
        %1264 = vmatpush1.msra.mxu0 0.0
        %1265 = vmatprep.subr.mxu0 0.0
        %1266 = vmatpush1.msra.mxu0 0.0
        %1267 = vmatprep.subr.mxu0 0.0
        %1268 = vmatpush1.msra.mxu0 0.0
        %1269 = vmatprep.subr.mxu0 0.0
        %1270 = vmatpush1.msra.mxu0 0.0
        %1271 = vmatprep.subr.mxu0 0.0
        %1272 = vmatpush1.msra.mxu0 0.0
        %1273 = vmatprep.subr.mxu0 0.0
        %1274 = vmatpush1.msra.mxu0 0.0
        %1275 = vmatprep.subr.mxu0 0.0
        %1276 = vmatpush1.msra.mxu0 0.0
        %1277 = vmatprep.subr.mxu0 0.0
        %1278 = vmatpush1.msra.mxu0 0.0
        %1279 = vmatprep.subr.mxu0 0.0
        %1280 = vmatpush1.msra.mxu0 0.0
        %1281 = vmatprep.subr.mxu0 0.0
        %1282 = vmatpush1.msra.mxu0 0.0
        %1283 = vmatprep.subr.mxu0 0.0
        %1284 = vmatpush1.msra.mxu0 0.0
        %1285 = vmatprep.subr.mxu0 0.0
        %1286 = vmatpush1.msra.mxu0 0.0
        %1287 = vmatprep.subr.mxu0 0.0
        %1288 = vmatpush1.msra.mxu0 0.0
        %1289 = vmatprep.subr.mxu0 0.0
        %1290 = vmatpush1.msra.mxu0 0.0
        %1291 = vmatprep.subr.mxu0 0.0
        %1292 = vmatpush1.msra.mxu0 0.0
        %1293 = vmatprep.subr.mxu0 0.0
        %1294 = vmatpush1.msra.mxu0 0.0
        %1295 = vmatprep.mubr.f32.mxu0 0.0
        %1296 = vmatmul.mubr.f32.gmra.mrb[0].mxu0 %v638
        %v1297 = vpop.f32.mrb[0].mxu0
        %v1298 = vadd.f32 0.0, %v1297
        %v1299 = vpop.f32.mrb[0].mxu0
        %1300 = vdwg.mxu0
        %v1301 = vmax.f32 %v1298, 0.0001
        %v1303 = vsel %vm407, %v1301, 0
        %1305 = vmatprep.subr.mxu0 0.0
        %1306 = vmatpush1.msra.mxu0 %v401
        %1307 = vmatprep.subr.mxu0 0.0
        %1308 = vmatpush1.msra.mxu0 %v402
        %1309 = vmatprep.subr.mxu0 0.0
        %1310 = vmatpush1.msra.mxu0 %v403
        %1311 = vmatprep.subr.mxu0 0.0
        %1312 = vmatpush1.msra.mxu0 %v404
        %1313 = vmatprep.subr.mxu0 0.0
        %1314 = vmatpush1.msra.mxu0 0.0
        %1315 = vmatprep.subr.mxu0 0.0
        %1316 = vmatpush1.msra.mxu0 0.0
        %1317 = vmatprep.subr.mxu0 0.0
        %1318 = vmatpush1.msra.mxu0 0.0
        %1319 = vmatprep.subr.mxu0 0.0
        %1320 = vmatpush1.msra.mxu0 0.0
        %1321 = vmatprep.subr.mxu0 0.0
        %1322 = vmatpush1.msra.mxu0 0.0
        %1323 = vmatprep.subr.mxu0 0.0
        %1324 = vmatpush1.msra.mxu0 0.0
        %1325 = vmatprep.subr.mxu0 0.0
        %1326 = vmatpush1.msra.mxu0 0.0
        %1327 = vmatprep.subr.mxu0 0.0
        %1328 = vmatpush1.msra.mxu0 0.0
        %1329 = vmatprep.subr.mxu0 0.0
        %1330 = vmatpush1.msra.mxu0 0.0
        %1331 = vmatprep.subr.mxu0 0.0
        %1332 = vmatpush1.msra.mxu0 0.0
        %1333 = vmatprep.subr.mxu0 0.0
        %1334 = vmatpush1.msra.mxu0 0.0
        %1335 = vmatprep.subr.mxu0 0.0
        %1336 = vmatpush1.msra.mxu0 0.0
        %1337 = vmatprep.subr.mxu0 0.0
        %1338 = vmatpush1.msra.mxu0 0.0
        %1339 = vmatprep.subr.mxu0 0.0
        %1340 = vmatpush1.msra.mxu0 0.0
        %1341 = vmatprep.subr.mxu0 0.0
        %1342 = vmatpush1.msra.mxu0 0.0
        %1343 = vmatprep.subr.mxu0 0.0
        %1344 = vmatpush1.msra.mxu0 0.0
        %1345 = vmatprep.subr.mxu0 0.0
        %1346 = vmatpush1.msra.mxu0 0.0
        %1347 = vmatprep.subr.mxu0 0.0
        %1348 = vmatpush1.msra.mxu0 0.0
        %1349 = vmatprep.subr.mxu0 0.0
        %1350 = vmatpush1.msra.mxu0 0.0
        %1351 = vmatprep.subr.mxu0 0.0
        %1352 = vmatpush1.msra.mxu0 0.0
        %1353 = vmatprep.subr.mxu0 0.0
        %1354 = vmatpush1.msra.mxu0 0.0
        %1355 = vmatprep.subr.mxu0 0.0
        %1356 = vmatpush1.msra.mxu0 0.0
        %1357 = vmatprep.subr.mxu0 0.0
        %1358 = vmatpush1.msra.mxu0 0.0
        %1359 = vmatprep.subr.mxu0 0.0
        %1360 = vmatpush1.msra.mxu0 0.0
        %1361 = vmatprep.subr.mxu0 0.0
        %1362 = vmatpush1.msra.mxu0 0.0
        %1363 = vmatprep.subr.mxu0 0.0
        %1364 = vmatpush1.msra.mxu0 0.0
        %1365 = vmatprep.subr.mxu0 0.0
        %1366 = vmatpush1.msra.mxu0 0.0
        %1367 = vmatprep.subr.mxu0 0.0
        %1368 = vmatpush1.msra.mxu0 0.0
        %1369 = vmatprep.mubr.f32.mxu0 0.0
        %1370 = vmatmul.mubr.f32.gmra.mrb[0].mxu0 %v1303
        %v1371 = vpop.f32.mrb[0].mxu0
        %v1372 = vadd.f32 0.0, %v1371
        %v1373 = vpop.f32.mrb[0].mxu0
        %1374 = vdwg.mxu0
        %v1376 = vsel %vm484, %v1372, 0
        %1378 = vmatprep.subr.mxu0 0.0
        %1379 = vmatpush1.msra.mxu0 %v490
        %1380 = vmatprep.subr.mxu0 0.0
        %1381 = vmatpush1.msra.mxu0 0.0
        %1382 = vmatprep.subr.mxu0 0.0
        %1383 = vmatpush1.msra.mxu0 0.0
        %1384 = vmatprep.subr.mxu0 0.0
        %1385 = vmatpush1.msra.mxu0 0.0
        %1386 = vmatprep.subr.mxu0 0.0
        %1387 = vmatpush1.msra.mxu0 0.0
        %1388 = vmatprep.subr.mxu0 0.0
        %1389 = vmatpush1.msra.mxu0 0.0
        %1390 = vmatprep.subr.mxu0 0.0
        %1391 = vmatpush1.msra.mxu0 0.0
        %1392 = vmatprep.subr.mxu0 0.0
        %1393 = vmatpush1.msra.mxu0 0.0
        %1394 = vmatprep.subr.mxu0 0.0
        %1395 = vmatpush1.msra.mxu0 0.0
        %1396 = vmatprep.subr.mxu0 0.0
        %1397 = vmatpush1.msra.mxu0 0.0
        %1398 = vmatprep.subr.mxu0 0.0
        %1399 = vmatpush1.msra.mxu0 0.0
        %1400 = vmatprep.subr.mxu0 0.0
        %1401 = vmatpush1.msra.mxu0 0.0
        %1402 = vmatprep.subr.mxu0 0.0
        %1403 = vmatpush1.msra.mxu0 0.0
        %1404 = vmatprep.subr.mxu0 0.0
        %1405 = vmatpush1.msra.mxu0 0.0
        %1406 = vmatprep.subr.mxu0 0.0
        %1407 = vmatpush1.msra.mxu0 0.0
        %1408 = vmatprep.subr.mxu0 0.0
        %1409 = vmatpush1.msra.mxu0 0.0
        %1410 = vmatprep.subr.mxu0 0.0
        %1411 = vmatpush1.msra.mxu0 0.0
        %1412 = vmatprep.subr.mxu0 0.0
        %1413 = vmatpush1.msra.mxu0 0.0
        %1414 = vmatprep.subr.mxu0 0.0
        %1415 = vmatpush1.msra.mxu0 0.0
        %1416 = vmatprep.subr.mxu0 0.0
        %1417 = vmatpush1.msra.mxu0 0.0
        %1418 = vmatprep.subr.mxu0 0.0
        %1419 = vmatpush1.msra.mxu0 0.0
        %1420 = vmatprep.subr.mxu0 0.0
        %1421 = vmatpush1.msra.mxu0 0.0
        %1422 = vmatprep.subr.mxu0 0.0
        %1423 = vmatpush1.msra.mxu0 0.0
        %1424 = vmatprep.subr.mxu0 0.0
        %1425 = vmatpush1.msra.mxu0 0.0
        %1426 = vmatprep.subr.mxu0 0.0
        %1427 = vmatpush1.msra.mxu0 0.0
        %1428 = vmatprep.subr.mxu0 0.0
        %1429 = vmatpush1.msra.mxu0 0.0
        %1430 = vmatprep.subr.mxu0 0.0
        %1431 = vmatpush1.msra.mxu0 0.0
        %1432 = vmatprep.subr.mxu0 0.0
        %1433 = vmatpush1.msra.mxu0 0.0
        %1434 = vmatprep.subr.mxu0 0.0
        %1435 = vmatpush1.msra.mxu0 0.0
        %1436 = vmatprep.subr.mxu0 0.0
        %1437 = vmatpush1.msra.mxu0 0.0
        %1438 = vmatprep.subr.mxu0 0.0
        %1439 = vmatpush1.msra.mxu0 0.0
        %1440 = vmatprep.subr.mxu0 0.0
        %1441 = vmatpush1.msra.mxu0 0.0
        %1442 = vmatprep.mubr.f32.mxu0 0.0
        %1443 = vmatmul.mubr.f32.gmra.mrb[0].mxu0 %v1376
        %v1444 = vpop.f32.mrb[0].mxu0
        %v1445 = vadd.f32 0.0, %v1444
        %v1446 = vpop.f32.mrb[0].mxu0
        %1447 = vdwg.mxu0
        %v1448 = vmul.f32 %v562, %v1445
        %v1449 = vrcp.pop %v1301
        %v1450 = vmul.f32 1.0, %v1449
        %v1451 = vmul.f32 %v1448, %v1450
        %v1453 = vsel %vm407, %v1451, 0
        %1455 = vmatprep.subr.mxu0 0.0
        %1456 = vmatpush1.msra.mxu0 %v397
        %1457 = vmatprep.subr.mxu0 0.0
        %1458 = vmatpush1.msra.mxu0 %v398
        %1459 = vmatprep.subr.mxu0 0.0
        %1460 = vmatpush1.msra.mxu0 %v399
        %1461 = vmatprep.subr.mxu0 0.0
        %1462 = vmatpush1.msra.mxu0 %v400
        %1463 = vmatprep.subr.mxu0 0.0
        %1464 = vmatpush1.msra.mxu0 0.0
        %1465 = vmatprep.subr.mxu0 0.0
        %1466 = vmatpush1.msra.mxu0 0.0
        %1467 = vmatprep.subr.mxu0 0.0
        %1468 = vmatpush1.msra.mxu0 0.0
        %1469 = vmatprep.subr.mxu0 0.0
        %1470 = vmatpush1.msra.mxu0 0.0
        %1471 = vmatprep.subr.mxu0 0.0
        %1472 = vmatpush1.msra.mxu0 0.0
        %1473 = vmatprep.subr.mxu0 0.0
        %1474 = vmatpush1.msra.mxu0 0.0
        %1475 = vmatprep.subr.mxu0 0.0
        %1476 = vmatpush1.msra.mxu0 0.0
        %1477 = vmatprep.subr.mxu0 0.0
        %1478 = vmatpush1.msra.mxu0 0.0
        %1479 = vmatprep.subr.mxu0 0.0
        %1480 = vmatpush1.msra.mxu0 0.0
        %1481 = vmatprep.subr.mxu0 0.0
        %1482 = vmatpush1.msra.mxu0 0.0
        %1483 = vmatprep.subr.mxu0 0.0
        %1484 = vmatpush1.msra.mxu0 0.0
        %1485 = vmatprep.subr.mxu0 0.0
        %1486 = vmatpush1.msra.mxu0 0.0
        %1487 = vmatprep.subr.mxu0 0.0
        %1488 = vmatpush1.msra.mxu0 0.0
        %1489 = vmatprep.subr.mxu0 0.0
        %1490 = vmatpush1.msra.mxu0 0.0
        %1491 = vmatprep.subr.mxu0 0.0
        %1492 = vmatpush1.msra.mxu0 0.0
        %1493 = vmatprep.subr.mxu0 0.0
        %1494 = vmatpush1.msra.mxu0 0.0
        %1495 = vmatprep.subr.mxu0 0.0
        %1496 = vmatpush1.msra.mxu0 0.0
        %1497 = vmatprep.subr.mxu0 0.0
        %1498 = vmatpush1.msra.mxu0 0.0
        %1499 = vmatprep.subr.mxu0 0.0
        %1500 = vmatpush1.msra.mxu0 0.0
        %1501 = vmatprep.subr.mxu0 0.0
        %1502 = vmatpush1.msra.mxu0 0.0
        %1503 = vmatprep.subr.mxu0 0.0
        %1504 = vmatpush1.msra.mxu0 0.0
        %1505 = vmatprep.subr.mxu0 0.0
        %1506 = vmatpush1.msra.mxu0 0.0
        %1507 = vmatprep.subr.mxu0 0.0
        %1508 = vmatpush1.msra.mxu0 0.0
        %1509 = vmatprep.subr.mxu0 0.0
        %1510 = vmatpush1.msra.mxu0 0.0
        %1511 = vmatprep.subr.mxu0 0.0
        %1512 = vmatpush1.msra.mxu0 0.0
        %1513 = vmatprep.subr.mxu0 0.0
        %1514 = vmatpush1.msra.mxu0 0.0
        %1515 = vmatprep.subr.mxu0 0.0
        %1516 = vmatpush1.msra.mxu0 0.0
        %1517 = vmatprep.subr.mxu0 0.0
        %1518 = vmatpush1.msra.mxu0 0.0
        %1519 = vmatprep.mubr.f32.mxu0 0.0
        %1520 = vmatmul.mubr.f32.gmra.mrb[0].mxu0 %v1453
        %v1521 = vpop.f32.mrb[0].mxu0
        %v1522 = vadd.f32 0.0, %v1521
        %v1523 = vpop.f32.mrb[0].mxu0
        %1524 = vdwg.mxu0
        %1525 = vmatprep.subr.mxu0 0.0
        %1526 = vmatpush1.msra.mxu0 %v1522
        %1527 = vmatprep.subr.mxu0 0.0
        %1528 = vmatpush1.msra.mxu0 0.0
        %1529 = vmatprep.subr.mxu0 0.0
        %1530 = vmatpush1.msra.mxu0 0.0
        %1531 = vmatprep.subr.mxu0 0.0
        %1532 = vmatpush1.msra.mxu0 0.0
        %1533 = vmatprep.subr.mxu0 0.0
        %1534 = vmatpush1.msra.mxu0 0.0
        %1535 = vmatprep.subr.mxu0 0.0
        %1536 = vmatpush1.msra.mxu0 0.0
        %1537 = vmatprep.subr.mxu0 0.0
        %1538 = vmatpush1.msra.mxu0 0.0
        %1539 = vmatprep.subr.mxu0 0.0
        %1540 = vmatpush1.msra.mxu0 0.0
        %1541 = vmatprep.subr.mxu0 0.0
        %1542 = vmatpush1.msra.mxu0 0.0
        %1543 = vmatprep.subr.mxu0 0.0
        %1544 = vmatpush1.msra.mxu0 0.0
        %1545 = vmatprep.subr.mxu0 0.0
        %1546 = vmatpush1.msra.mxu0 0.0
        %1547 = vmatprep.subr.mxu0 0.0
        %1548 = vmatpush1.msra.mxu0 0.0
        %1549 = vmatprep.subr.mxu0 0.0
        %1550 = vmatpush1.msra.mxu0 0.0
        %1551 = vmatprep.subr.mxu0 0.0
        %1552 = vmatpush1.msra.mxu0 0.0
        %1553 = vmatprep.subr.mxu0 0.0
        %1554 = vmatpush1.msra.mxu0 0.0
        %1555 = vmatprep.subr.mxu0 0.0
        %1556 = vmatpush1.msra.mxu0 0.0
        %1557 = vmatprep.subr.mxu0 0.0
        %1558 = vmatpush1.msra.mxu0 0.0
        %1559 = vmatprep.subr.mxu0 0.0
        %1560 = vmatpush1.msra.mxu0 0.0
        %1561 = vmatprep.subr.mxu0 0.0
        %1562 = vmatpush1.msra.mxu0 0.0
        %1563 = vmatprep.subr.mxu0 0.0
        %1564 = vmatpush1.msra.mxu0 0.0
        %1565 = vmatprep.subr.mxu0 0.0
        %1566 = vmatpush1.msra.mxu0 0.0
        %1567 = vmatprep.subr.mxu0 0.0
        %1568 = vmatpush1.msra.mxu0 0.0
        %1569 = vmatprep.subr.mxu0 0.0
        %1570 = vmatpush1.msra.mxu0 0.0
        %1571 = vmatprep.subr.mxu0 0.0
        %1572 = vmatpush1.msra.mxu0 0.0
        %1573 = vmatprep.subr.mxu0 0.0
        %1574 = vmatpush1.msra.mxu0 0.0
        %1575 = vmatprep.subr.mxu0 0.0
        %1576 = vmatpush1.msra.mxu0 0.0
        %1577 = vmatprep.subr.mxu0 0.0
        %1578 = vmatpush1.msra.mxu0 0.0
        %1579 = vmatprep.subr.mxu0 0.0
        %1580 = vmatpush1.msra.mxu0 0.0
        %1581 = vmatprep.subr.mxu0 0.0
        %1582 = vmatpush1.msra.mxu0 0.0
        %1583 = vmatprep.subr.mxu0 0.0
        %1584 = vmatpush1.msra.mxu0 0.0
        %1585 = vmatprep.subr.mxu0 0.0
        %1586 = vmatpush1.msra.mxu0 0.0
        %1587 = vmatprep.subr.mxu0 0.0
        %1588 = vmatpush1.msra.mxu0 0.0
        %1589 = vmatprep.mubr.f32.mxu0 0.0
        %1590 = vmatmul.mubr.f32.gmra.mrb[0].mxu0 %v935
        %v1591 = vpop.f32.mrb[0].mxu0
        %v1592 = vadd.f32 0.0, %v1591
        %v1593 = vpop.f32.mrb[0].mxu0
        %1594 = vdwg.mxu0
        %v1595 = vmul.f32 %v1157, %v1592
        %v1597 = vsel %vm407, %v1595, 0
        %1599 = vmatprep.subr.mxu0 0.0
        %1600 = vmatpush1.msra.mxu0 %v401
        %1601 = vmatprep.subr.mxu0 0.0
        %1602 = vmatpush1.msra.mxu0 %v402
        %1603 = vmatprep.subr.mxu0 0.0
        %1604 = vmatpush1.msra.mxu0 %v403
        %1605 = vmatprep.subr.mxu0 0.0
        %1606 = vmatpush1.msra.mxu0 %v404
        %1607 = vmatprep.subr.mxu0 0.0
        %1608 = vmatpush1.msra.mxu0 0.0
        %1609 = vmatprep.subr.mxu0 0.0
        %1610 = vmatpush1.msra.mxu0 0.0
        %1611 = vmatprep.subr.mxu0 0.0
        %1612 = vmatpush1.msra.mxu0 0.0
        %1613 = vmatprep.subr.mxu0 0.0
        %1614 = vmatpush1.msra.mxu0 0.0
        %1615 = vmatprep.subr.mxu0 0.0
        %1616 = vmatpush1.msra.mxu0 0.0
        %1617 = vmatprep.subr.mxu0 0.0
        %1618 = vmatpush1.msra.mxu0 0.0
        %1619 = vmatprep.subr.mxu0 0.0
        %1620 = vmatpush1.msra.mxu0 0.0
        %1621 = vmatprep.subr.mxu0 0.0
        %1622 = vmatpush1.msra.mxu0 0.0
        %1623 = vmatprep.subr.mxu0 0.0
        %1624 = vmatpush1.msra.mxu0 0.0
        %1625 = vmatprep.subr.mxu0 0.0
        %1626 = vmatpush1.msra.mxu0 0.0
        %1627 = vmatprep.subr.mxu0 0.0
        %1628 = vmatpush1.msra.mxu0 0.0
        %1629 = vmatprep.subr.mxu0 0.0
        %1630 = vmatpush1.msra.mxu0 0.0
        %1631 = vmatprep.subr.mxu0 0.0
        %1632 = vmatpush1.msra.mxu0 0.0
        %1633 = vmatprep.subr.mxu0 0.0
        %1634 = vmatpush1.msra.mxu0 0.0
        %1635 = vmatprep.subr.mxu0 0.0
        %1636 = vmatpush1.msra.mxu0 0.0
        %1637 = vmatprep.subr.mxu0 0.0
        %1638 = vmatpush1.msra.mxu0 0.0
        %1639 = vmatprep.subr.mxu0 0.0
        %1640 = vmatpush1.msra.mxu0 0.0
        %1641 = vmatprep.subr.mxu0 0.0
        %1642 = vmatpush1.msra.mxu0 0.0
        %1643 = vmatprep.subr.mxu0 0.0
        %1644 = vmatpush1.msra.mxu0 0.0
        %1645 = vmatprep.subr.mxu0 0.0
        %1646 = vmatpush1.msra.mxu0 0.0
        %1647 = vmatprep.subr.mxu0 0.0
        %1648 = vmatpush1.msra.mxu0 0.0
        %1649 = vmatprep.subr.mxu0 0.0
        %1650 = vmatpush1.msra.mxu0 0.0
        %1651 = vmatprep.subr.mxu0 0.0
        %1652 = vmatpush1.msra.mxu0 0.0
        %1653 = vmatprep.subr.mxu0 0.0
        %1654 = vmatpush1.msra.mxu0 0.0
        %1655 = vmatprep.subr.mxu0 0.0
        %1656 = vmatpush1.msra.mxu0 0.0
        %1657 = vmatprep.subr.mxu0 0.0
        %1658 = vmatpush1.msra.mxu0 0.0
        %1659 = vmatprep.subr.mxu0 0.0
        %1660 = vmatpush1.msra.mxu0 0.0
        %1661 = vmatprep.subr.mxu0 0.0
        %1662 = vmatpush1.msra.mxu0 0.0
        %1663 = vmatprep.mubr.f32.mxu0 0.0
        %1664 = vmatmul.mubr.f32.gmra.mrb[0].mxu0 %v1597
        %v1665 = vpop.f32.mrb[0].mxu0
        %v1666 = vadd.f32 0.0, %v1665
        %v1667 = vpop.f32.mrb[0].mxu0
        %1668 = vdwg.mxu0
        %v1669 = vmax.f32 %v1666, 1e-20
        %v1670 = vrcp.pop %v1669
        %v1671 = vmul.f32 1.0, %v1670
        %v1673 = vsel %vm484, %v1671, 0
        %1675 = vmatprep.subr.mxu0 0.0
        %1676 = vmatpush1.msra.mxu0 %v490
        %1677 = vmatprep.subr.mxu0 0.0
        %1678 = vmatpush1.msra.mxu0 0.0
        %1679 = vmatprep.subr.mxu0 0.0
        %1680 = vmatpush1.msra.mxu0 0.0
        %1681 = vmatprep.subr.mxu0 0.0
        %1682 = vmatpush1.msra.mxu0 0.0
        %1683 = vmatprep.subr.mxu0 0.0
        %1684 = vmatpush1.msra.mxu0 0.0
        %1685 = vmatprep.subr.mxu0 0.0
        %1686 = vmatpush1.msra.mxu0 0.0
        %1687 = vmatprep.subr.mxu0 0.0
        %1688 = vmatpush1.msra.mxu0 0.0
        %1689 = vmatprep.subr.mxu0 0.0
        %1690 = vmatpush1.msra.mxu0 0.0
        %1691 = vmatprep.subr.mxu0 0.0
        %1692 = vmatpush1.msra.mxu0 0.0
        %1693 = vmatprep.subr.mxu0 0.0
        %1694 = vmatpush1.msra.mxu0 0.0
        %1695 = vmatprep.subr.mxu0 0.0
        %1696 = vmatpush1.msra.mxu0 0.0
        %1697 = vmatprep.subr.mxu0 0.0
        %1698 = vmatpush1.msra.mxu0 0.0
        %1699 = vmatprep.subr.mxu0 0.0
        %1700 = vmatpush1.msra.mxu0 0.0
        %1701 = vmatprep.subr.mxu0 0.0
        %1702 = vmatpush1.msra.mxu0 0.0
        %1703 = vmatprep.subr.mxu0 0.0
        %1704 = vmatpush1.msra.mxu0 0.0
        %1705 = vmatprep.subr.mxu0 0.0
        %1706 = vmatpush1.msra.mxu0 0.0
        %1707 = vmatprep.subr.mxu0 0.0
        %1708 = vmatpush1.msra.mxu0 0.0
        %1709 = vmatprep.subr.mxu0 0.0
        %1710 = vmatpush1.msra.mxu0 0.0
        %1711 = vmatprep.subr.mxu0 0.0
        %1712 = vmatpush1.msra.mxu0 0.0
        %1713 = vmatprep.subr.mxu0 0.0
        %1714 = vmatpush1.msra.mxu0 0.0
        %1715 = vmatprep.subr.mxu0 0.0
        %1716 = vmatpush1.msra.mxu0 0.0
        %1717 = vmatprep.subr.mxu0 0.0
        %1718 = vmatpush1.msra.mxu0 0.0
        %1719 = vmatprep.subr.mxu0 0.0
        %1720 = vmatpush1.msra.mxu0 0.0
        %1721 = vmatprep.subr.mxu0 0.0
        %1722 = vmatpush1.msra.mxu0 0.0
        %1723 = vmatprep.subr.mxu0 0.0
        %1724 = vmatpush1.msra.mxu0 0.0
        %1725 = vmatprep.subr.mxu0 0.0
        %1726 = vmatpush1.msra.mxu0 0.0
        %1727 = vmatprep.subr.mxu0 0.0
        %1728 = vmatpush1.msra.mxu0 0.0
        %1729 = vmatprep.subr.mxu0 0.0
        %1730 = vmatpush1.msra.mxu0 0.0
        %1731 = vmatprep.subr.mxu0 0.0
        %1732 = vmatpush1.msra.mxu0 0.0
        %1733 = vmatprep.subr.mxu0 0.0
        %1734 = vmatpush1.msra.mxu0 0.0
        %1735 = vmatprep.subr.mxu0 0.0
        %1736 = vmatpush1.msra.mxu0 0.0
        %1737 = vmatprep.subr.mxu0 0.0
        %1738 = vmatpush1.msra.mxu0 0.0
        %1739 = vmatprep.mubr.f32.mxu0 0.0
        %1740 = vmatmul.mubr.f32.gmra.mrb[0].mxu0 %v1673
        %v1741 = vpop.f32.mrb[0].mxu0
        %v1742 = vadd.f32 0.0, %v1741
        %v1743 = vpop.f32.mrb[0].mxu0
        %1744 = vdwg.mxu0
        %v1745 = vmul.f32 %v1595, %v1742
        %v1747 = vsel %vm407, %v1745, 0
        %1749 = vmatprep.subr.mxu0 0.0
        %1750 = vmatpush1.msra.mxu0 %v393
        %1751 = vmatprep.subr.mxu0 0.0
        %1752 = vmatpush1.msra.mxu0 %v394
        %1753 = vmatprep.subr.mxu0 0.0
        %1754 = vmatpush1.msra.mxu0 %v395
        %1755 = vmatprep.subr.mxu0 0.0
        %1756 = vmatpush1.msra.mxu0 %v396
        %1757 = vmatprep.subr.mxu0 0.0
        %1758 = vmatpush1.msra.mxu0 0.0
        %1759 = vmatprep.subr.mxu0 0.0
        %1760 = vmatpush1.msra.mxu0 0.0
        %1761 = vmatprep.subr.mxu0 0.0
        %1762 = vmatpush1.msra.mxu0 0.0
        %1763 = vmatprep.subr.mxu0 0.0
        %1764 = vmatpush1.msra.mxu0 0.0
        %1765 = vmatprep.subr.mxu0 0.0
        %1766 = vmatpush1.msra.mxu0 0.0
        %1767 = vmatprep.subr.mxu0 0.0
        %1768 = vmatpush1.msra.mxu0 0.0
        %1769 = vmatprep.subr.mxu0 0.0
        %1770 = vmatpush1.msra.mxu0 0.0
        %1771 = vmatprep.subr.mxu0 0.0
        %1772 = vmatpush1.msra.mxu0 0.0
        %1773 = vmatprep.subr.mxu0 0.0
        %1774 = vmatpush1.msra.mxu0 0.0
        %1775 = vmatprep.subr.mxu0 0.0
        %1776 = vmatpush1.msra.mxu0 0.0
        %1777 = vmatprep.subr.mxu0 0.0
        %1778 = vmatpush1.msra.mxu0 0.0
        %1779 = vmatprep.subr.mxu0 0.0
        %1780 = vmatpush1.msra.mxu0 0.0
        %1781 = vmatprep.subr.mxu0 0.0
        %1782 = vmatpush1.msra.mxu0 0.0
        %1783 = vmatprep.subr.mxu0 0.0
        %1784 = vmatpush1.msra.mxu0 0.0
        %1785 = vmatprep.subr.mxu0 0.0
        %1786 = vmatpush1.msra.mxu0 0.0
        %1787 = vmatprep.subr.mxu0 0.0
        %1788 = vmatpush1.msra.mxu0 0.0
        %1789 = vmatprep.subr.mxu0 0.0
        %1790 = vmatpush1.msra.mxu0 0.0
        %1791 = vmatprep.subr.mxu0 0.0
        %1792 = vmatpush1.msra.mxu0 0.0
        %1793 = vmatprep.subr.mxu0 0.0
        %1794 = vmatpush1.msra.mxu0 0.0
        %1795 = vmatprep.subr.mxu0 0.0
        %1796 = vmatpush1.msra.mxu0 0.0
        %1797 = vmatprep.subr.mxu0 0.0
        %1798 = vmatpush1.msra.mxu0 0.0
        %1799 = vmatprep.subr.mxu0 0.0
        %1800 = vmatpush1.msra.mxu0 0.0
        %1801 = vmatprep.subr.mxu0 0.0
        %1802 = vmatpush1.msra.mxu0 0.0
        %1803 = vmatprep.subr.mxu0 0.0
        %1804 = vmatpush1.msra.mxu0 0.0
        %1805 = vmatprep.subr.mxu0 0.0
        %1806 = vmatpush1.msra.mxu0 0.0
        %1807 = vmatprep.subr.mxu0 0.0
        %1808 = vmatpush1.msra.mxu0 0.0
        %1809 = vmatprep.subr.mxu0 0.0
        %1810 = vmatpush1.msra.mxu0 0.0
        %1811 = vmatprep.subr.mxu0 0.0
        %1812 = vmatpush1.msra.mxu0 0.0
        %1813 = vmatprep.mubr.f32.mxu0 0.0
        %1814 = vmatmul.mubr.f32.gmra.mrb[0].mxu0 %v1747
        %v1815 = vpop.f32.mrb[0].mxu0
        %v1816 = vadd.f32 0.0, %v1815
        %v1817 = vpop.f32.mrb[0].mxu0
        %1818 = vdwg.mxu0
        %1819 = vmatprep.subr.mxu0 0.0
        %1820 = vmatpush1.msra.mxu0 %v1816
        %1821 = vmatprep.subr.mxu0 0.0
        %1822 = vmatpush1.msra.mxu0 0.0
        %1823 = vmatprep.subr.mxu0 0.0
        %1824 = vmatpush1.msra.mxu0 0.0
        %1825 = vmatprep.subr.mxu0 0.0
        %1826 = vmatpush1.msra.mxu0 0.0
        %1827 = vmatprep.subr.mxu0 0.0
        %1828 = vmatpush1.msra.mxu0 0.0
        %1829 = vmatprep.subr.mxu0 0.0
        %1830 = vmatpush1.msra.mxu0 0.0
        %1831 = vmatprep.subr.mxu0 0.0
        %1832 = vmatpush1.msra.mxu0 0.0
        %1833 = vmatprep.subr.mxu0 0.0
        %1834 = vmatpush1.msra.mxu0 0.0
        %1835 = vmatprep.subr.mxu0 0.0
        %1836 = vmatpush1.msra.mxu0 0.0
        %1837 = vmatprep.subr.mxu0 0.0
        %1838 = vmatpush1.msra.mxu0 0.0
        %1839 = vmatprep.subr.mxu0 0.0
        %1840 = vmatpush1.msra.mxu0 0.0
        %1841 = vmatprep.subr.mxu0 0.0
        %1842 = vmatpush1.msra.mxu0 0.0
        %1843 = vmatprep.subr.mxu0 0.0
        %1844 = vmatpush1.msra.mxu0 0.0
        %1845 = vmatprep.subr.mxu0 0.0
        %1846 = vmatpush1.msra.mxu0 0.0
        %1847 = vmatprep.subr.mxu0 0.0
        %1848 = vmatpush1.msra.mxu0 0.0
        %1849 = vmatprep.subr.mxu0 0.0
        %1850 = vmatpush1.msra.mxu0 0.0
        %1851 = vmatprep.subr.mxu0 0.0
        %1852 = vmatpush1.msra.mxu0 0.0
        %1853 = vmatprep.subr.mxu0 0.0
        %1854 = vmatpush1.msra.mxu0 0.0
        %1855 = vmatprep.subr.mxu0 0.0
        %1856 = vmatpush1.msra.mxu0 0.0
        %1857 = vmatprep.subr.mxu0 0.0
        %1858 = vmatpush1.msra.mxu0 0.0
        %1859 = vmatprep.subr.mxu0 0.0
        %1860 = vmatpush1.msra.mxu0 0.0
        %1861 = vmatprep.subr.mxu0 0.0
        %1862 = vmatpush1.msra.mxu0 0.0
        %1863 = vmatprep.subr.mxu0 0.0
        %1864 = vmatpush1.msra.mxu0 0.0
        %1865 = vmatprep.subr.mxu0 0.0
        %1866 = vmatpush1.msra.mxu0 0.0
        %1867 = vmatprep.subr.mxu0 0.0
        %1868 = vmatpush1.msra.mxu0 0.0
        %1869 = vmatprep.subr.mxu0 0.0
        %1870 = vmatpush1.msra.mxu0 0.0
        %1871 = vmatprep.subr.mxu0 0.0
        %1872 = vmatpush1.msra.mxu0 0.0
        %1873 = vmatprep.subr.mxu0 0.0
        %1874 = vmatpush1.msra.mxu0 0.0
        %1875 = vmatprep.subr.mxu0 0.0
        %1876 = vmatpush1.msra.mxu0 0.0
        %1877 = vmatprep.subr.mxu0 0.0
        %1878 = vmatpush1.msra.mxu0 0.0
        %1879 = vmatprep.subr.mxu0 0.0
        %1880 = vmatpush1.msra.mxu0 0.0
        %1881 = vmatprep.subr.mxu0 0.0
        %1882 = vmatpush1.msra.mxu0 0.0
        %1883 = vmatprep.mubr.f32.mxu0 0.0
        %1884 = vmatmul.mubr.f32.gmra.mrb[0].mxu0 %v638
        %v1885 = vpop.f32.mrb[0].mxu0
        %v1886 = vadd.f32 0.0, %v1885
        %v1887 = vpop.f32.mrb[0].mxu0
        %1888 = vdwg.mxu0
        %v1889 = vmax.f32 %v1886, 0.0001
        %v1891 = vsel %vm407, %v1889, 0
        %1893 = vmatprep.subr.mxu0 0.0
        %1894 = vmatpush1.msra.mxu0 %v401
        %1895 = vmatprep.subr.mxu0 0.0
        %1896 = vmatpush1.msra.mxu0 %v402
        %1897 = vmatprep.subr.mxu0 0.0
        %1898 = vmatpush1.msra.mxu0 %v403
        %1899 = vmatprep.subr.mxu0 0.0
        %1900 = vmatpush1.msra.mxu0 %v404
        %1901 = vmatprep.subr.mxu0 0.0
        %1902 = vmatpush1.msra.mxu0 0.0
        %1903 = vmatprep.subr.mxu0 0.0
        %1904 = vmatpush1.msra.mxu0 0.0
        %1905 = vmatprep.subr.mxu0 0.0
        %1906 = vmatpush1.msra.mxu0 0.0
        %1907 = vmatprep.subr.mxu0 0.0
        %1908 = vmatpush1.msra.mxu0 0.0
        %1909 = vmatprep.subr.mxu0 0.0
        %1910 = vmatpush1.msra.mxu0 0.0
        %1911 = vmatprep.subr.mxu0 0.0
        %1912 = vmatpush1.msra.mxu0 0.0
        %1913 = vmatprep.subr.mxu0 0.0
        %1914 = vmatpush1.msra.mxu0 0.0
        %1915 = vmatprep.subr.mxu0 0.0
        %1916 = vmatpush1.msra.mxu0 0.0
        %1917 = vmatprep.subr.mxu0 0.0
        %1918 = vmatpush1.msra.mxu0 0.0
        %1919 = vmatprep.subr.mxu0 0.0
        %1920 = vmatpush1.msra.mxu0 0.0
        %1921 = vmatprep.subr.mxu0 0.0
        %1922 = vmatpush1.msra.mxu0 0.0
        %1923 = vmatprep.subr.mxu0 0.0
        %1924 = vmatpush1.msra.mxu0 0.0
        %1925 = vmatprep.subr.mxu0 0.0
        %1926 = vmatpush1.msra.mxu0 0.0
        %1927 = vmatprep.subr.mxu0 0.0
        %1928 = vmatpush1.msra.mxu0 0.0
        %1929 = vmatprep.subr.mxu0 0.0
        %1930 = vmatpush1.msra.mxu0 0.0
        %1931 = vmatprep.subr.mxu0 0.0
        %1932 = vmatpush1.msra.mxu0 0.0
        %1933 = vmatprep.subr.mxu0 0.0
        %1934 = vmatpush1.msra.mxu0 0.0
        %1935 = vmatprep.subr.mxu0 0.0
        %1936 = vmatpush1.msra.mxu0 0.0
        %1937 = vmatprep.subr.mxu0 0.0
        %1938 = vmatpush1.msra.mxu0 0.0
        %1939 = vmatprep.subr.mxu0 0.0
        %1940 = vmatpush1.msra.mxu0 0.0
        %1941 = vmatprep.subr.mxu0 0.0
        %1942 = vmatpush1.msra.mxu0 0.0
        %1943 = vmatprep.subr.mxu0 0.0
        %1944 = vmatpush1.msra.mxu0 0.0
        %1945 = vmatprep.subr.mxu0 0.0
        %1946 = vmatpush1.msra.mxu0 0.0
        %1947 = vmatprep.subr.mxu0 0.0
        %1948 = vmatpush1.msra.mxu0 0.0
        %1949 = vmatprep.subr.mxu0 0.0
        %1950 = vmatpush1.msra.mxu0 0.0
        %1951 = vmatprep.subr.mxu0 0.0
        %1952 = vmatpush1.msra.mxu0 0.0
        %1953 = vmatprep.subr.mxu0 0.0
        %1954 = vmatpush1.msra.mxu0 0.0
        %1955 = vmatprep.subr.mxu0 0.0
        %1956 = vmatpush1.msra.mxu0 0.0
        %1957 = vmatprep.mubr.f32.mxu0 0.0
        %1958 = vmatmul.mubr.f32.gmra.mrb[0].mxu0 %v1891
        %v1959 = vpop.f32.mrb[0].mxu0
        %v1960 = vadd.f32 0.0, %v1959
        %v1961 = vpop.f32.mrb[0].mxu0
        %1962 = vdwg.mxu0
        %v1964 = vsel %vm484, %v1960, 0
        %1966 = vmatprep.subr.mxu0 0.0
        %1967 = vmatpush1.msra.mxu0 %v490
        %1968 = vmatprep.subr.mxu0 0.0
        %1969 = vmatpush1.msra.mxu0 0.0
        %1970 = vmatprep.subr.mxu0 0.0
        %1971 = vmatpush1.msra.mxu0 0.0
        %1972 = vmatprep.subr.mxu0 0.0
        %1973 = vmatpush1.msra.mxu0 0.0
        %1974 = vmatprep.subr.mxu0 0.0
        %1975 = vmatpush1.msra.mxu0 0.0
        %1976 = vmatprep.subr.mxu0 0.0
        %1977 = vmatpush1.msra.mxu0 0.0
        %1978 = vmatprep.subr.mxu0 0.0
        %1979 = vmatpush1.msra.mxu0 0.0
        %1980 = vmatprep.subr.mxu0 0.0
        %1981 = vmatpush1.msra.mxu0 0.0
        %1982 = vmatprep.subr.mxu0 0.0
        %1983 = vmatpush1.msra.mxu0 0.0
        %1984 = vmatprep.subr.mxu0 0.0
        %1985 = vmatpush1.msra.mxu0 0.0
        %1986 = vmatprep.subr.mxu0 0.0
        %1987 = vmatpush1.msra.mxu0 0.0
        %1988 = vmatprep.subr.mxu0 0.0
        %1989 = vmatpush1.msra.mxu0 0.0
        %1990 = vmatprep.subr.mxu0 0.0
        %1991 = vmatpush1.msra.mxu0 0.0
        %1992 = vmatprep.subr.mxu0 0.0
        %1993 = vmatpush1.msra.mxu0 0.0
        %1994 = vmatprep.subr.mxu0 0.0
        %1995 = vmatpush1.msra.mxu0 0.0
        %1996 = vmatprep.subr.mxu0 0.0
        %1997 = vmatpush1.msra.mxu0 0.0
        %1998 = vmatprep.subr.mxu0 0.0
        %1999 = vmatpush1.msra.mxu0 0.0
        %2000 = vmatprep.subr.mxu0 0.0
        %2001 = vmatpush1.msra.mxu0 0.0
        %2002 = vmatprep.subr.mxu0 0.0
        %2003 = vmatpush1.msra.mxu0 0.0
        %2004 = vmatprep.subr.mxu0 0.0
        %2005 = vmatpush1.msra.mxu0 0.0
        %2006 = vmatprep.subr.mxu0 0.0
        %2007 = vmatpush1.msra.mxu0 0.0
        %2008 = vmatprep.subr.mxu0 0.0
        %2009 = vmatpush1.msra.mxu0 0.0
        %2010 = vmatprep.subr.mxu0 0.0
        %2011 = vmatpush1.msra.mxu0 0.0
        %2012 = vmatprep.subr.mxu0 0.0
        %2013 = vmatpush1.msra.mxu0 0.0
        %2014 = vmatprep.subr.mxu0 0.0
        %2015 = vmatpush1.msra.mxu0 0.0
        %2016 = vmatprep.subr.mxu0 0.0
        %2017 = vmatpush1.msra.mxu0 0.0
        %2018 = vmatprep.subr.mxu0 0.0
        %2019 = vmatpush1.msra.mxu0 0.0
        %2020 = vmatprep.subr.mxu0 0.0
        %2021 = vmatpush1.msra.mxu0 0.0
        %2022 = vmatprep.subr.mxu0 0.0
        %2023 = vmatpush1.msra.mxu0 0.0
        %2024 = vmatprep.subr.mxu0 0.0
        %2025 = vmatpush1.msra.mxu0 0.0
        %2026 = vmatprep.subr.mxu0 0.0
        %2027 = vmatpush1.msra.mxu0 0.0
        %2028 = vmatprep.subr.mxu0 0.0
        %2029 = vmatpush1.msra.mxu0 0.0
        %2030 = vmatprep.mubr.f32.mxu0 0.0
        %2031 = vmatmul.mubr.f32.gmra.mrb[0].mxu0 %v1964
        %v2032 = vpop.f32.mrb[0].mxu0
        %v2033 = vadd.f32 0.0, %v2032
        %v2034 = vpop.f32.mrb[0].mxu0
        %2035 = vdwg.mxu0
        %v2036 = vmul.f32 %v562, %v2033
        %v2037 = vrcp.pop %v1889
        %v2038 = vmul.f32 1.0, %v2037
        %v2039 = vmul.f32 %v2036, %v2038
        %v2041 = vsel %vm407, %v2039, 0
        %2043 = vmatprep.subr.mxu0 0.0
        %2044 = vmatpush1.msra.mxu0 %v397
        %2045 = vmatprep.subr.mxu0 0.0
        %2046 = vmatpush1.msra.mxu0 %v398
        %2047 = vmatprep.subr.mxu0 0.0
        %2048 = vmatpush1.msra.mxu0 %v399
        %2049 = vmatprep.subr.mxu0 0.0
        %2050 = vmatpush1.msra.mxu0 %v400
        %2051 = vmatprep.subr.mxu0 0.0
        %2052 = vmatpush1.msra.mxu0 0.0
        %2053 = vmatprep.subr.mxu0 0.0
        %2054 = vmatpush1.msra.mxu0 0.0
        %2055 = vmatprep.subr.mxu0 0.0
        %2056 = vmatpush1.msra.mxu0 0.0
        %2057 = vmatprep.subr.mxu0 0.0
        %2058 = vmatpush1.msra.mxu0 0.0
        %2059 = vmatprep.subr.mxu0 0.0
        %2060 = vmatpush1.msra.mxu0 0.0
        %2061 = vmatprep.subr.mxu0 0.0
        %2062 = vmatpush1.msra.mxu0 0.0
        %2063 = vmatprep.subr.mxu0 0.0
        %2064 = vmatpush1.msra.mxu0 0.0
        %2065 = vmatprep.subr.mxu0 0.0
        %2066 = vmatpush1.msra.mxu0 0.0
        %2067 = vmatprep.subr.mxu0 0.0
        %2068 = vmatpush1.msra.mxu0 0.0
        %2069 = vmatprep.subr.mxu0 0.0
        %2070 = vmatpush1.msra.mxu0 0.0
        %2071 = vmatprep.subr.mxu0 0.0
        %2072 = vmatpush1.msra.mxu0 0.0
        %2073 = vmatprep.subr.mxu0 0.0
        %2074 = vmatpush1.msra.mxu0 0.0
        %2075 = vmatprep.subr.mxu0 0.0
        %2076 = vmatpush1.msra.mxu0 0.0
        %2077 = vmatprep.subr.mxu0 0.0
        %2078 = vmatpush1.msra.mxu0 0.0
        %2079 = vmatprep.subr.mxu0 0.0
        %2080 = vmatpush1.msra.mxu0 0.0
        %2081 = vmatprep.subr.mxu0 0.0
        %2082 = vmatpush1.msra.mxu0 0.0
        %2083 = vmatprep.subr.mxu0 0.0
        %2084 = vmatpush1.msra.mxu0 0.0
        %2085 = vmatprep.subr.mxu0 0.0
        %2086 = vmatpush1.msra.mxu0 0.0
        %2087 = vmatprep.subr.mxu0 0.0
        %2088 = vmatpush1.msra.mxu0 0.0
        %2089 = vmatprep.subr.mxu0 0.0
        %2090 = vmatpush1.msra.mxu0 0.0
        %2091 = vmatprep.subr.mxu0 0.0
        %2092 = vmatpush1.msra.mxu0 0.0
        %2093 = vmatprep.subr.mxu0 0.0
        %2094 = vmatpush1.msra.mxu0 0.0
        %2095 = vmatprep.subr.mxu0 0.0
        %2096 = vmatpush1.msra.mxu0 0.0
        %2097 = vmatprep.subr.mxu0 0.0
        %2098 = vmatpush1.msra.mxu0 0.0
        %2099 = vmatprep.subr.mxu0 0.0
        %2100 = vmatpush1.msra.mxu0 0.0
        %2101 = vmatprep.subr.mxu0 0.0
        %2102 = vmatpush1.msra.mxu0 0.0
        %2103 = vmatprep.subr.mxu0 0.0
        %2104 = vmatpush1.msra.mxu0 0.0
        %2105 = vmatprep.subr.mxu0 0.0
        %2106 = vmatpush1.msra.mxu0 0.0
        %2107 = vmatprep.mubr.f32.mxu0 0.0
        %2108 = vmatmul.mubr.f32.gmra.mrb[0].mxu0 %v2041
        %v2109 = vpop.f32.mrb[0].mxu0
        %v2110 = vadd.f32 0.0, %v2109
        %v2111 = vpop.f32.mrb[0].mxu0
        %2112 = vdwg.mxu0
        %2113 = vmatprep.subr.mxu0 0.0
        %2114 = vmatpush1.msra.mxu0 %v2110
        %2115 = vmatprep.subr.mxu0 0.0
        %2116 = vmatpush1.msra.mxu0 0.0
        %2117 = vmatprep.subr.mxu0 0.0
        %2118 = vmatpush1.msra.mxu0 0.0
        %2119 = vmatprep.subr.mxu0 0.0
        %2120 = vmatpush1.msra.mxu0 0.0
        %2121 = vmatprep.subr.mxu0 0.0
        %2122 = vmatpush1.msra.mxu0 0.0
        %2123 = vmatprep.subr.mxu0 0.0
        %2124 = vmatpush1.msra.mxu0 0.0
        %2125 = vmatprep.subr.mxu0 0.0
        %2126 = vmatpush1.msra.mxu0 0.0
        %2127 = vmatprep.subr.mxu0 0.0
        %2128 = vmatpush1.msra.mxu0 0.0
        %2129 = vmatprep.subr.mxu0 0.0
        %2130 = vmatpush1.msra.mxu0 0.0
        %2131 = vmatprep.subr.mxu0 0.0
        %2132 = vmatpush1.msra.mxu0 0.0
        %2133 = vmatprep.subr.mxu0 0.0
        %2134 = vmatpush1.msra.mxu0 0.0
        %2135 = vmatprep.subr.mxu0 0.0
        %2136 = vmatpush1.msra.mxu0 0.0
        %2137 = vmatprep.subr.mxu0 0.0
        %2138 = vmatpush1.msra.mxu0 0.0
        %2139 = vmatprep.subr.mxu0 0.0
        %2140 = vmatpush1.msra.mxu0 0.0
        %2141 = vmatprep.subr.mxu0 0.0
        %2142 = vmatpush1.msra.mxu0 0.0
        %2143 = vmatprep.subr.mxu0 0.0
        %2144 = vmatpush1.msra.mxu0 0.0
        %2145 = vmatprep.subr.mxu0 0.0
        %2146 = vmatpush1.msra.mxu0 0.0
        %2147 = vmatprep.subr.mxu0 0.0
        %2148 = vmatpush1.msra.mxu0 0.0
        %2149 = vmatprep.subr.mxu0 0.0
        %2150 = vmatpush1.msra.mxu0 0.0
        %2151 = vmatprep.subr.mxu0 0.0
        %2152 = vmatpush1.msra.mxu0 0.0
        %2153 = vmatprep.subr.mxu0 0.0
        %2154 = vmatpush1.msra.mxu0 0.0
        %2155 = vmatprep.subr.mxu0 0.0
        %2156 = vmatpush1.msra.mxu0 0.0
        %2157 = vmatprep.subr.mxu0 0.0
        %2158 = vmatpush1.msra.mxu0 0.0
        %2159 = vmatprep.subr.mxu0 0.0
        %2160 = vmatpush1.msra.mxu0 0.0
        %2161 = vmatprep.subr.mxu0 0.0
        %2162 = vmatpush1.msra.mxu0 0.0
        %2163 = vmatprep.subr.mxu0 0.0
        %2164 = vmatpush1.msra.mxu0 0.0
        %2165 = vmatprep.subr.mxu0 0.0
        %2166 = vmatpush1.msra.mxu0 0.0
        %2167 = vmatprep.subr.mxu0 0.0
        %2168 = vmatpush1.msra.mxu0 0.0
        %2169 = vmatprep.subr.mxu0 0.0
        %2170 = vmatpush1.msra.mxu0 0.0
        %2171 = vmatprep.subr.mxu0 0.0
        %2172 = vmatpush1.msra.mxu0 0.0
        %2173 = vmatprep.subr.mxu0 0.0
        %2174 = vmatpush1.msra.mxu0 0.0
        %2175 = vmatprep.subr.mxu0 0.0
        %2176 = vmatpush1.msra.mxu0 0.0
        %2177 = vmatprep.mubr.f32.mxu0 0.0
        %2178 = vmatmul.mubr.f32.gmra.mrb[0].mxu0 %v935
        %v2179 = vpop.f32.mrb[0].mxu0
        %v2180 = vadd.f32 0.0, %v2179
        %v2181 = vpop.f32.mrb[0].mxu0
        %2182 = vdwg.mxu0
        %v2183 = vmul.f32 %v1745, %v2180
        %v2185 = vsel %vm407, %v2183, 0
        %2187 = vmatprep.subr.mxu0 0.0
        %2188 = vmatpush1.msra.mxu0 %v401
        %2189 = vmatprep.subr.mxu0 0.0
        %2190 = vmatpush1.msra.mxu0 %v402
        %2191 = vmatprep.subr.mxu0 0.0
        %2192 = vmatpush1.msra.mxu0 %v403
        %2193 = vmatprep.subr.mxu0 0.0
        %2194 = vmatpush1.msra.mxu0 %v404
        %2195 = vmatprep.subr.mxu0 0.0
        %2196 = vmatpush1.msra.mxu0 0.0
        %2197 = vmatprep.subr.mxu0 0.0
        %2198 = vmatpush1.msra.mxu0 0.0
        %2199 = vmatprep.subr.mxu0 0.0
        %2200 = vmatpush1.msra.mxu0 0.0
        %2201 = vmatprep.subr.mxu0 0.0
        %2202 = vmatpush1.msra.mxu0 0.0
        %2203 = vmatprep.subr.mxu0 0.0
        %2204 = vmatpush1.msra.mxu0 0.0
        %2205 = vmatprep.subr.mxu0 0.0
        %2206 = vmatpush1.msra.mxu0 0.0
        %2207 = vmatprep.subr.mxu0 0.0
        %2208 = vmatpush1.msra.mxu0 0.0
        %2209 = vmatprep.subr.mxu0 0.0
        %2210 = vmatpush1.msra.mxu0 0.0
        %2211 = vmatprep.subr.mxu0 0.0
        %2212 = vmatpush1.msra.mxu0 0.0
        %2213 = vmatprep.subr.mxu0 0.0
        %2214 = vmatpush1.msra.mxu0 0.0
        %2215 = vmatprep.subr.mxu0 0.0
        %2216 = vmatpush1.msra.mxu0 0.0
        %2217 = vmatprep.subr.mxu0 0.0
        %2218 = vmatpush1.msra.mxu0 0.0
        %2219 = vmatprep.subr.mxu0 0.0
        %2220 = vmatpush1.msra.mxu0 0.0
        %2221 = vmatprep.subr.mxu0 0.0
        %2222 = vmatpush1.msra.mxu0 0.0
        %2223 = vmatprep.subr.mxu0 0.0
        %2224 = vmatpush1.msra.mxu0 0.0
        %2225 = vmatprep.subr.mxu0 0.0
        %2226 = vmatpush1.msra.mxu0 0.0
        %2227 = vmatprep.subr.mxu0 0.0
        %2228 = vmatpush1.msra.mxu0 0.0
        %2229 = vmatprep.subr.mxu0 0.0
        %2230 = vmatpush1.msra.mxu0 0.0
        %2231 = vmatprep.subr.mxu0 0.0
        %2232 = vmatpush1.msra.mxu0 0.0
        %2233 = vmatprep.subr.mxu0 0.0
        %2234 = vmatpush1.msra.mxu0 0.0
        %2235 = vmatprep.subr.mxu0 0.0
        %2236 = vmatpush1.msra.mxu0 0.0
        %2237 = vmatprep.subr.mxu0 0.0
        %2238 = vmatpush1.msra.mxu0 0.0
        %2239 = vmatprep.subr.mxu0 0.0
        %2240 = vmatpush1.msra.mxu0 0.0
        %2241 = vmatprep.subr.mxu0 0.0
        %2242 = vmatpush1.msra.mxu0 0.0
        %2243 = vmatprep.subr.mxu0 0.0
        %2244 = vmatpush1.msra.mxu0 0.0
        %2245 = vmatprep.subr.mxu0 0.0
        %2246 = vmatpush1.msra.mxu0 0.0
        %2247 = vmatprep.subr.mxu0 0.0
        %2248 = vmatpush1.msra.mxu0 0.0
        %2249 = vmatprep.subr.mxu0 0.0
        %2250 = vmatpush1.msra.mxu0 0.0
        %2251 = vmatprep.mubr.f32.mxu0 0.0
        %2252 = vmatmul.mubr.f32.gmra.mrb[0].mxu0 %v2185
        %v2253 = vpop.f32.mrb[0].mxu0
        %v2254 = vadd.f32 0.0, %v2253
        %v2255 = vpop.f32.mrb[0].mxu0
        %2256 = vdwg.mxu0
        %v2257 = vmax.f32 %v2254, 1e-20
        %v2258 = vrcp.pop %v2257
        %v2259 = vmul.f32 1.0, %v2258
        %v2261 = vsel %vm484, %v2259, 0
        %2263 = vmatprep.subr.mxu0 0.0
        %2264 = vmatpush1.msra.mxu0 %v490
        %2265 = vmatprep.subr.mxu0 0.0
        %2266 = vmatpush1.msra.mxu0 0.0
        %2267 = vmatprep.subr.mxu0 0.0
        %2268 = vmatpush1.msra.mxu0 0.0
        %2269 = vmatprep.subr.mxu0 0.0
        %2270 = vmatpush1.msra.mxu0 0.0
        %2271 = vmatprep.subr.mxu0 0.0
        %2272 = vmatpush1.msra.mxu0 0.0
        %2273 = vmatprep.subr.mxu0 0.0
        %2274 = vmatpush1.msra.mxu0 0.0
        %2275 = vmatprep.subr.mxu0 0.0
        %2276 = vmatpush1.msra.mxu0 0.0
        %2277 = vmatprep.subr.mxu0 0.0
        %2278 = vmatpush1.msra.mxu0 0.0
        %2279 = vmatprep.subr.mxu0 0.0
        %2280 = vmatpush1.msra.mxu0 0.0
        %2281 = vmatprep.subr.mxu0 0.0
        %2282 = vmatpush1.msra.mxu0 0.0
        %2283 = vmatprep.subr.mxu0 0.0
        %2284 = vmatpush1.msra.mxu0 0.0
        %2285 = vmatprep.subr.mxu0 0.0
        %2286 = vmatpush1.msra.mxu0 0.0
        %2287 = vmatprep.subr.mxu0 0.0
        %2288 = vmatpush1.msra.mxu0 0.0
        %2289 = vmatprep.subr.mxu0 0.0
        %2290 = vmatpush1.msra.mxu0 0.0
        %2291 = vmatprep.subr.mxu0 0.0
        %2292 = vmatpush1.msra.mxu0 0.0
        %2293 = vmatprep.subr.mxu0 0.0
        %2294 = vmatpush1.msra.mxu0 0.0
        %2295 = vmatprep.subr.mxu0 0.0
        %2296 = vmatpush1.msra.mxu0 0.0
        %2297 = vmatprep.subr.mxu0 0.0
        %2298 = vmatpush1.msra.mxu0 0.0
        %2299 = vmatprep.subr.mxu0 0.0
        %2300 = vmatpush1.msra.mxu0 0.0
        %2301 = vmatprep.subr.mxu0 0.0
        %2302 = vmatpush1.msra.mxu0 0.0
        %2303 = vmatprep.subr.mxu0 0.0
        %2304 = vmatpush1.msra.mxu0 0.0
        %2305 = vmatprep.subr.mxu0 0.0
        %2306 = vmatpush1.msra.mxu0 0.0
        %2307 = vmatprep.subr.mxu0 0.0
        %2308 = vmatpush1.msra.mxu0 0.0
        %2309 = vmatprep.subr.mxu0 0.0
        %2310 = vmatpush1.msra.mxu0 0.0
        %2311 = vmatprep.subr.mxu0 0.0
        %2312 = vmatpush1.msra.mxu0 0.0
        %2313 = vmatprep.subr.mxu0 0.0
        %2314 = vmatpush1.msra.mxu0 0.0
        %2315 = vmatprep.subr.mxu0 0.0
        %2316 = vmatpush1.msra.mxu0 0.0
        %2317 = vmatprep.subr.mxu0 0.0
        %2318 = vmatpush1.msra.mxu0 0.0
        %2319 = vmatprep.subr.mxu0 0.0
        %2320 = vmatpush1.msra.mxu0 0.0
        %2321 = vmatprep.subr.mxu0 0.0
        %2322 = vmatpush1.msra.mxu0 0.0
        %2323 = vmatprep.subr.mxu0 0.0
        %2324 = vmatpush1.msra.mxu0 0.0
        %2325 = vmatprep.subr.mxu0 0.0
        %2326 = vmatpush1.msra.mxu0 0.0
        %2327 = vmatprep.mubr.f32.mxu0 0.0
        %2328 = vmatmul.mubr.f32.gmra.mrb[0].mxu0 %v2261
        %v2329 = vpop.f32.mrb[0].mxu0
        %v2330 = vadd.f32 0.0, %v2329
        %v2331 = vpop.f32.mrb[0].mxu0
        %2332 = vdwg.mxu0
        %v2333 = vmul.f32 %v2183, %v2330
        %v2334 = vld [vmem:[#allocation8] sm:$0xff]
        %v2335 = vld [vmem:[#allocation8 + $0x8] sm:$0xff]
        %v2336 = vld [vmem:[#allocation8 + $0x10] sm:$0xff]
        %v2337 = vld [vmem:[#allocation8 + $0x18] sm:$0xff]
        %v2338 = vld [vmem:[%s8] sm:$0x1]
        %v2340 = vlaneseq
        %v2341 = vshrl.u32 %v2340, 7
        %v2342 = vsub.s32 0, %v2341
        %v2343 = vrot.slane %v2338, %v2342
        %v2346 = vsel %vm407, %v2333, 0
        %2348 = vmatprep.subr.mxu0 0.0
        %2349 = vmatpush1.msra.mxu0 %v2334
        %2350 = vmatprep.subr.mxu0 0.0
        %2351 = vmatpush1.msra.mxu0 %v2335
        %2352 = vmatprep.subr.mxu0 0.0
        %2353 = vmatpush1.msra.mxu0 %v2336
        %2354 = vmatprep.subr.mxu0 0.0
        %2355 = vmatpush1.msra.mxu0 %v2337
        %2356 = vmatprep.subr.mxu0 0.0
        %2357 = vmatpush1.msra.mxu0 0.0
        %2358 = vmatprep.subr.mxu0 0.0
        %2359 = vmatpush1.msra.mxu0 0.0
        %2360 = vmatprep.subr.mxu0 0.0
        %2361 = vmatpush1.msra.mxu0 0.0
        %2362 = vmatprep.subr.mxu0 0.0
        %2363 = vmatpush1.msra.mxu0 0.0
        %2364 = vmatprep.subr.mxu0 0.0
        %2365 = vmatpush1.msra.mxu0 0.0
        %2366 = vmatprep.subr.mxu0 0.0
        %2367 = vmatpush1.msra.mxu0 0.0
        %2368 = vmatprep.subr.mxu0 0.0
        %2369 = vmatpush1.msra.mxu0 0.0
        %2370 = vmatprep.subr.mxu0 0.0
        %2371 = vmatpush1.msra.mxu0 0.0
        %2372 = vmatprep.subr.mxu0 0.0
        %2373 = vmatpush1.msra.mxu0 0.0
        %2374 = vmatprep.subr.mxu0 0.0
        %2375 = vmatpush1.msra.mxu0 0.0
        %2376 = vmatprep.subr.mxu0 0.0
        %2377 = vmatpush1.msra.mxu0 0.0
        %2378 = vmatprep.subr.mxu0 0.0
        %2379 = vmatpush1.msra.mxu0 0.0
        %2380 = vmatprep.subr.mxu0 0.0
        %2381 = vmatpush1.msra.mxu0 0.0
        %2382 = vmatprep.subr.mxu0 0.0
        %2383 = vmatpush1.msra.mxu0 0.0
        %2384 = vmatprep.subr.mxu0 0.0
        %2385 = vmatpush1.msra.mxu0 0.0
        %2386 = vmatprep.subr.mxu0 0.0
        %2387 = vmatpush1.msra.mxu0 0.0
        %2388 = vmatprep.subr.mxu0 0.0
        %2389 = vmatpush1.msra.mxu0 0.0
        %2390 = vmatprep.subr.mxu0 0.0
        %2391 = vmatpush1.msra.mxu0 0.0
        %2392 = vmatprep.subr.mxu0 0.0
        %2393 = vmatpush1.msra.mxu0 0.0
        %2394 = vmatprep.subr.mxu0 0.0
        %2395 = vmatpush1.msra.mxu0 0.0
        %2396 = vmatprep.subr.mxu0 0.0
        %2397 = vmatpush1.msra.mxu0 0.0
        %2398 = vmatprep.subr.mxu0 0.0
        %2399 = vmatpush1.msra.mxu0 0.0
        %2400 = vmatprep.subr.mxu0 0.0
        %2401 = vmatpush1.msra.mxu0 0.0
        %2402 = vmatprep.subr.mxu0 0.0
        %2403 = vmatpush1.msra.mxu0 0.0
        %2404 = vmatprep.subr.mxu0 0.0
        %2405 = vmatpush1.msra.mxu0 0.0
        %2406 = vmatprep.subr.mxu0 0.0
        %2407 = vmatpush1.msra.mxu0 0.0
        %2408 = vmatprep.subr.mxu0 0.0
        %2409 = vmatpush1.msra.mxu0 0.0
        %2410 = vmatprep.subr.mxu0 0.0
        %2411 = vmatpush1.msra.mxu0 0.0
        %2412 = vmatprep.mubr.f32.mxu0 0.0
        %2413 = vmatmul.mubr.f32.gmra.mrb[0].mxu0 %v2346
        %v2414 = vpop.f32.mrb[0].mxu0
        %v2415 = vadd.f32 %v2343, %v2414
        %v2416 = vpop.f32.mrb[0].mxu0
        %2417 = vdwg.mxu0
        %2418 = vst.msk [vmem:[%s389] sm:$0xff] %vm407, %v2415
        %s2419 = sand.u32 %s230, 1
        %s2420 = scalar_lea.sflag [#allocation4], %s2419
        %s2421 = sand.u32 %s230, 1
        %s2422 = smul.addr %s2421, 8
        %s2423 = scalar_lea.vmem [#allocation10], %s2422
        // Predicated region
        $region73: #{tpu_custom_call.1} parent=55 // pred_check
          %p2424 = pneg %p240
        $region74: #{tpu_custom_call.1} parent=55 // pred_check_branch
          %2426 = sbr.rel (%p2424) target = $region76
        $region75: #{tpu_custom_call.1} parent=55 // pred_region
          %s2428 = ssub.s32 128, 128
          %2429 = vsyncadd %s2420, %s2428
          %s2430 = smul.addr %s28, 128
          %s2431 = scalar_lea.hbm %s9, %s2430
          %s2433 = sshll.u32 %s2423, 4
          %s2434 = int_to_ptr.vmem [resolvable:$true] %s2433
          %2436 = dma.vmem_to_hbm [thread:$0]  %s2434, 128, %s2431, %s2420
        $region76: #{tpu_custom_call.1} parent=55 // pred_fallthru
          _
      $region56: #{tpu_custom_call.1} parent=5 // pred_fallthru
        _
      %p2437 = scmp.le.s32.totalorder 2, %s23
      // Predicated region
      $region77: #{tpu_custom_call.1} parent=5 // pred_check
        %p2438 = pneg %p2437
      $region78: #{tpu_custom_call.1} parent=5 // pred_check_branch
        %2440 = sbr.rel (%p2438) target = $region80
      $region79: #{tpu_custom_call.1} parent=5 // pred_region
        %s2441 = ssub.s32 %s23, 2
        // Predicated region
        $region81: #{tpu_custom_call.1} parent=79 // pred_check
          %p2442 = pneg %p246
        $region82: #{tpu_custom_call.1} parent=79 // pred_check_branch
          %2444 = sbr.rel (%p2442) target = $region84
        $region83: #{tpu_custom_call.1} parent=79 // pred_region
          %s2445 = sand.u32 %s231, 1
          %s2446 = scalar_lea.sflag [#allocation4], %s2445
          %s2447 = sand.u32 %s231, 1
          %s2448 = smul.addr %s2447, 8
          %s2449 = scalar_lea.vmem [#allocation10], %s2448
          %2450 = dma.done %s2446, 128
        $region84: #{tpu_custom_call.1} parent=79 // pred_fallthru
          _
      $region80: #{tpu_custom_call.1} parent=5 // pred_fallthru
        _
    $region6: #{tpu_custom_call.1} parent=1 // loop_footer
      %s27 = sadd.s32 1, %s23
    $region7: #{tpu_custom_call.1} parent=1 // loop_footer_branch
      %22 = sbr.rel target = $region3
    $region8: #{tpu_custom_call.1} parent=1 // loop_exit
      _
    %2451 = vsyncpa [#allocation3], 1
    %s2452 = scalar_lea.sflag [#allocation3], 1
    %2453 = vsyncpa %s2452, 1
    %2454 = vsyncpa [#allocation6], 1
    %2455 = vsyncpa [#allocation9], 1
    %2456 = vsyncpa [#allocation4], 1
    %s2457 = scalar_lea.sflag [#allocation4], 1
    %2458 = vsyncpa %s2457, 1

// kernel: tpu_custom_call.1
$region0: #{tpu_custom_call.1}
  #allocation0 [shape = 'u32[]', space=smem, size = 0x4, offset = 0x4, fixed_abs, tag = 'smem constant byte address 0x4 - core index']
  #allocation1 [shape = 'u32[144,128]{1,0:T(1,128)}', space=vmem, size = 0x12000, scoped, tag = 'internal scratch']
  %s0 = inlined_call_operand.hbm [shape: f32[2,8,32], index: 0, kind: input, shape index: {}]
  %s1 = inlined_call_operand.vmem [shape: f32[8,8], index: 1, kind: input, shape index: {}]
  %s2 = inlined_call_operand.hbm [shape: f32[8,8], index: 2, kind: input, shape index: {}]
  %s3 = inlined_call_operand.vmem [shape: f32[32,32], index: 3, kind: input, shape index: {}]
  %s4 = inlined_call_operand.hbm [shape: f32[32,32], index: 4, kind: input, shape index: {}]
  %s5 = inlined_call_operand.vmem [shape: f32[32,4], index: 5, kind: input, shape index: {}]
  %s6 = inlined_call_operand.vmem [shape: f32[4,32], index: 6, kind: input, shape index: {}]
  %s7 = inlined_call_operand.hbm [shape: f32[32,32], index: 7, kind: input, shape index: {}]
  %s8 = inlined_call_operand.vmem [shape: f32[1,32], index: 8, kind: input, shape index: {}]
  %s9 = inlined_call_operand.hbm [shape: f32[2,8,32], index: 9, kind: output, shape index: {}]
  %s10 = sld [smem:[#allocation0]]
  $region85: #{tpu_custom_call.1} parent=0
    _
  %s12 = ssub.s32 1, %s10
  %s13 = scalar_select 0, %s12, %s10
  $region1: #{tpu_custom_call.1} parent=0
    #allocation2 [shape = 'u8[8192]{0}', space=vmem, size = 0x2000, scoped, tag = 'input window, operand 0']
    #allocation3 [shape = 's32[2]{0}', space=sflag, size = 0x8, scoped, tag = 'scoped memory for tpu_custom_call.1']
    #allocation4 [shape = 's32[2]{0}', space=sflag, size = 0x8, scoped, tag = 'scoped memory for tpu_custom_call.1']
    #allocation5 [shape = 'u8[4096]{0}', space=vmem, size = 0x1000, scoped, tag = 'input window, operand 2, single buffered']
    #allocation6 [shape = 's32[1]{0}', space=sflag, size = 0x4, scoped, tag = 'scoped memory for tpu_custom_call.1']
    #allocation7 [shape = 'u8[16384]{0}', space=vmem, size = 0x4000, scoped, tag = 'input window, operand 4, single buffered']
    #allocation8 [shape = 'u8[16384]{0}', space=vmem, size = 0x4000, scoped, tag = 'input window, operand 7, single buffered']
    #allocation9 [shape = 's32[1]{0}', space=sflag, size = 0x4, scoped, tag = 'scoped memory for tpu_custom_call.1']
    #allocation10 [shape = 'u8[8192]{0}', space=vmem, size = 0x2000, scoped, tag = 'output window, operand 0']
    %14 = vsyncpa [#allocation3], 0
    %s15 = scalar_lea.sflag [#allocation3], 1
    %16 = vsyncpa %s15, 0
    %17 = vsyncpa [#allocation6], 0
    %18 = vsyncpa [#allocation9], 0
    %19 = vsyncpa [#allocation4], 0
    %s20 = scalar_lea.sflag [#allocation4], 1
    %21 = vsyncpa %s20, 0
    loop: start=0, step=1, limit=4
    $region2: #{tpu_custom_call.1} parent=1 // loop_pre_header
      _
    $region3: #{tpu_custom_call.1} parent=1 // loop_header
      %s23 = sphi 0, %s27
      %p24 = scmp.ge.s32.totalorder %s23, 4
      %s33 = sphi 0, %s35
      %s36 = sphi 0, %s33
      %s37 = sphi 0, %s36
      %s53 = sphi 0, %s37
      %s57 = sphi 0, %s57
      %s59 = sphi 0, %s57
      %s60 = sphi 0, %s59
      %s74 = sphi 0, %s60
      %s78 = sphi 0, %s78
      %s80 = sphi 0, %s78
      %s81 = sphi 0, %s80
      %s95 = sphi 0, %s81
      %s99 = sphi 0, %s99
      %s101 = sphi 0, %s99
      %s102 = sphi 0, %s101
      %s116 = sphi 0, %s102
      %s120 = sphi 0, %s120
      %s122 = sphi 0, %s120
      %s123 = sphi 0, %s122
      %s137 = sphi 0, %s123
      %s141 = sphi 0, %s141
      %s143 = sphi 0, %s141
      %s144 = sphi 0, %s143
      %s158 = sphi 0, %s144
      %s162 = sphi 0, %s162
      %s164 = sphi 0, %s162
      %s165 = sphi 0, %s164
      %s179 = sphi 0, %s165
      %s183 = sphi 0, %s183
      %s185 = sphi 0, %s183
      %s186 = sphi 0, %s185
      %s200 = sphi 0, %s186
      %s204 = sphi 0, %s204
      %s206 = sphi 0, %s204
      %s207 = sphi 0, %s206
      %s221 = sphi 0, %s207
      %s227 = sphi 0, %s229
      %s230 = sphi 0, %s227
      %s231 = sphi 0, %s230
      %s247 = sphi 0, %s231
    $region4: #{tpu_custom_call.1} parent=1 // loop_header_branch
      %26 = sbr.rel (%p24) target = $region8
    $region5: #{tpu_custom_call.1} parent=1 // loop_body
      %s28 = ssub.s32 %s23, 1
      %s29 = ssub.s32 %s23, 2
      %s30 = sadd.s32 %s23, 1
      %s31 = ssub.s32 %s23, %s30
      %p32 = scmp.eq.s32.totalorder %s31, 0
      %s34 = sadd.s32 %s33, 1
      %s35 = scalar_select %p32, %s33, %s34
      %p38 = pneg %p32
      %p39 = scmp.eq.s32.totalorder %s23, 1
      %p40 = por %p38, %p39
      %p41 = scmp.ne.s32.totalorder %s33, %s36
      %p42 = scmp.eq.s32.totalorder %s23, 0
      %p43 = por %p41, %p42
      %p44 = scmp.ne.s32.totalorder %s33, %s36
      %p45 = scmp.eq.s32.totalorder %s28, 1
      %p46 = por %p44, %p45
      %p47 = scmp.ne.s32.totalorder %s36, %s37
      %p48 = scmp.eq.s32.totalorder %s28, 0
      %p49 = por %p47, %p48
      %p50 = scmp.ne.s32.totalorder %s36, %s37
      %p51 = scmp.eq.s32.totalorder %s29, 1
      %p52 = por %p50, %p51
      %p54 = scmp.ne.s32.totalorder %s37, %s53
      %p55 = scmp.eq.s32.totalorder %s29, 0
      %p56 = por %p54, %p55
      %s58 = sadd.s32 %s57, 1
      %p61 = scmp.eq.s32.totalorder %s23, 1
      %p62 = scmp.ne.s32.totalorder %s57, %s59
      %p63 = scmp.eq.s32.totalorder %s23, 0
      %p64 = por %p62, %p63
      %p65 = scmp.ne.s32.totalorder %s57, %s59
      %p66 = scmp.eq.s32.totalorder %s28, 1
      %p67 = por %p65, %p66
      %p68 = scmp.ne.s32.totalorder %s59, %s60
      %p69 = scmp.eq.s32.totalorder %s28, 0
      %p70 = por %p68, %p69
      %p71 = scmp.ne.s32.totalorder %s59, %s60
      %p72 = scmp.eq.s32.totalorder %s29, 1
      %p73 = por %p71, %p72
      %p75 = scmp.ne.s32.totalorder %s60, %s74
      %p76 = scmp.eq.s32.totalorder %s29, 0
      %p77 = por %p75, %p76
      %s79 = sadd.s32 %s78, 1
      %p82 = scmp.eq.s32.totalorder %s23, 1
      %p83 = scmp.ne.s32.totalorder %s78, %s80
      %p84 = scmp.eq.s32.totalorder %s23, 0
      %p85 = por %p83, %p84
      %p86 = scmp.ne.s32.totalorder %s78, %s80
      %p87 = scmp.eq.s32.totalorder %s28, 1
      %p88 = por %p86, %p87
      %p89 = scmp.ne.s32.totalorder %s80, %s81
      %p90 = scmp.eq.s32.totalorder %s28, 0
      %p91 = por %p89, %p90
      %p92 = scmp.ne.s32.totalorder %s80, %s81
      %p93 = scmp.eq.s32.totalorder %s29, 1
      %p94 = por %p92, %p93
      %p96 = scmp.ne.s32.totalorder %s81, %s95
      %p97 = scmp.eq.s32.totalorder %s29, 0
      %p98 = por %p96, %p97
      %s100 = sadd.s32 %s99, 1
      %p103 = scmp.eq.s32.totalorder %s23, 1
      %p104 = scmp.ne.s32.totalorder %s99, %s101
      %p105 = scmp.eq.s32.totalorder %s23, 0
      %p106 = por %p104, %p105
      %p107 = scmp.ne.s32.totalorder %s99, %s101
      %p108 = scmp.eq.s32.totalorder %s28, 1
      %p109 = por %p107, %p108
      %p110 = scmp.ne.s32.totalorder %s101, %s102
      %p111 = scmp.eq.s32.totalorder %s28, 0
      %p112 = por %p110, %p111
      %p113 = scmp.ne.s32.totalorder %s101, %s102
      %p114 = scmp.eq.s32.totalorder %s29, 1
      %p115 = por %p113, %p114
      %p117 = scmp.ne.s32.totalorder %s102, %s116
      %p118 = scmp.eq.s32.totalorder %s29, 0
      %p119 = por %p117, %p118
      %s121 = sadd.s32 %s120, 1
      %p124 = scmp.eq.s32.totalorder %s23, 1
      %p125 = scmp.ne.s32.totalorder %s120, %s122
      %p126 = scmp.eq.s32.totalorder %s23, 0
      %p127 = por %p125, %p126
      %p128 = scmp.ne.s32.totalorder %s120, %s122
      %p129 = scmp.eq.s32.totalorder %s28, 1
      %p130 = por %p128, %p129
      %p131 = scmp.ne.s32.totalorder %s122, %s123
      %p132 = scmp.eq.s32.totalorder %s28, 0
      %p133 = por %p131, %p132
      %p134 = scmp.ne.s32.totalorder %s122, %s123
      %p135 = scmp.eq.s32.totalorder %s29, 1
      %p136 = por %p134, %p135
      %p138 = scmp.ne.s32.totalorder %s123, %s137
      %p139 = scmp.eq.s32.totalorder %s29, 0
      %p140 = por %p138, %p139
      %s142 = sadd.s32 %s141, 1
      %p145 = scmp.eq.s32.totalorder %s23, 1
      %p146 = scmp.ne.s32.totalorder %s141, %s143
      %p147 = scmp.eq.s32.totalorder %s23, 0
      %p148 = por %p146, %p147
      %p149 = scmp.ne.s32.totalorder %s141, %s143
      %p150 = scmp.eq.s32.totalorder %s28, 1
      %p151 = por %p149, %p150
      %p152 = scmp.ne.s32.totalorder %s143, %s144
      %p153 = scmp.eq.s32.totalorder %s28, 0
      %p154 = por %p152, %p153
      %p155 = scmp.ne.s32.totalorder %s143, %s144
      %p156 = scmp.eq.s32.totalorder %s29, 1
      %p157 = por %p155, %p156
      %p159 = scmp.ne.s32.totalorder %s144, %s158
      %p160 = scmp.eq.s32.totalorder %s29, 0
      %p161 = por %p159, %p160
      %s163 = sadd.s32 %s162, 1
      %p166 = scmp.eq.s32.totalorder %s23, 1
      %p167 = scmp.ne.s32.totalorder %s162, %s164
      %p168 = scmp.eq.s32.totalorder %s23, 0
      %p169 = por %p167, %p168
      %p170 = scmp.ne.s32.totalorder %s162, %s164
      %p171 = scmp.eq.s32.totalorder %s28, 1
      %p172 = por %p170, %p171
      %p173 = scmp.ne.s32.totalorder %s164, %s165
      %p174 = scmp.eq.s32.totalorder %s28, 0
      %p175 = por %p173, %p174
      %p176 = scmp.ne.s32.totalorder %s164, %s165
      %p177 = scmp.eq.s32.totalorder %s29, 1
      %p178 = por %p176, %p177
      %p180 = scmp.ne.s32.totalorder %s165, %s179
      %p181 = scmp.eq.s32.totalorder %s29, 0
      %p182 = por %p180, %p181
      %s184 = sadd.s32 %s183, 1
      %p187 = scmp.eq.s32.totalorder %s23, 1
      %p188 = scmp.ne.s32.totalorder %s183, %s185
      %p189 = scmp.eq.s32.totalorder %s23, 0
      %p190 = por %p188, %p189
      %p191 = scmp.ne.s32.totalorder %s183, %s185
      %p192 = scmp.eq.s32.totalorder %s28, 1
      %p193 = por %p191, %p192
      %p194 = scmp.ne.s32.totalorder %s185, %s186
      %p195 = scmp.eq.s32.totalorder %s28, 0
      %p196 = por %p194, %p195
      %p197 = scmp.ne.s32.totalorder %s185, %s186
      %p198 = scmp.eq.s32.totalorder %s29, 1
      %p199 = por %p197, %p198
      %p201 = scmp.ne.s32.totalorder %s186, %s200
      %p202 = scmp.eq.s32.totalorder %s29, 0
      %p203 = por %p201, %p202
      %s205 = sadd.s32 %s204, 1
      %p208 = scmp.eq.s32.totalorder %s23, 1
      %p209 = scmp.ne.s32.totalorder %s204, %s206
      %p210 = scmp.eq.s32.totalorder %s23, 0
      %p211 = por %p209, %p210
      %p212 = scmp.ne.s32.totalorder %s204, %s206
      %p213 = scmp.eq.s32.totalorder %s28, 1
      %p214 = por %p212, %p213
      %p215 = scmp.ne.s32.totalorder %s206, %s207
      %p216 = scmp.eq.s32.totalorder %s28, 0
      %p217 = por %p215, %p216
      %p218 = scmp.ne.s32.totalorder %s206, %s207
      %p219 = scmp.eq.s32.totalorder %s29, 1
      %p220 = por %p218, %p219
      %p222 = scmp.ne.s32.totalorder %s207, %s221
      %p223 = scmp.eq.s32.totalorder %s29, 0
      %p224 = por %p222, %p223
      %s225 = ssub.s32 %s23, %s30
      %p226 = scmp.eq.s32.totalorder %s225, 0
      %s228 = sadd.s32 %s227, 1
      %s229 = scalar_select %p226, %s227, %s228
      %p232 = pneg %p226
      %p233 = scmp.eq.s32.totalorder %s23, 1
      %p234 = por %p232, %p233
      %p235 = scmp.ne.s32.totalorder %s227, %s230
      %p236 = scmp.eq.s32.totalorder %s23, 0
      %p237 = por %p235, %p236
      %p238 = scmp.ne.s32.totalorder %s227, %s230
      %p239 = scmp.eq.s32.totalorder %s28, 1
      %p240 = por %p238, %p239
      %p241 = scmp.ne.s32.totalorder %s230, %s231
      %p242 = scmp.eq.s32.totalorder %s28, 0
      %p243 = por %p241, %p242
      %p244 = scmp.ne.s32.totalorder %s230, %s231
      %p245 = scmp.eq.s32.totalorder %s29, 1
      %p246 = por %p244, %p245
      %p248 = scmp.ne.s32.totalorder %s231, %s247
      %p249 = scmp.eq.s32.totalorder %s29, 0
      %p250 = por %p248, %p249
      %p251 = scmp.le.s32.totalorder 1, %s23
      %p252 = scmp.lt.s32.totalorder %s23, 3
      %p253 = pnand %p251, %p252
      %p254 = pneg %p253
      // Predicated region
      $region9: #{tpu_custom_call.1} parent=5 // pred_check
        _
      $region10: #{tpu_custom_call.1} parent=5 // pred_check_branch
        %256 = sbr.rel (%p253) target = $region12
      $region11: #{tpu_custom_call.1} parent=5 // pred_region
        %s257 = ssub.s32 %s23, 1
        // Predicated region
        $region13: #{tpu_custom_call.1} parent=11 // pred_check
          %p258 = pneg %p70
        $region14: #{tpu_custom_call.1} parent=11 // pred_check_branch
          %260 = sbr.rel (%p258) target = $region16
        $region15: #{tpu_custom_call.1} parent=11 // pred_region
          _
        $region16: #{tpu_custom_call.1} parent=11 // pred_fallthru
          _
        // Predicated region
        $region17: #{tpu_custom_call.1} parent=11 // pred_check
          %p261 = pneg %p91
        $region18: #{tpu_custom_call.1} parent=11 // pred_check_branch
          %263 = sbr.rel (%p261) target = $region20
        $region19: #{tpu_custom_call.1} parent=11 // pred_region
          %s265 = ssub.s32 128, 128
          %266 = vsyncadd [#allocation6], %s265
          %s268 = sshll.u32 [#allocation5], 4
          %s269 = int_to_ptr.vmem [resolvable:$true] %s268
          %271 = dma.hbm_to_vmem [thread:$0]  %s2, 128, %s269, [#allocation6]
        $region20: #{tpu_custom_call.1} parent=11 // pred_fallthru
          _
        // Predicated region
        $region21: #{tpu_custom_call.1} parent=11 // pred_check
          %p272 = pneg %p112
        $region22: #{tpu_custom_call.1} parent=11 // pred_check_branch
          %274 = sbr.rel (%p272) target = $region24
        $region23: #{tpu_custom_call.1} parent=11 // pred_region
          _
        $region24: #{tpu_custom_call.1} parent=11 // pred_fallthru
          _
        // Predicated region
        $region25: #{tpu_custom_call.1} parent=11 // pred_check
          %p275 = pneg %p133
        $region26: #{tpu_custom_call.1} parent=11 // pred_check_branch
          %277 = sbr.rel (%p275) target = $region28
        $region27: #{tpu_custom_call.1} parent=11 // pred_region
          %s279 = ssub.s32 512, 512
          %280 = vsyncadd [#allocation6], %s279
          %s281 = sshll.u32 [#allocation7], 4
          %s282 = int_to_ptr.vmem [resolvable:$true] %s281
          %287 = dma.hbm_to_vmem [thread:$0]  %s4, 512, %s282, [#allocation6], 128, 128, 8
        $region28: #{tpu_custom_call.1} parent=11 // pred_fallthru
          _
        // Predicated region
        $region29: #{tpu_custom_call.1} parent=11 // pred_check
          %p288 = pneg %p154
        $region30: #{tpu_custom_call.1} parent=11 // pred_check_branch
          %290 = sbr.rel (%p288) target = $region32
        $region31: #{tpu_custom_call.1} parent=11 // pred_region
          _
        $region32: #{tpu_custom_call.1} parent=11 // pred_fallthru
          _
        // Predicated region
        $region33: #{tpu_custom_call.1} parent=11 // pred_check
          %p291 = pneg %p175
        $region34: #{tpu_custom_call.1} parent=11 // pred_check_branch
          %293 = sbr.rel (%p291) target = $region36
        $region35: #{tpu_custom_call.1} parent=11 // pred_region
          _
        $region36: #{tpu_custom_call.1} parent=11 // pred_fallthru
          _
        // Predicated region
        $region37: #{tpu_custom_call.1} parent=11 // pred_check
          %p294 = pneg %p196
        $region38: #{tpu_custom_call.1} parent=11 // pred_check_branch
          %296 = sbr.rel (%p294) target = $region40
        $region39: #{tpu_custom_call.1} parent=11 // pred_region
          %s298 = ssub.s32 512, 512
          %299 = vsyncadd [#allocation9], %s298
          %s300 = sshll.u32 [#allocation8], 4
          %s301 = int_to_ptr.vmem [resolvable:$true] %s300
          %306 = dma.hbm_to_vmem [thread:$0]  %s7, 512, %s301, [#allocation9], 128, 128, 8
        $region40: #{tpu_custom_call.1} parent=11 // pred_fallthru
          _
        // Predicated region
        $region41: #{tpu_custom_call.1} parent=11 // pred_check
          %p307 = pneg %p217
        $region42: #{tpu_custom_call.1} parent=11 // pred_check_branch
          %309 = sbr.rel (%p307) target = $region44
        $region43: #{tpu_custom_call.1} parent=11 // pred_region
          _
        $region44: #{tpu_custom_call.1} parent=11 // pred_fallthru
          _
      $region12: #{tpu_custom_call.1} parent=5 // pred_fallthru
        _
      %p310 = scmp.lt.s32.totalorder %s23, 2
      // Predicated region
      $region45: #{tpu_custom_call.1} parent=5 // pred_check
        %p311 = pneg %p310
      $region46: #{tpu_custom_call.1} parent=5 // pred_check_branch
        %313 = sbr.rel (%p311) target = $region48
      $region47: #{tpu_custom_call.1} parent=5 // pred_region
        // Predicated region
        $region49: #{tpu_custom_call.1} parent=47 // pred_check
          %p314 = pneg %p43
        $region50: #{tpu_custom_call.1} parent=47 // pred_check_branch
          %316 = sbr.rel (%p314) target = $region52
        $region51: #{tpu_custom_call.1} parent=47 // pred_region
          %s317 = sand.u32 %s33, 1
          %s318 = scalar_lea.sflag [#allocation3], %s317
          %s319 = sand.u32 %s33, 1
          %s320 = smul.addr %s319, 8
          %s321 = scalar_lea.vmem [#allocation2], %s320
          %s323 = ssub.s32 128, 128
          %324 = vsyncadd %s318, %s323
          %s325 = smul.addr %s23, 128
          %s326 = scalar_lea.hbm %s0, %s325
          %s328 = sshll.u32 %s321, 4
          %s329 = int_to_ptr.vmem [resolvable:$true] %s328
          %331 = dma.hbm_to_vmem [thread:$0]  %s326, 128, %s329, %s318
        $region52: #{tpu_custom_call.1} parent=47 // pred_fallthru
          _
      $region48: #{tpu_custom_call.1} parent=5 // pred_fallthru
        _
      %p332 = scmp.le.s32.totalorder 1, %s23
      %p333 = scmp.lt.s32.totalorder %s23, 3
      %p334 = pnand %p332, %p333
      %p335 = pneg %p334
      // Predicated region
      $region53: #{tpu_custom_call.1} parent=5 // pred_check
        _
      $region54: #{tpu_custom_call.1} parent=5 // pred_check_branch
        %337 = sbr.rel (%p334) target = $region56
      $region55: #{tpu_custom_call.1} parent=5 // pred_region
        %s338 = ssub.s32 %s23, 1
        %s339 = sand.u32 %s36, 1
        %s340 = scalar_lea.sflag [#allocation3], %s339
        %s341 = sand.u32 %s36, 1
        %s342 = smul.addr %s341, 8
        %s343 = scalar_lea.vmem [#allocation2], %s342
        // Predicated region
        $region57: #{tpu_custom_call.1} parent=55 // pred_check
          %p344 = pneg %p49
        $region58: #{tpu_custom_call.1} parent=55 // pred_check_branch
          %346 = sbr.rel (%p344) target = $region60
        $region59: #{tpu_custom_call.1} parent=55 // pred_region
          %347 = dma.done %s340, 128
        $region60: #{tpu_custom_call.1} parent=55 // pred_fallthru
          _
        // Predicated region
        $region61: #{tpu_custom_call.1} parent=55 // pred_check
          %p348 = pneg %p91
        $region62: #{tpu_custom_call.1} parent=55 // pred_check_branch
          %350 = sbr.rel (%p348) target = $region64
        $region63: #{tpu_custom_call.1} parent=55 // pred_region
          %351 = dma.done [#allocation6], 128
        $region64: #{tpu_custom_call.1} parent=55 // pred_fallthru
          _
        // Predicated region
        $region65: #{tpu_custom_call.1} parent=55 // pred_check
          %p352 = pneg %p133
        $region66: #{tpu_custom_call.1} parent=55 // pred_check_branch
          %354 = sbr.rel (%p352) target = $region68
        $region67: #{tpu_custom_call.1} parent=55 // pred_region
          %355 = dma.done [#allocation6], 512
        $region68: #{tpu_custom_call.1} parent=55 // pred_fallthru
          _
        // Predicated region
        $region69: #{tpu_custom_call.1} parent=55 // pred_check
          %p356 = pneg %p196
        $region70: #{tpu_custom_call.1} parent=55 // pred_check_branch
          %358 = sbr.rel (%p356) target = $region72
        $region71: #{tpu_custom_call.1} parent=55 // pred_region
          %359 = dma.done [#allocation9], 512
        $region72: #{tpu_custom_call.1} parent=55 // pred_fallthru
          _
        %s360 = sand.u32 %s36, 1
        %s361 = scalar_lea.sflag [#allocation3], %s360
        %s362 = sand.u32 %s36, 1
        %s363 = smul.addr %s362, 8
        %s364 = scalar_lea.vmem [#allocation2], %s363
        %p365 = pneg %p49
        %p366 = pneg %p46
        %p367 = pneg %p70
        %p368 = pneg %p67
        %p369 = pneg %p91
        %p370 = pneg %p88
        %p371 = pneg %p112
        %p372 = pneg %p109
        %p373 = pneg %p133
        %p374 = pneg %p130
        %p375 = pneg %p154
        %p376 = pneg %p151
        %p377 = pneg %p175
        %p378 = pneg %p172
        %p379 = pneg %p196
        %p380 = pneg %p193
        %p381 = pneg %p217
        %p382 = pneg %p214
        %p383 = pneg %p243
        %p384 = pneg %p240
        %s385 = sand.u32 %s230, 1
        %s386 = scalar_lea.sflag [#allocation4], %s385
        %s387 = sand.u32 %s230, 1
        %s388 = smul.addr %s387, 8
        %s389 = scalar_lea.vmem [#allocation10], %s388
        %v390 = vld [vmem:[%s343] sm:$0xff]
        %v391 = vld [vmem:[%s1] sm:$0xff]
        %v392 = vld [vmem:[#allocation5] sm:$0xff]
        %v393 = vld [vmem:[%s3] sm:$0xff]
        %v394 = vld [vmem:[%s3 + $0x8] sm:$0xff]
        %v395 = vld [vmem:[%s3 + $0x10] sm:$0xff]
        %v396 = vld [vmem:[%s3 + $0x18] sm:$0xff]
        %v397 = vld [vmem:[#allocation7] sm:$0xff]
        %v398 = vld [vmem:[#allocation7 + $0x8] sm:$0xff]
        %v399 = vld [vmem:[#allocation7 + $0x10] sm:$0xff]
        %v400 = vld [vmem:[#allocation7 + $0x18] sm:$0xff]
        %v401 = vld [vmem:[%s5] sm:$0xff]
        %v402 = vld [vmem:[%s5 + $0x8] sm:$0xff]
        %v403 = vld [vmem:[%s5 + $0x10] sm:$0xff]
        %v404 = vld [vmem:[%s5 + $0x18] sm:$0xff]
        %v405 = vld [vmem:[%s6] sm:$0xf]
        %v406 = vand.u32 2147483647, %v390
        %vm407 = vcmask 261120
        %v409 = vsel %vm407, %v406, 0
        %411 = vmatprep.subr.mxu0 0.0
        %412 = vmatpush1.msra.mxu0 %v401
        %413 = vmatprep.subr.mxu0 0.0
        %414 = vmatpush1.msra.mxu0 %v402
        %415 = vmatprep.subr.mxu0 0.0
        %416 = vmatpush1.msra.mxu0 %v403
        %417 = vmatprep.subr.mxu0 0.0
        %418 = vmatpush1.msra.mxu0 %v404
        %419 = vmatprep.subr.mxu0 0.0
        %420 = vmatpush1.msra.mxu0 0.0
        %421 = vmatprep.subr.mxu0 0.0
        %422 = vmatpush1.msra.mxu0 0.0
        %423 = vmatprep.subr.mxu0 0.0
        %424 = vmatpush1.msra.mxu0 0.0
        %425 = vmatprep.subr.mxu0 0.0
        %426 = vmatpush1.msra.mxu0 0.0
        %427 = vmatprep.subr.mxu0 0.0
        %428 = vmatpush1.msra.mxu0 0.0
        %429 = vmatprep.subr.mxu0 0.0
        %430 = vmatpush1.msra.mxu0 0.0
        %431 = vmatprep.subr.mxu0 0.0
        %432 = vmatpush1.msra.mxu0 0.0
        %433 = vmatprep.subr.mxu0 0.0
        %434 = vmatpush1.msra.mxu0 0.0
        %435 = vmatprep.subr.mxu0 0.0
        %436 = vmatpush1.msra.mxu0 0.0
        %437 = vmatprep.subr.mxu0 0.0
        %438 = vmatpush1.msra.mxu0 0.0
        %439 = vmatprep.subr.mxu0 0.0
        %440 = vmatpush1.msra.mxu0 0.0
        %441 = vmatprep.subr.mxu0 0.0
        %442 = vmatpush1.msra.mxu0 0.0
        %443 = vmatprep.subr.mxu0 0.0
        %444 = vmatpush1.msra.mxu0 0.0
        %445 = vmatprep.subr.mxu0 0.0
        %446 = vmatpush1.msra.mxu0 0.0
        %447 = vmatprep.subr.mxu0 0.0
        %448 = vmatpush1.msra.mxu0 0.0
        %449 = vmatprep.subr.mxu0 0.0
        %450 = vmatpush1.msra.mxu0 0.0
        %451 = vmatprep.subr.mxu0 0.0
        %452 = vmatpush1.msra.mxu0 0.0
        %453 = vmatprep.subr.mxu0 0.0
        %454 = vmatpush1.msra.mxu0 0.0
        %455 = vmatprep.subr.mxu0 0.0
        %456 = vmatpush1.msra.mxu0 0.0
        %457 = vmatprep.subr.mxu0 0.0
        %458 = vmatpush1.msra.mxu0 0.0
        %459 = vmatprep.subr.mxu0 0.0
        %460 = vmatpush1.msra.mxu0 0.0
        %461 = vmatprep.subr.mxu0 0.0
        %462 = vmatpush1.msra.mxu0 0.0
        %463 = vmatprep.subr.mxu0 0.0
        %464 = vmatpush1.msra.mxu0 0.0
        %465 = vmatprep.subr.mxu0 0.0
        %466 = vmatpush1.msra.mxu0 0.0
        %467 = vmatprep.subr.mxu0 0.0
        %468 = vmatpush1.msra.mxu0 0.0
        %469 = vmatprep.subr.mxu0 0.0
        %470 = vmatpush1.msra.mxu0 0.0
        %471 = vmatprep.subr.mxu0 0.0
        %472 = vmatpush1.msra.mxu0 0.0
        %473 = vmatprep.subr.mxu0 0.0
        %474 = vmatpush1.msra.mxu0 0.0
        %475 = vmatprep.mubr.f32.mxu0 0.0
        %476 = vmatmul.mubr.f32.gmra.mrb[0].mxu0 %v409
        %v477 = vpop.f32.mrb[0].mxu0
        %v478 = vadd.f32 0.0, %v477
        %v479 = vpop.f32.mrb[0].mxu0
        %480 = vdwg.mxu0
        %v481 = vmax.f32 %v478, 1e-20
        %v482 = vrcp.pop %v481
        %v483 = vmul.f32 1.0, %v482
        %vm484 = vcmask 31744
        %v486 = vsel %vm484, %v483, 0
        %vm488 = vcmask 1043456
        %v490 = vsel %vm488, %v405, 0
        %492 = vmatprep.subr.mxu0 0.0
        %493 = vmatpush1.msra.mxu0 %v490
        %494 = vmatprep.subr.mxu0 0.0
        %495 = vmatpush1.msra.mxu0 0.0
        %496 = vmatprep.subr.mxu0 0.0
        %497 = vmatpush1.msra.mxu0 0.0
        %498 = vmatprep.subr.mxu0 0.0
        %499 = vmatpush1.msra.mxu0 0.0
        %500 = vmatprep.subr.mxu0 0.0
        %501 = vmatpush1.msra.mxu0 0.0
        %502 = vmatprep.subr.mxu0 0.0
        %503 = vmatpush1.msra.mxu0 0.0
        %504 = vmatprep.subr.mxu0 0.0
        %505 = vmatpush1.msra.mxu0 0.0
        %506 = vmatprep.subr.mxu0 0.0
        %507 = vmatpush1.msra.mxu0 0.0
        %508 = vmatprep.subr.mxu0 0.0
        %509 = vmatpush1.msra.mxu0 0.0
        %510 = vmatprep.subr.mxu0 0.0
        %511 = vmatpush1.msra.mxu0 0.0
        %512 = vmatprep.subr.mxu0 0.0
        %513 = vmatpush1.msra.mxu0 0.0
        %514 = vmatprep.subr.mxu0 0.0
        %515 = vmatpush1.msra.mxu0 0.0
        %516 = vmatprep.subr.mxu0 0.0
        %517 = vmatpush1.msra.mxu0 0.0
        %518 = vmatprep.subr.mxu0 0.0
        %519 = vmatpush1.msra.mxu0 0.0
        %520 = vmatprep.subr.mxu0 0.0
        %521 = vmatpush1.msra.mxu0 0.0
        %522 = vmatprep.subr.mxu0 0.0
        %523 = vmatpush1.msra.mxu0 0.0
        %524 = vmatprep.subr.mxu0 0.0
        %525 = vmatpush1.msra.mxu0 0.0
        %526 = vmatprep.subr.mxu0 0.0
        %527 = vmatpush1.msra.mxu0 0.0
        %528 = vmatprep.subr.mxu0 0.0
        %529 = vmatpush1.msra.mxu0 0.0
        %530 = vmatprep.subr.mxu0 0.0
        %531 = vmatpush1.msra.mxu0 0.0
        %532 = vmatprep.subr.mxu0 0.0
        %533 = vmatpush1.msra.mxu0 0.0
        %534 = vmatprep.subr.mxu0 0.0
        %535 = vmatpush1.msra.mxu0 0.0
        %536 = vmatprep.subr.mxu0 0.0
        %537 = vmatpush1.msra.mxu0 0.0
        %538 = vmatprep.subr.mxu0 0.0
        %539 = vmatpush1.msra.mxu0 0.0
        %540 = vmatprep.subr.mxu0 0.0
        %541 = vmatpush1.msra.mxu0 0.0
        %542 = vmatprep.subr.mxu0 0.0
        %543 = vmatpush1.msra.mxu0 0.0
        %544 = vmatprep.subr.mxu0 0.0
        %545 = vmatpush1.msra.mxu0 0.0
        %546 = vmatprep.subr.mxu0 0.0
        %547 = vmatpush1.msra.mxu0 0.0
        %548 = vmatprep.subr.mxu0 0.0
        %549 = vmatpush1.msra.mxu0 0.0
        %550 = vmatprep.subr.mxu0 0.0
        %551 = vmatpush1.msra.mxu0 0.0
        %552 = vmatprep.subr.mxu0 0.0
        %553 = vmatpush1.msra.mxu0 0.0
        %554 = vmatprep.subr.mxu0 0.0
        %555 = vmatpush1.msra.mxu0 0.0
        %556 = vmatprep.mubr.f32.mxu0 0.0
        %557 = vmatmul.mubr.f32.gmra.mrb[0].mxu0 %v486
        %v558 = vpop.f32.mrb[0].mxu0
        %v559 = vadd.f32 0.0, %v558
        %v560 = vpop.f32.mrb[0].mxu0
        %561 = vdwg.mxu0
        %v562 = vmul.f32 %v390, %v559
        %v564 = vsel %vm407, 0.125, 0
        %566 = vmatprep.subr.mxu0 0.0
        %567 = vmatpush1.msra.mxu0 %v393
        %568 = vmatprep.subr.mxu0 0.0
        %569 = vmatpush1.msra.mxu0 %v394
        %570 = vmatprep.subr.mxu0 0.0
        %571 = vmatpush1.msra.mxu0 %v395
        %572 = vmatprep.subr.mxu0 0.0
        %573 = vmatpush1.msra.mxu0 %v396
        %574 = vmatprep.subr.mxu0 0.0
        %575 = vmatpush1.msra.mxu0 0.0
        %576 = vmatprep.subr.mxu0 0.0
        %577 = vmatpush1.msra.mxu0 0.0
        %578 = vmatprep.subr.mxu0 0.0
        %579 = vmatpush1.msra.mxu0 0.0
        %580 = vmatprep.subr.mxu0 0.0
        %581 = vmatpush1.msra.mxu0 0.0
        %582 = vmatprep.subr.mxu0 0.0
        %583 = vmatpush1.msra.mxu0 0.0
        %584 = vmatprep.subr.mxu0 0.0
        %585 = vmatpush1.msra.mxu0 0.0
        %586 = vmatprep.subr.mxu0 0.0
        %587 = vmatpush1.msra.mxu0 0.0
        %588 = vmatprep.subr.mxu0 0.0
        %589 = vmatpush1.msra.mxu0 0.0
        %590 = vmatprep.subr.mxu0 0.0
        %591 = vmatpush1.msra.mxu0 0.0
        %592 = vmatprep.subr.mxu0 0.0
        %593 = vmatpush1.msra.mxu0 0.0
        %594 = vmatprep.subr.mxu0 0.0
        %595 = vmatpush1.msra.mxu0 0.0
        %596 = vmatprep.subr.mxu0 0.0
        %597 = vmatpush1.msra.mxu0 0.0
        %598 = vmatprep.subr.mxu0 0.0
        %599 = vmatpush1.msra.mxu0 0.0
        %600 = vmatprep.subr.mxu0 0.0
        %601 = vmatpush1.msra.mxu0 0.0
        %602 = vmatprep.subr.mxu0 0.0
        %603 = vmatpush1.msra.mxu0 0.0
        %604 = vmatprep.subr.mxu0 0.0
        %605 = vmatpush1.msra.mxu0 0.0
        %606 = vmatprep.subr.mxu0 0.0
        %607 = vmatpush1.msra.mxu0 0.0
        %608 = vmatprep.subr.mxu0 0.0
        %609 = vmatpush1.msra.mxu0 0.0
        %610 = vmatprep.subr.mxu0 0.0
        %611 = vmatpush1.msra.mxu0 0.0
        %612 = vmatprep.subr.mxu0 0.0
        %613 = vmatpush1.msra.mxu0 0.0
        %614 = vmatprep.subr.mxu0 0.0
        %615 = vmatpush1.msra.mxu0 0.0
        %616 = vmatprep.subr.mxu0 0.0
        %617 = vmatpush1.msra.mxu0 0.0
        %618 = vmatprep.subr.mxu0 0.0
        %619 = vmatpush1.msra.mxu0 0.0
        %620 = vmatprep.subr.mxu0 0.0
        %621 = vmatpush1.msra.mxu0 0.0
        %622 = vmatprep.subr.mxu0 0.0
        %623 = vmatpush1.msra.mxu0 0.0
        %624 = vmatprep.subr.mxu0 0.0
        %625 = vmatpush1.msra.mxu0 0.0
        %626 = vmatprep.subr.mxu0 0.0
        %627 = vmatpush1.msra.mxu0 0.0
        %628 = vmatprep.subr.mxu0 0.0
        %629 = vmatpush1.msra.mxu0 0.0
        %630 = vmatprep.mubr.f32.mxu0 0.0
        %631 = vmatmul.mubr.f32.gmra.mrb[0].mxu0 %v564
        %v632 = vpop.f32.mrb[0].mxu0
        %v633 = vadd.f32 0.0, %v632
        %v634 = vpop.f32.mrb[0].mxu0
        %635 = vdwg.mxu0
        %vm636 = vcmask 64512
        %v638 = vsel %vm636, %v392, 0
        %640 = vmatprep.subr.mxu0 0.0
        %641 = vmatpush1.msra.mxu0 %v633
        %642 = vmatprep.subr.mxu0 0.0
        %643 = vmatpush1.msra.mxu0 0.0
        %644 = vmatprep.subr.mxu0 0.0
        %645 = vmatpush1.msra.mxu0 0.0
        %646 = vmatprep.subr.mxu0 0.0
        %647 = vmatpush1.msra.mxu0 0.0
        %648 = vmatprep.subr.mxu0 0.0
        %649 = vmatpush1.msra.mxu0 0.0
        %650 = vmatprep.subr.mxu0 0.0
        %651 = vmatpush1.msra.mxu0 0.0
        %652 = vmatprep.subr.mxu0 0.0
        %653 = vmatpush1.msra.mxu0 0.0
        %654 = vmatprep.subr.mxu0 0.0
        %655 = vmatpush1.msra.mxu0 0.0
        %656 = vmatprep.subr.mxu0 0.0
        %657 = vmatpush1.msra.mxu0 0.0
        %658 = vmatprep.subr.mxu0 0.0
        %659 = vmatpush1.msra.mxu0 0.0
        %660 = vmatprep.subr.mxu0 0.0
        %661 = vmatpush1.msra.mxu0 0.0
        %662 = vmatprep.subr.mxu0 0.0
        %663 = vmatpush1.msra.mxu0 0.0
        %664 = vmatprep.subr.mxu0 0.0
        %665 = vmatpush1.msra.mxu0 0.0
        %666 = vmatprep.subr.mxu0 0.0
        %667 = vmatpush1.msra.mxu0 0.0
        %668 = vmatprep.subr.mxu0 0.0
        %669 = vmatpush1.msra.mxu0 0.0
        %670 = vmatprep.subr.mxu0 0.0
        %671 = vmatpush1.msra.mxu0 0.0
        %672 = vmatprep.subr.mxu0 0.0
        %673 = vmatpush1.msra.mxu0 0.0
        %674 = vmatprep.subr.mxu0 0.0
        %675 = vmatpush1.msra.mxu0 0.0
        %676 = vmatprep.subr.mxu0 0.0
        %677 = vmatpush1.msra.mxu0 0.0
        %678 = vmatprep.subr.mxu0 0.0
        %679 = vmatpush1.msra.mxu0 0.0
        %680 = vmatprep.subr.mxu0 0.0
        %681 = vmatpush1.msra.mxu0 0.0
        %682 = vmatprep.subr.mxu0 0.0
        %683 = vmatpush1.msra.mxu0 0.0
        %684 = vmatprep.subr.mxu0 0.0
        %685 = vmatpush1.msra.mxu0 0.0
        %686 = vmatprep.subr.mxu0 0.0
        %687 = vmatpush1.msra.mxu0 0.0
        %688 = vmatprep.subr.mxu0 0.0
        %689 = vmatpush1.msra.mxu0 0.0
        %690 = vmatprep.subr.mxu0 0.0
        %691 = vmatpush1.msra.mxu0 0.0
        %692 = vmatprep.subr.mxu0 0.0
        %693 = vmatpush1.msra.mxu0 0.0
        %694 = vmatprep.subr.mxu0 0.0
        %695 = vmatpush1.msra.mxu0 0.0
        %696 = vmatprep.subr.mxu0 0.0
        %697 = vmatpush1.msra.mxu0 0.0
        %698 = vmatprep.subr.mxu0 0.0
        %699 = vmatpush1.msra.mxu0 0.0
        %700 = vmatprep.subr.mxu0 0.0
        %701 = vmatpush1.msra.mxu0 0.0
        %702 = vmatprep.subr.mxu0 0.0
        %703 = vmatpush1.msra.mxu0 0.0
        %704 = vmatprep.mubr.f32.mxu0 0.0
        %705 = vmatmul.mubr.f32.gmra.mrb[0].mxu0 %v638
        %v706 = vpop.f32.mrb[0].mxu0
        %v707 = vadd.f32 0.0, %v706
        %v708 = vpop.f32.mrb[0].mxu0
        %709 = vdwg.mxu0
        %v710 = vmax.f32 %v707, 0.0001
        %v712 = vsel %vm407, %v710, 0
        %714 = vmatprep.subr.mxu0 0.0
        %715 = vmatpush1.msra.mxu0 %v401
        %716 = vmatprep.subr.mxu0 0.0
        %717 = vmatpush1.msra.mxu0 %v402
        %718 = vmatprep.subr.mxu0 0.0
        %719 = vmatpush1.msra.mxu0 %v403
        %720 = vmatprep.subr.mxu0 0.0
        %721 = vmatpush1.msra.mxu0 %v404
        %722 = vmatprep.subr.mxu0 0.0
        %723 = vmatpush1.msra.mxu0 0.0
        %724 = vmatprep.subr.mxu0 0.0
        %725 = vmatpush1.msra.mxu0 0.0
        %726 = vmatprep.subr.mxu0 0.0
        %727 = vmatpush1.msra.mxu0 0.0
        %728 = vmatprep.subr.mxu0 0.0
        %729 = vmatpush1.msra.mxu0 0.0
        %730 = vmatprep.subr.mxu0 0.0
        %731 = vmatpush1.msra.mxu0 0.0
        %732 = vmatprep.subr.mxu0 0.0
        %733 = vmatpush1.msra.mxu0 0.0
        %734 = vmatprep.subr.mxu0 0.0
        %735 = vmatpush1.msra.mxu0 0.0
        %736 = vmatprep.subr.mxu0 0.0
        %737 = vmatpush1.msra.mxu0 0.0
        %738 = vmatprep.subr.mxu0 0.0
        %739 = vmatpush1.msra.mxu0 0.0
        %740 = vmatprep.subr.mxu0 0.0
        %741 = vmatpush1.msra.mxu0 0.0
        %742 = vmatprep.subr.mxu0 0.0
        %743 = vmatpush1.msra.mxu0 0.0
        %744 = vmatprep.subr.mxu0 0.0
        %745 = vmatpush1.msra.mxu0 0.0
        %746 = vmatprep.subr.mxu0 0.0
        %747 = vmatpush1.msra.mxu0 0.0
        %748 = vmatprep.subr.mxu0 0.0
        %749 = vmatpush1.msra.mxu0 0.0
        %750 = vmatprep.subr.mxu0 0.0
        %751 = vmatpush1.msra.mxu0 0.0
        %752 = vmatprep.subr.mxu0 0.0
        %753 = vmatpush1.msra.mxu0 0.0
        %754 = vmatprep.subr.mxu0 0.0
        %755 = vmatpush1.msra.mxu0 0.0
        %756 = vmatprep.subr.mxu0 0.0
        %757 = vmatpush1.msra.mxu0 0.0
        %758 = vmatprep.subr.mxu0 0.0
        %759 = vmatpush1.msra.mxu0 0.0
        %760 = vmatprep.subr.mxu0 0.0
        %761 = vmatpush1.msra.mxu0 0.0
        %762 = vmatprep.subr.mxu0 0.0
        %763 = vmatpush1.msra.mxu0 0.0
        %764 = vmatprep.subr.mxu0 0.0
        %765 = vmatpush1.msra.mxu0 0.0
        %766 = vmatprep.subr.mxu0 0.0
        %767 = vmatpush1.msra.mxu0 0.0
        %768 = vmatprep.subr.mxu0 0.0
        %769 = vmatpush1.msra.mxu0 0.0
        %770 = vmatprep.subr.mxu0 0.0
        %771 = vmatpush1.msra.mxu0 0.0
        %772 = vmatprep.subr.mxu0 0.0
        %773 = vmatpush1.msra.mxu0 0.0
        %774 = vmatprep.subr.mxu0 0.0
        %775 = vmatpush1.msra.mxu0 0.0
        %776 = vmatprep.subr.mxu0 0.0
        %777 = vmatpush1.msra.mxu0 0.0
        %778 = vmatprep.mubr.f32.mxu0 0.0
        %779 = vmatmul.mubr.f32.gmra.mrb[0].mxu0 %v712
        %v780 = vpop.f32.mrb[0].mxu0
        %v781 = vadd.f32 0.0, %v780
        %v782 = vpop.f32.mrb[0].mxu0
        %783 = vdwg.mxu0
        %v785 = vsel %vm484, %v781, 0
        %787 = vmatprep.subr.mxu0 0.0
        %788 = vmatpush1.msra.mxu0 %v490
        %789 = vmatprep.subr.mxu0 0.0
        %790 = vmatpush1.msra.mxu0 0.0
        %791 = vmatprep.subr.mxu0 0.0
        %792 = vmatpush1.msra.mxu0 0.0
        %793 = vmatprep.subr.mxu0 0.0
        %794 = vmatpush1.msra.mxu0 0.0
        %795 = vmatprep.subr.mxu0 0.0
        %796 = vmatpush1.msra.mxu0 0.0
        %797 = vmatprep.subr.mxu0 0.0
        %798 = vmatpush1.msra.mxu0 0.0
        %799 = vmatprep.subr.mxu0 0.0
        %800 = vmatpush1.msra.mxu0 0.0
        %801 = vmatprep.subr.mxu0 0.0
        %802 = vmatpush1.msra.mxu0 0.0
        %803 = vmatprep.subr.mxu0 0.0
        %804 = vmatpush1.msra.mxu0 0.0
        %805 = vmatprep.subr.mxu0 0.0
        %806 = vmatpush1.msra.mxu0 0.0
        %807 = vmatprep.subr.mxu0 0.0
        %808 = vmatpush1.msra.mxu0 0.0
        %809 = vmatprep.subr.mxu0 0.0
        %810 = vmatpush1.msra.mxu0 0.0
        %811 = vmatprep.subr.mxu0 0.0
        %812 = vmatpush1.msra.mxu0 0.0
        %813 = vmatprep.subr.mxu0 0.0
        %814 = vmatpush1.msra.mxu0 0.0
        %815 = vmatprep.subr.mxu0 0.0
        %816 = vmatpush1.msra.mxu0 0.0
        %817 = vmatprep.subr.mxu0 0.0
        %818 = vmatpush1.msra.mxu0 0.0
        %819 = vmatprep.subr.mxu0 0.0
        %820 = vmatpush1.msra.mxu0 0.0
        %821 = vmatprep.subr.mxu0 0.0
        %822 = vmatpush1.msra.mxu0 0.0
        %823 = vmatprep.subr.mxu0 0.0
        %824 = vmatpush1.msra.mxu0 0.0
        %825 = vmatprep.subr.mxu0 0.0
        %826 = vmatpush1.msra.mxu0 0.0
        %827 = vmatprep.subr.mxu0 0.0
        %828 = vmatpush1.msra.mxu0 0.0
        %829 = vmatprep.subr.mxu0 0.0
        %830 = vmatpush1.msra.mxu0 0.0
        %831 = vmatprep.subr.mxu0 0.0
        %832 = vmatpush1.msra.mxu0 0.0
        %833 = vmatprep.subr.mxu0 0.0
        %834 = vmatpush1.msra.mxu0 0.0
        %835 = vmatprep.subr.mxu0 0.0
        %836 = vmatpush1.msra.mxu0 0.0
        %837 = vmatprep.subr.mxu0 0.0
        %838 = vmatpush1.msra.mxu0 0.0
        %839 = vmatprep.subr.mxu0 0.0
        %840 = vmatpush1.msra.mxu0 0.0
        %841 = vmatprep.subr.mxu0 0.0
        %842 = vmatpush1.msra.mxu0 0.0
        %843 = vmatprep.subr.mxu0 0.0
        %844 = vmatpush1.msra.mxu0 0.0
        %845 = vmatprep.subr.mxu0 0.0
        %846 = vmatpush1.msra.mxu0 0.0
        %847 = vmatprep.subr.mxu0 0.0
        %848 = vmatpush1.msra.mxu0 0.0
        %849 = vmatprep.subr.mxu0 0.0
        %850 = vmatpush1.msra.mxu0 0.0
        %851 = vmatprep.mubr.f32.mxu0 0.0
        %852 = vmatmul.mubr.f32.gmra.mrb[0].mxu0 %v785
        %v853 = vpop.f32.mrb[0].mxu0
        %v854 = vadd.f32 0.0, %v853
        %v855 = vpop.f32.mrb[0].mxu0
        %856 = vdwg.mxu0
        %v857 = vmul.f32 %v562, %v854
        %v858 = vrcp.pop %v710
        %v859 = vmul.f32 1.0, %v858
        %v860 = vmul.f32 %v857, %v859
        %v862 = vsel %vm407, %v860, 0
        %864 = vmatprep.subr.mxu0 0.0
        %865 = vmatpush1.msra.mxu0 %v397
        %866 = vmatprep.subr.mxu0 0.0
        %867 = vmatpush1.msra.mxu0 %v398
        %868 = vmatprep.subr.mxu0 0.0
        %869 = vmatpush1.msra.mxu0 %v399
        %870 = vmatprep.subr.mxu0 0.0
        %871 = vmatpush1.msra.mxu0 %v400
        %872 = vmatprep.subr.mxu0 0.0
        %873 = vmatpush1.msra.mxu0 0.0
        %874 = vmatprep.subr.mxu0 0.0
        %875 = vmatpush1.msra.mxu0 0.0
        %876 = vmatprep.subr.mxu0 0.0
        %877 = vmatpush1.msra.mxu0 0.0
        %878 = vmatprep.subr.mxu0 0.0
        %879 = vmatpush1.msra.mxu0 0.0
        %880 = vmatprep.subr.mxu0 0.0
        %881 = vmatpush1.msra.mxu0 0.0
        %882 = vmatprep.subr.mxu0 0.0
        %883 = vmatpush1.msra.mxu0 0.0
        %884 = vmatprep.subr.mxu0 0.0
        %885 = vmatpush1.msra.mxu0 0.0
        %886 = vmatprep.subr.mxu0 0.0
        %887 = vmatpush1.msra.mxu0 0.0
        %888 = vmatprep.subr.mxu0 0.0
        %889 = vmatpush1.msra.mxu0 0.0
        %890 = vmatprep.subr.mxu0 0.0
        %891 = vmatpush1.msra.mxu0 0.0
        %892 = vmatprep.subr.mxu0 0.0
        %893 = vmatpush1.msra.mxu0 0.0
        %894 = vmatprep.subr.mxu0 0.0
        %895 = vmatpush1.msra.mxu0 0.0
        %896 = vmatprep.subr.mxu0 0.0
        %897 = vmatpush1.msra.mxu0 0.0
        %898 = vmatprep.subr.mxu0 0.0
        %899 = vmatpush1.msra.mxu0 0.0
        %900 = vmatprep.subr.mxu0 0.0
        %901 = vmatpush1.msra.mxu0 0.0
        %902 = vmatprep.subr.mxu0 0.0
        %903 = vmatpush1.msra.mxu0 0.0
        %904 = vmatprep.subr.mxu0 0.0
        %905 = vmatpush1.msra.mxu0 0.0
        %906 = vmatprep.subr.mxu0 0.0
        %907 = vmatpush1.msra.mxu0 0.0
        %908 = vmatprep.subr.mxu0 0.0
        %909 = vmatpush1.msra.mxu0 0.0
        %910 = vmatprep.subr.mxu0 0.0
        %911 = vmatpush1.msra.mxu0 0.0
        %912 = vmatprep.subr.mxu0 0.0
        %913 = vmatpush1.msra.mxu0 0.0
        %914 = vmatprep.subr.mxu0 0.0
        %915 = vmatpush1.msra.mxu0 0.0
        %916 = vmatprep.subr.mxu0 0.0
        %917 = vmatpush1.msra.mxu0 0.0
        %918 = vmatprep.subr.mxu0 0.0
        %919 = vmatpush1.msra.mxu0 0.0
        %920 = vmatprep.subr.mxu0 0.0
        %921 = vmatpush1.msra.mxu0 0.0
        %922 = vmatprep.subr.mxu0 0.0
        %923 = vmatpush1.msra.mxu0 0.0
        %924 = vmatprep.subr.mxu0 0.0
        %925 = vmatpush1.msra.mxu0 0.0
        %926 = vmatprep.subr.mxu0 0.0
        %927 = vmatpush1.msra.mxu0 0.0
        %928 = vmatprep.mubr.f32.mxu0 0.0
        %929 = vmatmul.mubr.f32.gmra.mrb[0].mxu0 %v862
        %v930 = vpop.f32.mrb[0].mxu0
        %v931 = vadd.f32 0.0, %v930
        %v932 = vpop.f32.mrb[0].mxu0
        %933 = vdwg.mxu0
        %v935 = vsel %vm636, %v391, 0
        %937 = vmatprep.subr.mxu0 0.0
        %938 = vmatpush1.msra.mxu0 %v931
        %939 = vmatprep.subr.mxu0 0.0
        %940 = vmatpush1.msra.mxu0 0.0
        %941 = vmatprep.subr.mxu0 0.0
        %942 = vmatpush1.msra.mxu0 0.0
        %943 = vmatprep.subr.mxu0 0.0
        %944 = vmatpush1.msra.mxu0 0.0
        %945 = vmatprep.subr.mxu0 0.0
        %946 = vmatpush1.msra.mxu0 0.0
        %947 = vmatprep.subr.mxu0 0.0
        %948 = vmatpush1.msra.mxu0 0.0
        %949 = vmatprep.subr.mxu0 0.0
        %950 = vmatpush1.msra.mxu0 0.0
        %951 = vmatprep.subr.mxu0 0.0
        %952 = vmatpush1.msra.mxu0 0.0
        %953 = vmatprep.subr.mxu0 0.0
        %954 = vmatpush1.msra.mxu0 0.0
        %955 = vmatprep.subr.mxu0 0.0
        %956 = vmatpush1.msra.mxu0 0.0
        %957 = vmatprep.subr.mxu0 0.0
        %958 = vmatpush1.msra.mxu0 0.0
        %959 = vmatprep.subr.mxu0 0.0
        %960 = vmatpush1.msra.mxu0 0.0
        %961 = vmatprep.subr.mxu0 0.0
        %962 = vmatpush1.msra.mxu0 0.0
        %963 = vmatprep.subr.mxu0 0.0
        %964 = vmatpush1.msra.mxu0 0.0
        %965 = vmatprep.subr.mxu0 0.0
        %966 = vmatpush1.msra.mxu0 0.0
        %967 = vmatprep.subr.mxu0 0.0
        %968 = vmatpush1.msra.mxu0 0.0
        %969 = vmatprep.subr.mxu0 0.0
        %970 = vmatpush1.msra.mxu0 0.0
        %971 = vmatprep.subr.mxu0 0.0
        %972 = vmatpush1.msra.mxu0 0.0
        %973 = vmatprep.subr.mxu0 0.0
        %974 = vmatpush1.msra.mxu0 0.0
        %975 = vmatprep.subr.mxu0 0.0
        %976 = vmatpush1.msra.mxu0 0.0
        %977 = vmatprep.subr.mxu0 0.0
        %978 = vmatpush1.msra.mxu0 0.0
        %979 = vmatprep.subr.mxu0 0.0
        %980 = vmatpush1.msra.mxu0 0.0
        %981 = vmatprep.subr.mxu0 0.0
        %982 = vmatpush1.msra.mxu0 0.0
        %983 = vmatprep.subr.mxu0 0.0
        %984 = vmatpush1.msra.mxu0 0.0
        %985 = vmatprep.subr.mxu0 0.0
        %986 = vmatpush1.msra.mxu0 0.0
        %987 = vmatprep.subr.mxu0 0.0
        %988 = vmatpush1.msra.mxu0 0.0
        %989 = vmatprep.subr.mxu0 0.0
        %990 = vmatpush1.msra.mxu0 0.0
        %991 = vmatprep.subr.mxu0 0.0
        %992 = vmatpush1.msra.mxu0 0.0
        %993 = vmatprep.subr.mxu0 0.0
        %994 = vmatpush1.msra.mxu0 0.0
        %995 = vmatprep.subr.mxu0 0.0
        %996 = vmatpush1.msra.mxu0 0.0
        %997 = vmatprep.subr.mxu0 0.0
        %998 = vmatpush1.msra.mxu0 0.0
        %999 = vmatprep.subr.mxu0 0.0
        %1000 = vmatpush1.msra.mxu0 0.0
        %1001 = vmatprep.mubr.f32.mxu0 0.0
        %1002 = vmatmul.mubr.f32.gmra.mrb[0].mxu0 %v935
        %v1003 = vpop.f32.mrb[0].mxu0
        %v1004 = vadd.f32 0.0, %v1003
        %v1005 = vpop.f32.mrb[0].mxu0
        %1006 = vdwg.mxu0
        %v1007 = vmul.f32 %v1004, 0.125
        %v1009 = vsel %vm407, %v1007, 0
        %1011 = vmatprep.subr.mxu0 0.0
        %1012 = vmatpush1.msra.mxu0 %v401
        %1013 = vmatprep.subr.mxu0 0.0
        %1014 = vmatpush1.msra.mxu0 %v402
        %1015 = vmatprep.subr.mxu0 0.0
        %1016 = vmatpush1.msra.mxu0 %v403
        %1017 = vmatprep.subr.mxu0 0.0
        %1018 = vmatpush1.msra.mxu0 %v404
        %1019 = vmatprep.subr.mxu0 0.0
        %1020 = vmatpush1.msra.mxu0 0.0
        %1021 = vmatprep.subr.mxu0 0.0
        %1022 = vmatpush1.msra.mxu0 0.0
        %1023 = vmatprep.subr.mxu0 0.0
        %1024 = vmatpush1.msra.mxu0 0.0
        %1025 = vmatprep.subr.mxu0 0.0
        %1026 = vmatpush1.msra.mxu0 0.0
        %1027 = vmatprep.subr.mxu0 0.0
        %1028 = vmatpush1.msra.mxu0 0.0
        %1029 = vmatprep.subr.mxu0 0.0
        %1030 = vmatpush1.msra.mxu0 0.0
        %1031 = vmatprep.subr.mxu0 0.0
        %1032 = vmatpush1.msra.mxu0 0.0
        %1033 = vmatprep.subr.mxu0 0.0
        %1034 = vmatpush1.msra.mxu0 0.0
        %1035 = vmatprep.subr.mxu0 0.0
        %1036 = vmatpush1.msra.mxu0 0.0
        %1037 = vmatprep.subr.mxu0 0.0
        %1038 = vmatpush1.msra.mxu0 0.0
        %1039 = vmatprep.subr.mxu0 0.0
        %1040 = vmatpush1.msra.mxu0 0.0
        %1041 = vmatprep.subr.mxu0 0.0
        %1042 = vmatpush1.msra.mxu0 0.0
        %1043 = vmatprep.subr.mxu0 0.0
        %1044 = vmatpush1.msra.mxu0 0.0
        %1045 = vmatprep.subr.mxu0 0.0
        %1046 = vmatpush1.msra.mxu0 0.0
        %1047 = vmatprep.subr.mxu0 0.0
        %1048 = vmatpush1.msra.mxu0 0.0
        %1049 = vmatprep.subr.mxu0 0.0
        %1050 = vmatpush1.msra.mxu0 0.0
        %1051 = vmatprep.subr.mxu0 0.0
        %1052 = vmatpush1.msra.mxu0 0.0
        %1053 = vmatprep.subr.mxu0 0.0
        %1054 = vmatpush1.msra.mxu0 0.0
        %1055 = vmatprep.subr.mxu0 0.0
        %1056 = vmatpush1.msra.mxu0 0.0
        %1057 = vmatprep.subr.mxu0 0.0
        %1058 = vmatpush1.msra.mxu0 0.0
        %1059 = vmatprep.subr.mxu0 0.0
        %1060 = vmatpush1.msra.mxu0 0.0
        %1061 = vmatprep.subr.mxu0 0.0
        %1062 = vmatpush1.msra.mxu0 0.0
        %1063 = vmatprep.subr.mxu0 0.0
        %1064 = vmatpush1.msra.mxu0 0.0
        %1065 = vmatprep.subr.mxu0 0.0
        %1066 = vmatpush1.msra.mxu0 0.0
        %1067 = vmatprep.subr.mxu0 0.0
        %1068 = vmatpush1.msra.mxu0 0.0
        %1069 = vmatprep.subr.mxu0 0.0
        %1070 = vmatpush1.msra.mxu0 0.0
        %1071 = vmatprep.subr.mxu0 0.0
        %1072 = vmatpush1.msra.mxu0 0.0
        %1073 = vmatprep.subr.mxu0 0.0
        %1074 = vmatpush1.msra.mxu0 0.0
        %1075 = vmatprep.mubr.f32.mxu0 0.0
        %1076 = vmatmul.mubr.f32.gmra.mrb[0].mxu0 %v1009
        %v1077 = vpop.f32.mrb[0].mxu0
        %v1078 = vadd.f32 0.0, %v1077
        %v1079 = vpop.f32.mrb[0].mxu0
        %1080 = vdwg.mxu0
        %v1081 = vmax.f32 %v1078, 1e-20
        %v1082 = vrcp.pop %v1081
        %v1083 = vmul.f32 1.0, %v1082
        %v1085 = vsel %vm484, %v1083, 0
        %1087 = vmatprep.subr.mxu0 0.0
        %1088 = vmatpush1.msra.mxu0 %v490
        %1089 = vmatprep.subr.mxu0 0.0
        %1090 = vmatpush1.msra.mxu0 0.0
        %1091 = vmatprep.subr.mxu0 0.0
        %1092 = vmatpush1.msra.mxu0 0.0
        %1093 = vmatprep.subr.mxu0 0.0
        %1094 = vmatpush1.msra.mxu0 0.0
        %1095 = vmatprep.subr.mxu0 0.0
        %1096 = vmatpush1.msra.mxu0 0.0
        %1097 = vmatprep.subr.mxu0 0.0
        %1098 = vmatpush1.msra.mxu0 0.0
        %1099 = vmatprep.subr.mxu0 0.0
        %1100 = vmatpush1.msra.mxu0 0.0
        %1101 = vmatprep.subr.mxu0 0.0
        %1102 = vmatpush1.msra.mxu0 0.0
        %1103 = vmatprep.subr.mxu0 0.0
        %1104 = vmatpush1.msra.mxu0 0.0
        %1105 = vmatprep.subr.mxu0 0.0
        %1106 = vmatpush1.msra.mxu0 0.0
        %1107 = vmatprep.subr.mxu0 0.0
        %1108 = vmatpush1.msra.mxu0 0.0
        %1109 = vmatprep.subr.mxu0 0.0
        %1110 = vmatpush1.msra.mxu0 0.0
        %1111 = vmatprep.subr.mxu0 0.0
        %1112 = vmatpush1.msra.mxu0 0.0
        %1113 = vmatprep.subr.mxu0 0.0
        %1114 = vmatpush1.msra.mxu0 0.0
        %1115 = vmatprep.subr.mxu0 0.0
        %1116 = vmatpush1.msra.mxu0 0.0
        %1117 = vmatprep.subr.mxu0 0.0
        %1118 = vmatpush1.msra.mxu0 0.0
        %1119 = vmatprep.subr.mxu0 0.0
        %1120 = vmatpush1.msra.mxu0 0.0
        %1121 = vmatprep.subr.mxu0 0.0
        %1122 = vmatpush1.msra.mxu0 0.0
        %1123 = vmatprep.subr.mxu0 0.0
        %1124 = vmatpush1.msra.mxu0 0.0
        %1125 = vmatprep.subr.mxu0 0.0
        %1126 = vmatpush1.msra.mxu0 0.0
        %1127 = vmatprep.subr.mxu0 0.0
        %1128 = vmatpush1.msra.mxu0 0.0
        %1129 = vmatprep.subr.mxu0 0.0
        %1130 = vmatpush1.msra.mxu0 0.0
        %1131 = vmatprep.subr.mxu0 0.0
        %1132 = vmatpush1.msra.mxu0 0.0
        %1133 = vmatprep.subr.mxu0 0.0
        %1134 = vmatpush1.msra.mxu0 0.0
        %1135 = vmatprep.subr.mxu0 0.0
        %1136 = vmatpush1.msra.mxu0 0.0
        %1137 = vmatprep.subr.mxu0 0.0
        %1138 = vmatpush1.msra.mxu0 0.0
        %1139 = vmatprep.subr.mxu0 0.0
        %1140 = vmatpush1.msra.mxu0 0.0
        %1141 = vmatprep.subr.mxu0 0.0
        %1142 = vmatpush1.msra.mxu0 0.0
        %1143 = vmatprep.subr.mxu0 0.0
        %1144 = vmatpush1.msra.mxu0 0.0
        %1145 = vmatprep.subr.mxu0 0.0
        %1146 = vmatpush1.msra.mxu0 0.0
        %1147 = vmatprep.subr.mxu0 0.0
        %1148 = vmatpush1.msra.mxu0 0.0
        %1149 = vmatprep.subr.mxu0 0.0
        %1150 = vmatpush1.msra.mxu0 0.0
        %1151 = vmatprep.mubr.f32.mxu0 0.0
        %1152 = vmatmul.mubr.f32.gmra.mrb[0].mxu0 %v1085
        %v1153 = vpop.f32.mrb[0].mxu0
        %v1154 = vadd.f32 0.0, %v1153
        %v1155 = vpop.f32.mrb[0].mxu0
        %1156 = vdwg.mxu0
        %v1157 = vmul.f32 %v1007, %v1154
        %v1159 = vsel %vm407, %v1157, 0
        %1161 = vmatprep.subr.mxu0 0.0
        %1162 = vmatpush1.msra.mxu0 %v393
        %1163 = vmatprep.subr.mxu0 0.0
        %1164 = vmatpush1.msra.mxu0 %v394
        %1165 = vmatprep.subr.mxu0 0.0
        %1166 = vmatpush1.msra.mxu0 %v395
        %1167 = vmatprep.subr.mxu0 0.0
        %1168 = vmatpush1.msra.mxu0 %v396
        %1169 = vmatprep.subr.mxu0 0.0
        %1170 = vmatpush1.msra.mxu0 0.0
        %1171 = vmatprep.subr.mxu0 0.0
        %1172 = vmatpush1.msra.mxu0 0.0
        %1173 = vmatprep.subr.mxu0 0.0
        %1174 = vmatpush1.msra.mxu0 0.0
        %1175 = vmatprep.subr.mxu0 0.0
        %1176 = vmatpush1.msra.mxu0 0.0
        %1177 = vmatprep.subr.mxu0 0.0
        %1178 = vmatpush1.msra.mxu0 0.0
        %1179 = vmatprep.subr.mxu0 0.0
        %1180 = vmatpush1.msra.mxu0 0.0
        %1181 = vmatprep.subr.mxu0 0.0
        %1182 = vmatpush1.msra.mxu0 0.0
        %1183 = vmatprep.subr.mxu0 0.0
        %1184 = vmatpush1.msra.mxu0 0.0
        %1185 = vmatprep.subr.mxu0 0.0
        %1186 = vmatpush1.msra.mxu0 0.0
        %1187 = vmatprep.subr.mxu0 0.0
        %1188 = vmatpush1.msra.mxu0 0.0
        %1189 = vmatprep.subr.mxu0 0.0
        %1190 = vmatpush1.msra.mxu0 0.0
        %1191 = vmatprep.subr.mxu0 0.0
        %1192 = vmatpush1.msra.mxu0 0.0
        %1193 = vmatprep.subr.mxu0 0.0
        %1194 = vmatpush1.msra.mxu0 0.0
        %1195 = vmatprep.subr.mxu0 0.0
        %1196 = vmatpush1.msra.mxu0 0.0
        %1197 = vmatprep.subr.mxu0 0.0
        %1198 = vmatpush1.msra.mxu0 0.0
        %1199 = vmatprep.subr.mxu0 0.0
        %1200 = vmatpush1.msra.mxu0 0.0
        %1201 = vmatprep.subr.mxu0 0.0
        %1202 = vmatpush1.msra.mxu0 0.0
        %1203 = vmatprep.subr.mxu0 0.0
        %1204 = vmatpush1.msra.mxu0 0.0
        %1205 = vmatprep.subr.mxu0 0.0
        %1206 = vmatpush1.msra.mxu0 0.0
        %1207 = vmatprep.subr.mxu0 0.0
        %1208 = vmatpush1.msra.mxu0 0.0
        %1209 = vmatprep.subr.mxu0 0.0
        %1210 = vmatpush1.msra.mxu0 0.0
        %1211 = vmatprep.subr.mxu0 0.0
        %1212 = vmatpush1.msra.mxu0 0.0
        %1213 = vmatprep.subr.mxu0 0.0
        %1214 = vmatpush1.msra.mxu0 0.0
        %1215 = vmatprep.subr.mxu0 0.0
        %1216 = vmatpush1.msra.mxu0 0.0
        %1217 = vmatprep.subr.mxu0 0.0
        %1218 = vmatpush1.msra.mxu0 0.0
        %1219 = vmatprep.subr.mxu0 0.0
        %1220 = vmatpush1.msra.mxu0 0.0
        %1221 = vmatprep.subr.mxu0 0.0
        %1222 = vmatpush1.msra.mxu0 0.0
        %1223 = vmatprep.subr.mxu0 0.0
        %1224 = vmatpush1.msra.mxu0 0.0
        %1225 = vmatprep.mubr.f32.mxu0 0.0
        %1226 = vmatmul.mubr.f32.gmra.mrb[0].mxu0 %v1159
        %v1227 = vpop.f32.mrb[0].mxu0
        %v1228 = vadd.f32 0.0, %v1227
        %v1229 = vpop.f32.mrb[0].mxu0
        %1230 = vdwg.mxu0
        %1231 = vmatprep.subr.mxu0 0.0
        %1232 = vmatpush1.msra.mxu0 %v1228
        %1233 = vmatprep.subr.mxu0 0.0
        %1234 = vmatpush1.msra.mxu0 0.0
        %1235 = vmatprep.subr.mxu0 0.0
        %1236 = vmatpush1.msra.mxu0 0.0
        %1237 = vmatprep.subr.mxu0 0.0
        %1238 = vmatpush1.msra.mxu0 0.0
        %1239 = vmatprep.subr.mxu0 0.0
        %1240 = vmatpush1.msra.mxu0 0.0
        %1241 = vmatprep.subr.mxu0 0.0
        %1242 = vmatpush1.msra.mxu0 0.0
        %1243 = vmatprep.subr.mxu0 0.0
        %1244 = vmatpush1.msra.mxu0 0.0
        %1245 = vmatprep.subr.mxu0 0.0
        %1246 = vmatpush1.msra.mxu0 0.0
        %1247 = vmatprep.subr.mxu0 0.0
        %1248 = vmatpush1.msra.mxu0 0.0
        %1249 = vmatprep.subr.mxu0 0.0
        %1250 = vmatpush1.msra.mxu0 0.0
        %1251 = vmatprep.subr.mxu0 0.0
        %1252 = vmatpush1.msra.mxu0 0.0
        %1253 = vmatprep.subr.mxu0 0.0
        %1254 = vmatpush1.msra.mxu0 0.0
        %1255 = vmatprep.subr.mxu0 0.0
        %1256 = vmatpush1.msra.mxu0 0.0
        %1257 = vmatprep.subr.mxu0 0.0
        %1258 = vmatpush1.msra.mxu0 0.0
        %1259 = vmatprep.subr.mxu0 0.0
        %1260 = vmatpush1.msra.mxu0 0.0
        %1261 = vmatprep.subr.mxu0 0.0
        %1262 = vmatpush1.msra.mxu0 0.0
        %1263 = vmatprep.subr.mxu0 0.0
        %1264 = vmatpush1.msra.mxu0 0.0
        %1265 = vmatprep.subr.mxu0 0.0
        %1266 = vmatpush1.msra.mxu0 0.0
        %1267 = vmatprep.subr.mxu0 0.0
        %1268 = vmatpush1.msra.mxu0 0.0
        %1269 = vmatprep.subr.mxu0 0.0
        %1270 = vmatpush1.msra.mxu0 0.0
        %1271 = vmatprep.subr.mxu0 0.0
        %1272 = vmatpush1.msra.mxu0 0.0
        %1273 = vmatprep.subr.mxu0 0.0
        %1274 = vmatpush1.msra.mxu0 0.0
        %1275 = vmatprep.subr.mxu0 0.0
        %1276 = vmatpush1.msra.mxu0 0.0
        %1277 = vmatprep.subr.mxu0 0.0
        %1278 = vmatpush1.msra.mxu0 0.0
        %1279 = vmatprep.subr.mxu0 0.0
        %1280 = vmatpush1.msra.mxu0 0.0
        %1281 = vmatprep.subr.mxu0 0.0
        %1282 = vmatpush1.msra.mxu0 0.0
        %1283 = vmatprep.subr.mxu0 0.0
        %1284 = vmatpush1.msra.mxu0 0.0
        %1285 = vmatprep.subr.mxu0 0.0
        %1286 = vmatpush1.msra.mxu0 0.0
        %1287 = vmatprep.subr.mxu0 0.0
        %1288 = vmatpush1.msra.mxu0 0.0
        %1289 = vmatprep.subr.mxu0 0.0
        %1290 = vmatpush1.msra.mxu0 0.0
        %1291 = vmatprep.subr.mxu0 0.0
        %1292 = vmatpush1.msra.mxu0 0.0
        %1293 = vmatprep.subr.mxu0 0.0
        %1294 = vmatpush1.msra.mxu0 0.0
        %1295 = vmatprep.mubr.f32.mxu0 0.0
        %1296 = vmatmul.mubr.f32.gmra.mrb[0].mxu0 %v638
        %v1297 = vpop.f32.mrb[0].mxu0
        %v1298 = vadd.f32 0.0, %v1297
        %v1299 = vpop.f32.mrb[0].mxu0
        %1300 = vdwg.mxu0
        %v1301 = vmax.f32 %v1298, 0.0001
        %v1303 = vsel %vm407, %v1301, 0
        %1305 = vmatprep.subr.mxu0 0.0
        %1306 = vmatpush1.msra.mxu0 %v401
        %1307 = vmatprep.subr.mxu0 0.0
        %1308 = vmatpush1.msra.mxu0 %v402
        %1309 = vmatprep.subr.mxu0 0.0
        %1310 = vmatpush1.msra.mxu0 %v403
        %1311 = vmatprep.subr.mxu0 0.0
        %1312 = vmatpush1.msra.mxu0 %v404
        %1313 = vmatprep.subr.mxu0 0.0
        %1314 = vmatpush1.msra.mxu0 0.0
        %1315 = vmatprep.subr.mxu0 0.0
        %1316 = vmatpush1.msra.mxu0 0.0
        %1317 = vmatprep.subr.mxu0 0.0
        %1318 = vmatpush1.msra.mxu0 0.0
        %1319 = vmatprep.subr.mxu0 0.0
        %1320 = vmatpush1.msra.mxu0 0.0
        %1321 = vmatprep.subr.mxu0 0.0
        %1322 = vmatpush1.msra.mxu0 0.0
        %1323 = vmatprep.subr.mxu0 0.0
        %1324 = vmatpush1.msra.mxu0 0.0
        %1325 = vmatprep.subr.mxu0 0.0
        %1326 = vmatpush1.msra.mxu0 0.0
        %1327 = vmatprep.subr.mxu0 0.0
        %1328 = vmatpush1.msra.mxu0 0.0
        %1329 = vmatprep.subr.mxu0 0.0
        %1330 = vmatpush1.msra.mxu0 0.0
        %1331 = vmatprep.subr.mxu0 0.0
        %1332 = vmatpush1.msra.mxu0 0.0
        %1333 = vmatprep.subr.mxu0 0.0
        %1334 = vmatpush1.msra.mxu0 0.0
        %1335 = vmatprep.subr.mxu0 0.0
        %1336 = vmatpush1.msra.mxu0 0.0
        %1337 = vmatprep.subr.mxu0 0.0
        %1338 = vmatpush1.msra.mxu0 0.0
        %1339 = vmatprep.subr.mxu0 0.0
        %1340 = vmatpush1.msra.mxu0 0.0
        %1341 = vmatprep.subr.mxu0 0.0
        %1342 = vmatpush1.msra.mxu0 0.0
        %1343 = vmatprep.subr.mxu0 0.0
        %1344 = vmatpush1.msra.mxu0 0.0
        %1345 = vmatprep.subr.mxu0 0.0
        %1346 = vmatpush1.msra.mxu0 0.0
        %1347 = vmatprep.subr.mxu0 0.0
        %1348 = vmatpush1.msra.mxu0 0.0
        %1349 = vmatprep.subr.mxu0 0.0
        %1350 = vmatpush1.msra.mxu0 0.0
        %1351 = vmatprep.subr.mxu0 0.0
        %1352 = vmatpush1.msra.mxu0 0.0
        %1353 = vmatprep.subr.mxu0 0.0
        %1354 = vmatpush1.msra.mxu0 0.0
        %1355 = vmatprep.subr.mxu0 0.0
        %1356 = vmatpush1.msra.mxu0 0.0
        %1357 = vmatprep.subr.mxu0 0.0
        %1358 = vmatpush1.msra.mxu0 0.0
        %1359 = vmatprep.subr.mxu0 0.0
        %1360 = vmatpush1.msra.mxu0 0.0
        %1361 = vmatprep.subr.mxu0 0.0
        %1362 = vmatpush1.msra.mxu0 0.0
        %1363 = vmatprep.subr.mxu0 0.0
        %1364 = vmatpush1.msra.mxu0 0.0
        %1365 = vmatprep.subr.mxu0 0.0
        %1366 = vmatpush1.msra.mxu0 0.0
        %1367 = vmatprep.subr.mxu0 0.0
        %1368 = vmatpush1.msra.mxu0 0.0
        %1369 = vmatprep.mubr.f32.mxu0 0.0
        %1370 = vmatmul.mubr.f32.gmra.mrb[0].mxu0 %v1303
        %v1371 = vpop.f32.mrb[0].mxu0
        %v1372 = vadd.f32 0.0, %v1371
        %v1373 = vpop.f32.mrb[0].mxu0
        %1374 = vdwg.mxu0
        %v1376 = vsel %vm484, %v1372, 0
        %1378 = vmatprep.subr.mxu0 0.0
        %1379 = vmatpush1.msra.mxu0 %v490
        %1380 = vmatprep.subr.mxu0 0.0
        %1381 = vmatpush1.msra.mxu0 0.0
        %1382 = vmatprep.subr.mxu0 0.0
        %1383 = vmatpush1.msra.mxu0 0.0
        %1384 = vmatprep.subr.mxu0 0.0
        %1385 = vmatpush1.msra.mxu0 0.0
        %1386 = vmatprep.subr.mxu0 0.0
        %1387 = vmatpush1.msra.mxu0 0.0
        %1388 = vmatprep.subr.mxu0 0.0
        %1389 = vmatpush1.msra.mxu0 0.0
        %1390 = vmatprep.subr.mxu0 0.0
        %1391 = vmatpush1.msra.mxu0 0.0
        %1392 = vmatprep.subr.mxu0 0.0
        %1393 = vmatpush1.msra.mxu0 0.0
        %1394 = vmatprep.subr.mxu0 0.0
        %1395 = vmatpush1.msra.mxu0 0.0
        %1396 = vmatprep.subr.mxu0 0.0
        %1397 = vmatpush1.msra.mxu0 0.0
        %1398 = vmatprep.subr.mxu0 0.0
        %1399 = vmatpush1.msra.mxu0 0.0
        %1400 = vmatprep.subr.mxu0 0.0
        %1401 = vmatpush1.msra.mxu0 0.0
        %1402 = vmatprep.subr.mxu0 0.0
        %1403 = vmatpush1.msra.mxu0 0.0
        %1404 = vmatprep.subr.mxu0 0.0
        %1405 = vmatpush1.msra.mxu0 0.0
        %1406 = vmatprep.subr.mxu0 0.0
        %1407 = vmatpush1.msra.mxu0 0.0
        %1408 = vmatprep.subr.mxu0 0.0
        %1409 = vmatpush1.msra.mxu0 0.0
        %1410 = vmatprep.subr.mxu0 0.0
        %1411 = vmatpush1.msra.mxu0 0.0
        %1412 = vmatprep.subr.mxu0 0.0
        %1413 = vmatpush1.msra.mxu0 0.0
        %1414 = vmatprep.subr.mxu0 0.0
        %1415 = vmatpush1.msra.mxu0 0.0
        %1416 = vmatprep.subr.mxu0 0.0
        %1417 = vmatpush1.msra.mxu0 0.0
        %1418 = vmatprep.subr.mxu0 0.0
        %1419 = vmatpush1.msra.mxu0 0.0
        %1420 = vmatprep.subr.mxu0 0.0
        %1421 = vmatpush1.msra.mxu0 0.0
        %1422 = vmatprep.subr.mxu0 0.0
        %1423 = vmatpush1.msra.mxu0 0.0
        %1424 = vmatprep.subr.mxu0 0.0
        %1425 = vmatpush1.msra.mxu0 0.0
        %1426 = vmatprep.subr.mxu0 0.0
        %1427 = vmatpush1.msra.mxu0 0.0
        %1428 = vmatprep.subr.mxu0 0.0
        %1429 = vmatpush1.msra.mxu0 0.0
        %1430 = vmatprep.subr.mxu0 0.0
        %1431 = vmatpush1.msra.mxu0 0.0
        %1432 = vmatprep.subr.mxu0 0.0
        %1433 = vmatpush1.msra.mxu0 0.0
        %1434 = vmatprep.subr.mxu0 0.0
        %1435 = vmatpush1.msra.mxu0 0.0
        %1436 = vmatprep.subr.mxu0 0.0
        %1437 = vmatpush1.msra.mxu0 0.0
        %1438 = vmatprep.subr.mxu0 0.0
        %1439 = vmatpush1.msra.mxu0 0.0
        %1440 = vmatprep.subr.mxu0 0.0
        %1441 = vmatpush1.msra.mxu0 0.0
        %1442 = vmatprep.mubr.f32.mxu0 0.0
        %1443 = vmatmul.mubr.f32.gmra.mrb[0].mxu0 %v1376
        %v1444 = vpop.f32.mrb[0].mxu0
        %v1445 = vadd.f32 0.0, %v1444
        %v1446 = vpop.f32.mrb[0].mxu0
        %1447 = vdwg.mxu0
        %v1448 = vmul.f32 %v562, %v1445
        %v1449 = vrcp.pop %v1301
        %v1450 = vmul.f32 1.0, %v1449
        %v1451 = vmul.f32 %v1448, %v1450
        %v1453 = vsel %vm407, %v1451, 0
        %1455 = vmatprep.subr.mxu0 0.0
        %1456 = vmatpush1.msra.mxu0 %v397
        %1457 = vmatprep.subr.mxu0 0.0
        %1458 = vmatpush1.msra.mxu0 %v398
        %1459 = vmatprep.subr.mxu0 0.0
        %1460 = vmatpush1.msra.mxu0 %v399
        %1461 = vmatprep.subr.mxu0 0.0
        %1462 = vmatpush1.msra.mxu0 %v400
        %1463 = vmatprep.subr.mxu0 0.0
        %1464 = vmatpush1.msra.mxu0 0.0
        %1465 = vmatprep.subr.mxu0 0.0
        %1466 = vmatpush1.msra.mxu0 0.0
        %1467 = vmatprep.subr.mxu0 0.0
        %1468 = vmatpush1.msra.mxu0 0.0
        %1469 = vmatprep.subr.mxu0 0.0
        %1470 = vmatpush1.msra.mxu0 0.0
        %1471 = vmatprep.subr.mxu0 0.0
        %1472 = vmatpush1.msra.mxu0 0.0
        %1473 = vmatprep.subr.mxu0 0.0
        %1474 = vmatpush1.msra.mxu0 0.0
        %1475 = vmatprep.subr.mxu0 0.0
        %1476 = vmatpush1.msra.mxu0 0.0
        %1477 = vmatprep.subr.mxu0 0.0
        %1478 = vmatpush1.msra.mxu0 0.0
        %1479 = vmatprep.subr.mxu0 0.0
        %1480 = vmatpush1.msra.mxu0 0.0
        %1481 = vmatprep.subr.mxu0 0.0
        %1482 = vmatpush1.msra.mxu0 0.0
        %1483 = vmatprep.subr.mxu0 0.0
        %1484 = vmatpush1.msra.mxu0 0.0
        %1485 = vmatprep.subr.mxu0 0.0
        %1486 = vmatpush1.msra.mxu0 0.0
        %1487 = vmatprep.subr.mxu0 0.0
        %1488 = vmatpush1.msra.mxu0 0.0
        %1489 = vmatprep.subr.mxu0 0.0
        %1490 = vmatpush1.msra.mxu0 0.0
        %1491 = vmatprep.subr.mxu0 0.0
        %1492 = vmatpush1.msra.mxu0 0.0
        %1493 = vmatprep.subr.mxu0 0.0
        %1494 = vmatpush1.msra.mxu0 0.0
        %1495 = vmatprep.subr.mxu0 0.0
        %1496 = vmatpush1.msra.mxu0 0.0
        %1497 = vmatprep.subr.mxu0 0.0
        %1498 = vmatpush1.msra.mxu0 0.0
        %1499 = vmatprep.subr.mxu0 0.0
        %1500 = vmatpush1.msra.mxu0 0.0
        %1501 = vmatprep.subr.mxu0 0.0
        %1502 = vmatpush1.msra.mxu0 0.0
        %1503 = vmatprep.subr.mxu0 0.0
        %1504 = vmatpush1.msra.mxu0 0.0
        %1505 = vmatprep.subr.mxu0 0.0
        %1506 = vmatpush1.msra.mxu0 0.0
        %1507 = vmatprep.subr.mxu0 0.0
        %1508 = vmatpush1.msra.mxu0 0.0
        %1509 = vmatprep.subr.mxu0 0.0
        %1510 = vmatpush1.msra.mxu0 0.0
        %1511 = vmatprep.subr.mxu0 0.0
        %1512 = vmatpush1.msra.mxu0 0.0
        %1513 = vmatprep.subr.mxu0 0.0
        %1514 = vmatpush1.msra.mxu0 0.0
        %1515 = vmatprep.subr.mxu0 0.0
        %1516 = vmatpush1.msra.mxu0 0.0
        %1517 = vmatprep.subr.mxu0 0.0
        %1518 = vmatpush1.msra.mxu0 0.0
        %1519 = vmatprep.mubr.f32.mxu0 0.0
        %1520 = vmatmul.mubr.f32.gmra.mrb[0].mxu0 %v1453
        %v1521 = vpop.f32.mrb[0].mxu0
        %v1522 = vadd.f32 0.0, %v1521
        %v1523 = vpop.f32.mrb[0].mxu0
        %1524 = vdwg.mxu0
        %1525 = vmatprep.subr.mxu0 0.0
        %1526 = vmatpush1.msra.mxu0 %v1522
        %1527 = vmatprep.subr.mxu0 0.0
        %1528 = vmatpush1.msra.mxu0 0.0
        %1529 = vmatprep.subr.mxu0 0.0
        %1530 = vmatpush1.msra.mxu0 0.0
        %1531 = vmatprep.subr.mxu0 0.0
        %1532 = vmatpush1.msra.mxu0 0.0
        %1533 = vmatprep.subr.mxu0 0.0
        %1534 = vmatpush1.msra.mxu0 0.0
        %1535 = vmatprep.subr.mxu0 0.0
        %1536 = vmatpush1.msra.mxu0 0.0
        %1537 = vmatprep.subr.mxu0 0.0
        %1538 = vmatpush1.msra.mxu0 0.0
        %1539 = vmatprep.subr.mxu0 0.0
        %1540 = vmatpush1.msra.mxu0 0.0
        %1541 = vmatprep.subr.mxu0 0.0
        %1542 = vmatpush1.msra.mxu0 0.0
        %1543 = vmatprep.subr.mxu0 0.0
        %1544 = vmatpush1.msra.mxu0 0.0
        %1545 = vmatprep.subr.mxu0 0.0
        %1546 = vmatpush1.msra.mxu0 0.0
        %1547 = vmatprep.subr.mxu0 0.0
        %1548 = vmatpush1.msra.mxu0 0.0
        %1549 = vmatprep.subr.mxu0 0.0
        %1550 = vmatpush1.msra.mxu0 0.0
        %1551 = vmatprep.subr.mxu0 0.0
        %1552 = vmatpush1.msra.mxu0 0.0
        %1553 = vmatprep.subr.mxu0 0.0
        %1554 = vmatpush1.msra.mxu0 0.0
        %1555 = vmatprep.subr.mxu0 0.0
        %1556 = vmatpush1.msra.mxu0 0.0
        %1557 = vmatprep.subr.mxu0 0.0
        %1558 = vmatpush1.msra.mxu0 0.0
        %1559 = vmatprep.subr.mxu0 0.0
        %1560 = vmatpush1.msra.mxu0 0.0
        %1561 = vmatprep.subr.mxu0 0.0
        %1562 = vmatpush1.msra.mxu0 0.0
        %1563 = vmatprep.subr.mxu0 0.0
        %1564 = vmatpush1.msra.mxu0 0.0
        %1565 = vmatprep.subr.mxu0 0.0
        %1566 = vmatpush1.msra.mxu0 0.0
        %1567 = vmatprep.subr.mxu0 0.0
        %1568 = vmatpush1.msra.mxu0 0.0
        %1569 = vmatprep.subr.mxu0 0.0
        %1570 = vmatpush1.msra.mxu0 0.0
        %1571 = vmatprep.subr.mxu0 0.0
        %1572 = vmatpush1.msra.mxu0 0.0
        %1573 = vmatprep.subr.mxu0 0.0
        %1574 = vmatpush1.msra.mxu0 0.0
        %1575 = vmatprep.subr.mxu0 0.0
        %1576 = vmatpush1.msra.mxu0 0.0
        %1577 = vmatprep.subr.mxu0 0.0
        %1578 = vmatpush1.msra.mxu0 0.0
        %1579 = vmatprep.subr.mxu0 0.0
        %1580 = vmatpush1.msra.mxu0 0.0
        %1581 = vmatprep.subr.mxu0 0.0
        %1582 = vmatpush1.msra.mxu0 0.0
        %1583 = vmatprep.subr.mxu0 0.0
        %1584 = vmatpush1.msra.mxu0 0.0
        %1585 = vmatprep.subr.mxu0 0.0
        %1586 = vmatpush1.msra.mxu0 0.0
        %1587 = vmatprep.subr.mxu0 0.0
        %1588 = vmatpush1.msra.mxu0 0.0
        %1589 = vmatprep.mubr.f32.mxu0 0.0
        %1590 = vmatmul.mubr.f32.gmra.mrb[0].mxu0 %v935
        %v1591 = vpop.f32.mrb[0].mxu0
        %v1592 = vadd.f32 0.0, %v1591
        %v1593 = vpop.f32.mrb[0].mxu0
        %1594 = vdwg.mxu0
        %v1595 = vmul.f32 %v1157, %v1592
        %v1597 = vsel %vm407, %v1595, 0
        %1599 = vmatprep.subr.mxu0 0.0
        %1600 = vmatpush1.msra.mxu0 %v401
        %1601 = vmatprep.subr.mxu0 0.0
        %1602 = vmatpush1.msra.mxu0 %v402
        %1603 = vmatprep.subr.mxu0 0.0
        %1604 = vmatpush1.msra.mxu0 %v403
        %1605 = vmatprep.subr.mxu0 0.0
        %1606 = vmatpush1.msra.mxu0 %v404
        %1607 = vmatprep.subr.mxu0 0.0
        %1608 = vmatpush1.msra.mxu0 0.0
        %1609 = vmatprep.subr.mxu0 0.0
        %1610 = vmatpush1.msra.mxu0 0.0
        %1611 = vmatprep.subr.mxu0 0.0
        %1612 = vmatpush1.msra.mxu0 0.0
        %1613 = vmatprep.subr.mxu0 0.0
        %1614 = vmatpush1.msra.mxu0 0.0
        %1615 = vmatprep.subr.mxu0 0.0
        %1616 = vmatpush1.msra.mxu0 0.0
        %1617 = vmatprep.subr.mxu0 0.0
        %1618 = vmatpush1.msra.mxu0 0.0
        %1619 = vmatprep.subr.mxu0 0.0
        %1620 = vmatpush1.msra.mxu0 0.0
        %1621 = vmatprep.subr.mxu0 0.0
        %1622 = vmatpush1.msra.mxu0 0.0
        %1623 = vmatprep.subr.mxu0 0.0
        %1624 = vmatpush1.msra.mxu0 0.0
        %1625 = vmatprep.subr.mxu0 0.0
        %1626 = vmatpush1.msra.mxu0 0.0
        %1627 = vmatprep.subr.mxu0 0.0
        %1628 = vmatpush1.msra.mxu0 0.0
        %1629 = vmatprep.subr.mxu0 0.0
        %1630 = vmatpush1.msra.mxu0 0.0
        %1631 = vmatprep.subr.mxu0 0.0
        %1632 = vmatpush1.msra.mxu0 0.0
        %1633 = vmatprep.subr.mxu0 0.0
        %1634 = vmatpush1.msra.mxu0 0.0
        %1635 = vmatprep.subr.mxu0 0.0
        %1636 = vmatpush1.msra.mxu0 0.0
        %1637 = vmatprep.subr.mxu0 0.0
        %1638 = vmatpush1.msra.mxu0 0.0
        %1639 = vmatprep.subr.mxu0 0.0
        %1640 = vmatpush1.msra.mxu0 0.0
        %1641 = vmatprep.subr.mxu0 0.0
        %1642 = vmatpush1.msra.mxu0 0.0
        %1643 = vmatprep.subr.mxu0 0.0
        %1644 = vmatpush1.msra.mxu0 0.0
        %1645 = vmatprep.subr.mxu0 0.0
        %1646 = vmatpush1.msra.mxu0 0.0
        %1647 = vmatprep.subr.mxu0 0.0
        %1648 = vmatpush1.msra.mxu0 0.0
        %1649 = vmatprep.subr.mxu0 0.0
        %1650 = vmatpush1.msra.mxu0 0.0
        %1651 = vmatprep.subr.mxu0 0.0
        %1652 = vmatpush1.msra.mxu0 0.0
        %1653 = vmatprep.subr.mxu0 0.0
        %1654 = vmatpush1.msra.mxu0 0.0
        %1655 = vmatprep.subr.mxu0 0.0
        %1656 = vmatpush1.msra.mxu0 0.0
        %1657 = vmatprep.subr.mxu0 0.0
        %1658 = vmatpush1.msra.mxu0 0.0
        %1659 = vmatprep.subr.mxu0 0.0
        %1660 = vmatpush1.msra.mxu0 0.0
        %1661 = vmatprep.subr.mxu0 0.0
        %1662 = vmatpush1.msra.mxu0 0.0
        %1663 = vmatprep.mubr.f32.mxu0 0.0
        %1664 = vmatmul.mubr.f32.gmra.mrb[0].mxu0 %v1597
        %v1665 = vpop.f32.mrb[0].mxu0
        %v1666 = vadd.f32 0.0, %v1665
        %v1667 = vpop.f32.mrb[0].mxu0
        %1668 = vdwg.mxu0
        %v1669 = vmax.f32 %v1666, 1e-20
        %v1670 = vrcp.pop %v1669
        %v1671 = vmul.f32 1.0, %v1670
        %v1673 = vsel %vm484, %v1671, 0
        %1675 = vmatprep.subr.mxu0 0.0
        %1676 = vmatpush1.msra.mxu0 %v490
        %1677 = vmatprep.subr.mxu0 0.0
        %1678 = vmatpush1.msra.mxu0 0.0
        %1679 = vmatprep.subr.mxu0 0.0
        %1680 = vmatpush1.msra.mxu0 0.0
        %1681 = vmatprep.subr.mxu0 0.0
        %1682 = vmatpush1.msra.mxu0 0.0
        %1683 = vmatprep.subr.mxu0 0.0
        %1684 = vmatpush1.msra.mxu0 0.0
        %1685 = vmatprep.subr.mxu0 0.0
        %1686 = vmatpush1.msra.mxu0 0.0
        %1687 = vmatprep.subr.mxu0 0.0
        %1688 = vmatpush1.msra.mxu0 0.0
        %1689 = vmatprep.subr.mxu0 0.0
        %1690 = vmatpush1.msra.mxu0 0.0
        %1691 = vmatprep.subr.mxu0 0.0
        %1692 = vmatpush1.msra.mxu0 0.0
        %1693 = vmatprep.subr.mxu0 0.0
        %1694 = vmatpush1.msra.mxu0 0.0
        %1695 = vmatprep.subr.mxu0 0.0
        %1696 = vmatpush1.msra.mxu0 0.0
        %1697 = vmatprep.subr.mxu0 0.0
        %1698 = vmatpush1.msra.mxu0 0.0
        %1699 = vmatprep.subr.mxu0 0.0
        %1700 = vmatpush1.msra.mxu0 0.0
        %1701 = vmatprep.subr.mxu0 0.0
        %1702 = vmatpush1.msra.mxu0 0.0
        %1703 = vmatprep.subr.mxu0 0.0
        %1704 = vmatpush1.msra.mxu0 0.0
        %1705 = vmatprep.subr.mxu0 0.0
        %1706 = vmatpush1.msra.mxu0 0.0
        %1707 = vmatprep.subr.mxu0 0.0
        %1708 = vmatpush1.msra.mxu0 0.0
        %1709 = vmatprep.subr.mxu0 0.0
        %1710 = vmatpush1.msra.mxu0 0.0
        %1711 = vmatprep.subr.mxu0 0.0
        %1712 = vmatpush1.msra.mxu0 0.0
        %1713 = vmatprep.subr.mxu0 0.0
        %1714 = vmatpush1.msra.mxu0 0.0
        %1715 = vmatprep.subr.mxu0 0.0
        %1716 = vmatpush1.msra.mxu0 0.0
        %1717 = vmatprep.subr.mxu0 0.0
        %1718 = vmatpush1.msra.mxu0 0.0
        %1719 = vmatprep.subr.mxu0 0.0
        %1720 = vmatpush1.msra.mxu0 0.0
        %1721 = vmatprep.subr.mxu0 0.0
        %1722 = vmatpush1.msra.mxu0 0.0
        %1723 = vmatprep.subr.mxu0 0.0
        %1724 = vmatpush1.msra.mxu0 0.0
        %1725 = vmatprep.subr.mxu0 0.0
        %1726 = vmatpush1.msra.mxu0 0.0
        %1727 = vmatprep.subr.mxu0 0.0
        %1728 = vmatpush1.msra.mxu0 0.0
        %1729 = vmatprep.subr.mxu0 0.0
        %1730 = vmatpush1.msra.mxu0 0.0
        %1731 = vmatprep.subr.mxu0 0.0
        %1732 = vmatpush1.msra.mxu0 0.0
        %1733 = vmatprep.subr.mxu0 0.0
        %1734 = vmatpush1.msra.mxu0 0.0
        %1735 = vmatprep.subr.mxu0 0.0
        %1736 = vmatpush1.msra.mxu0 0.0
        %1737 = vmatprep.subr.mxu0 0.0
        %1738 = vmatpush1.msra.mxu0 0.0
        %1739 = vmatprep.mubr.f32.mxu0 0.0
        %1740 = vmatmul.mubr.f32.gmra.mrb[0].mxu0 %v1673
        %v1741 = vpop.f32.mrb[0].mxu0
        %v1742 = vadd.f32 0.0, %v1741
        %v1743 = vpop.f32.mrb[0].mxu0
        %1744 = vdwg.mxu0
        %v1745 = vmul.f32 %v1595, %v1742
        %v1747 = vsel %vm407, %v1745, 0
        %1749 = vmatprep.subr.mxu0 0.0
        %1750 = vmatpush1.msra.mxu0 %v393
        %1751 = vmatprep.subr.mxu0 0.0
        %1752 = vmatpush1.msra.mxu0 %v394
        %1753 = vmatprep.subr.mxu0 0.0
        %1754 = vmatpush1.msra.mxu0 %v395
        %1755 = vmatprep.subr.mxu0 0.0
        %1756 = vmatpush1.msra.mxu0 %v396
        %1757 = vmatprep.subr.mxu0 0.0
        %1758 = vmatpush1.msra.mxu0 0.0
        %1759 = vmatprep.subr.mxu0 0.0
        %1760 = vmatpush1.msra.mxu0 0.0
        %1761 = vmatprep.subr.mxu0 0.0
        %1762 = vmatpush1.msra.mxu0 0.0
        %1763 = vmatprep.subr.mxu0 0.0
        %1764 = vmatpush1.msra.mxu0 0.0
        %1765 = vmatprep.subr.mxu0 0.0
        %1766 = vmatpush1.msra.mxu0 0.0
        %1767 = vmatprep.subr.mxu0 0.0
        %1768 = vmatpush1.msra.mxu0 0.0
        %1769 = vmatprep.subr.mxu0 0.0
        %1770 = vmatpush1.msra.mxu0 0.0
        %1771 = vmatprep.subr.mxu0 0.0
        %1772 = vmatpush1.msra.mxu0 0.0
        %1773 = vmatprep.subr.mxu0 0.0
        %1774 = vmatpush1.msra.mxu0 0.0
        %1775 = vmatprep.subr.mxu0 0.0
        %1776 = vmatpush1.msra.mxu0 0.0
        %1777 = vmatprep.subr.mxu0 0.0
        %1778 = vmatpush1.msra.mxu0 0.0
        %1779 = vmatprep.subr.mxu0 0.0
        %1780 = vmatpush1.msra.mxu0 0.0
        %1781 = vmatprep.subr.mxu0 0.0
        %1782 = vmatpush1.msra.mxu0 0.0
        %1783 = vmatprep.subr.mxu0 0.0
        %1784 = vmatpush1.msra.mxu0 0.0
        %1785 = vmatprep.subr.mxu0 0.0
        %1786 = vmatpush1.msra.mxu0 0.0
        %1787 = vmatprep.subr.mxu0 0.0
        %1788 = vmatpush1.msra.mxu0 0.0
        %1789 = vmatprep.subr.mxu0 0.0
        %1790 = vmatpush1.msra.mxu0 0.0
        %1791 = vmatprep.subr.mxu0 0.0
        %1792 = vmatpush1.msra.mxu0 0.0
        %1793 = vmatprep.subr.mxu0 0.0
        %1794 = vmatpush1.msra.mxu0 0.0
        %1795 = vmatprep.subr.mxu0 0.0
        %1796 = vmatpush1.msra.mxu0 0.0
        %1797 = vmatprep.subr.mxu0 0.0
        %1798 = vmatpush1.msra.mxu0 0.0
        %1799 = vmatprep.subr.mxu0 0.0
        %1800 = vmatpush1.msra.mxu0 0.0
        %1801 = vmatprep.subr.mxu0 0.0
        %1802 = vmatpush1.msra.mxu0 0.0
        %1803 = vmatprep.subr.mxu0 0.0
        %1804 = vmatpush1.msra.mxu0 0.0
        %1805 = vmatprep.subr.mxu0 0.0
        %1806 = vmatpush1.msra.mxu0 0.0
        %1807 = vmatprep.subr.mxu0 0.0
        %1808 = vmatpush1.msra.mxu0 0.0
        %1809 = vmatprep.subr.mxu0 0.0
        %1810 = vmatpush1.msra.mxu0 0.0
        %1811 = vmatprep.subr.mxu0 0.0
        %1812 = vmatpush1.msra.mxu0 0.0
        %1813 = vmatprep.mubr.f32.mxu0 0.0
        %1814 = vmatmul.mubr.f32.gmra.mrb[0].mxu0 %v1747
        %v1815 = vpop.f32.mrb[0].mxu0
        %v1816 = vadd.f32 0.0, %v1815
        %v1817 = vpop.f32.mrb[0].mxu0
        %1818 = vdwg.mxu0
        %1819 = vmatprep.subr.mxu0 0.0
        %1820 = vmatpush1.msra.mxu0 %v1816
        %1821 = vmatprep.subr.mxu0 0.0
        %1822 = vmatpush1.msra.mxu0 0.0
        %1823 = vmatprep.subr.mxu0 0.0
        %1824 = vmatpush1.msra.mxu0 0.0
        %1825 = vmatprep.subr.mxu0 0.0
        %1826 = vmatpush1.msra.mxu0 0.0
        %1827 = vmatprep.subr.mxu0 0.0
        %1828 = vmatpush1.msra.mxu0 0.0
        %1829 = vmatprep.subr.mxu0 0.0
        %1830 = vmatpush1.msra.mxu0 0.0
        %1831 = vmatprep.subr.mxu0 0.0
        %1832 = vmatpush1.msra.mxu0 0.0
        %1833 = vmatprep.subr.mxu0 0.0
        %1834 = vmatpush1.msra.mxu0 0.0
        %1835 = vmatprep.subr.mxu0 0.0
        %1836 = vmatpush1.msra.mxu0 0.0
        %1837 = vmatprep.subr.mxu0 0.0
        %1838 = vmatpush1.msra.mxu0 0.0
        %1839 = vmatprep.subr.mxu0 0.0
        %1840 = vmatpush1.msra.mxu0 0.0
        %1841 = vmatprep.subr.mxu0 0.0
        %1842 = vmatpush1.msra.mxu0 0.0
        %1843 = vmatprep.subr.mxu0 0.0
        %1844 = vmatpush1.msra.mxu0 0.0
        %1845 = vmatprep.subr.mxu0 0.0
        %1846 = vmatpush1.msra.mxu0 0.0
        %1847 = vmatprep.subr.mxu0 0.0
        %1848 = vmatpush1.msra.mxu0 0.0
        %1849 = vmatprep.subr.mxu0 0.0
        %1850 = vmatpush1.msra.mxu0 0.0
        %1851 = vmatprep.subr.mxu0 0.0
        %1852 = vmatpush1.msra.mxu0 0.0
        %1853 = vmatprep.subr.mxu0 0.0
        %1854 = vmatpush1.msra.mxu0 0.0
        %1855 = vmatprep.subr.mxu0 0.0
        %1856 = vmatpush1.msra.mxu0 0.0
        %1857 = vmatprep.subr.mxu0 0.0
        %1858 = vmatpush1.msra.mxu0 0.0
        %1859 = vmatprep.subr.mxu0 0.0
        %1860 = vmatpush1.msra.mxu0 0.0
        %1861 = vmatprep.subr.mxu0 0.0
        %1862 = vmatpush1.msra.mxu0 0.0
        %1863 = vmatprep.subr.mxu0 0.0
        %1864 = vmatpush1.msra.mxu0 0.0
        %1865 = vmatprep.subr.mxu0 0.0
        %1866 = vmatpush1.msra.mxu0 0.0
        %1867 = vmatprep.subr.mxu0 0.0
        %1868 = vmatpush1.msra.mxu0 0.0
        %1869 = vmatprep.subr.mxu0 0.0
        %1870 = vmatpush1.msra.mxu0 0.0
        %1871 = vmatprep.subr.mxu0 0.0
        %1872 = vmatpush1.msra.mxu0 0.0
        %1873 = vmatprep.subr.mxu0 0.0
        %1874 = vmatpush1.msra.mxu0 0.0
        %1875 = vmatprep.subr.mxu0 0.0
        %1876 = vmatpush1.msra.mxu0 0.0
        %1877 = vmatprep.subr.mxu0 0.0
        %1878 = vmatpush1.msra.mxu0 0.0
        %1879 = vmatprep.subr.mxu0 0.0
        %1880 = vmatpush1.msra.mxu0 0.0
        %1881 = vmatprep.subr.mxu0 0.0
        %1882 = vmatpush1.msra.mxu0 0.0
        %1883 = vmatprep.mubr.f32.mxu0 0.0
        %1884 = vmatmul.mubr.f32.gmra.mrb[0].mxu0 %v638
        %v1885 = vpop.f32.mrb[0].mxu0
        %v1886 = vadd.f32 0.0, %v1885
        %v1887 = vpop.f32.mrb[0].mxu0
        %1888 = vdwg.mxu0
        %v1889 = vmax.f32 %v1886, 0.0001
        %v1891 = vsel %vm407, %v1889, 0
        %1893 = vmatprep.subr.mxu0 0.0
        %1894 = vmatpush1.msra.mxu0 %v401
        %1895 = vmatprep.subr.mxu0 0.0
        %1896 = vmatpush1.msra.mxu0 %v402
        %1897 = vmatprep.subr.mxu0 0.0
        %1898 = vmatpush1.msra.mxu0 %v403
        %1899 = vmatprep.subr.mxu0 0.0
        %1900 = vmatpush1.msra.mxu0 %v404
        %1901 = vmatprep.subr.mxu0 0.0
        %1902 = vmatpush1.msra.mxu0 0.0
        %1903 = vmatprep.subr.mxu0 0.0
        %1904 = vmatpush1.msra.mxu0 0.0
        %1905 = vmatprep.subr.mxu0 0.0
        %1906 = vmatpush1.msra.mxu0 0.0
        %1907 = vmatprep.subr.mxu0 0.0
        %1908 = vmatpush1.msra.mxu0 0.0
        %1909 = vmatprep.subr.mxu0 0.0
        %1910 = vmatpush1.msra.mxu0 0.0
        %1911 = vmatprep.subr.mxu0 0.0
        %1912 = vmatpush1.msra.mxu0 0.0
        %1913 = vmatprep.subr.mxu0 0.0
        %1914 = vmatpush1.msra.mxu0 0.0
        %1915 = vmatprep.subr.mxu0 0.0
        %1916 = vmatpush1.msra.mxu0 0.0
        %1917 = vmatprep.subr.mxu0 0.0
        %1918 = vmatpush1.msra.mxu0 0.0
        %1919 = vmatprep.subr.mxu0 0.0
        %1920 = vmatpush1.msra.mxu0 0.0
        %1921 = vmatprep.subr.mxu0 0.0
        %1922 = vmatpush1.msra.mxu0 0.0
        %1923 = vmatprep.subr.mxu0 0.0
        %1924 = vmatpush1.msra.mxu0 0.0
        %1925 = vmatprep.subr.mxu0 0.0
        %1926 = vmatpush1.msra.mxu0 0.0
        %1927 = vmatprep.subr.mxu0 0.0
        %1928 = vmatpush1.msra.mxu0 0.0
        %1929 = vmatprep.subr.mxu0 0.0
        %1930 = vmatpush1.msra.mxu0 0.0
        %1931 = vmatprep.subr.mxu0 0.0
        %1932 = vmatpush1.msra.mxu0 0.0
        %1933 = vmatprep.subr.mxu0 0.0
        %1934 = vmatpush1.msra.mxu0 0.0
        %1935 = vmatprep.subr.mxu0 0.0
        %1936 = vmatpush1.msra.mxu0 0.0
        %1937 = vmatprep.subr.mxu0 0.0
        %1938 = vmatpush1.msra.mxu0 0.0
        %1939 = vmatprep.subr.mxu0 0.0
        %1940 = vmatpush1.msra.mxu0 0.0
        %1941 = vmatprep.subr.mxu0 0.0
        %1942 = vmatpush1.msra.mxu0 0.0
        %1943 = vmatprep.subr.mxu0 0.0
        %1944 = vmatpush1.msra.mxu0 0.0
        %1945 = vmatprep.subr.mxu0 0.0
        %1946 = vmatpush1.msra.mxu0 0.0
        %1947 = vmatprep.subr.mxu0 0.0
        %1948 = vmatpush1.msra.mxu0 0.0
        %1949 = vmatprep.subr.mxu0 0.0
        %1950 = vmatpush1.msra.mxu0 0.0
        %1951 = vmatprep.subr.mxu0 0.0
        %1952 = vmatpush1.msra.mxu0 0.0
        %1953 = vmatprep.subr.mxu0 0.0
        %1954 = vmatpush1.msra.mxu0 0.0
        %1955 = vmatprep.subr.mxu0 0.0
        %1956 = vmatpush1.msra.mxu0 0.0
        %1957 = vmatprep.mubr.f32.mxu0 0.0
        %1958 = vmatmul.mubr.f32.gmra.mrb[0].mxu0 %v1891
        %v1959 = vpop.f32.mrb[0].mxu0
        %v1960 = vadd.f32 0.0, %v1959
        %v1961 = vpop.f32.mrb[0].mxu0
        %1962 = vdwg.mxu0
        %v1964 = vsel %vm484, %v1960, 0
        %1966 = vmatprep.subr.mxu0 0.0
        %1967 = vmatpush1.msra.mxu0 %v490
        %1968 = vmatprep.subr.mxu0 0.0
        %1969 = vmatpush1.msra.mxu0 0.0
        %1970 = vmatprep.subr.mxu0 0.0
        %1971 = vmatpush1.msra.mxu0 0.0
        %1972 = vmatprep.subr.mxu0 0.0
        %1973 = vmatpush1.msra.mxu0 0.0
        %1974 = vmatprep.subr.mxu0 0.0
        %1975 = vmatpush1.msra.mxu0 0.0
        %1976 = vmatprep.subr.mxu0 0.0
        %1977 = vmatpush1.msra.mxu0 0.0
        %1978 = vmatprep.subr.mxu0 0.0
        %1979 = vmatpush1.msra.mxu0 0.0
        %1980 = vmatprep.subr.mxu0 0.0
        %1981 = vmatpush1.msra.mxu0 0.0
        %1982 = vmatprep.subr.mxu0 0.0
        %1983 = vmatpush1.msra.mxu0 0.0
        %1984 = vmatprep.subr.mxu0 0.0
        %1985 = vmatpush1.msra.mxu0 0.0
        %1986 = vmatprep.subr.mxu0 0.0
        %1987 = vmatpush1.msra.mxu0 0.0
        %1988 = vmatprep.subr.mxu0 0.0
        %1989 = vmatpush1.msra.mxu0 0.0
        %1990 = vmatprep.subr.mxu0 0.0
        %1991 = vmatpush1.msra.mxu0 0.0
        %1992 = vmatprep.subr.mxu0 0.0
        %1993 = vmatpush1.msra.mxu0 0.0
        %1994 = vmatprep.subr.mxu0 0.0
        %1995 = vmatpush1.msra.mxu0 0.0
        %1996 = vmatprep.subr.mxu0 0.0
        %1997 = vmatpush1.msra.mxu0 0.0
        %1998 = vmatprep.subr.mxu0 0.0
        %1999 = vmatpush1.msra.mxu0 0.0
        %2000 = vmatprep.subr.mxu0 0.0
        %2001 = vmatpush1.msra.mxu0 0.0
        %2002 = vmatprep.subr.mxu0 0.0
        %2003 = vmatpush1.msra.mxu0 0.0
        %2004 = vmatprep.subr.mxu0 0.0
        %2005 = vmatpush1.msra.mxu0 0.0
        %2006 = vmatprep.subr.mxu0 0.0
        %2007 = vmatpush1.msra.mxu0 0.0
        %2008 = vmatprep.subr.mxu0 0.0
        %2009 = vmatpush1.msra.mxu0 0.0
        %2010 = vmatprep.subr.mxu0 0.0
        %2011 = vmatpush1.msra.mxu0 0.0
        %2012 = vmatprep.subr.mxu0 0.0
        %2013 = vmatpush1.msra.mxu0 0.0
        %2014 = vmatprep.subr.mxu0 0.0
        %2015 = vmatpush1.msra.mxu0 0.0
        %2016 = vmatprep.subr.mxu0 0.0
        %2017 = vmatpush1.msra.mxu0 0.0
        %2018 = vmatprep.subr.mxu0 0.0
        %2019 = vmatpush1.msra.mxu0 0.0
        %2020 = vmatprep.subr.mxu0 0.0
        %2021 = vmatpush1.msra.mxu0 0.0
        %2022 = vmatprep.subr.mxu0 0.0
        %2023 = vmatpush1.msra.mxu0 0.0
        %2024 = vmatprep.subr.mxu0 0.0
        %2025 = vmatpush1.msra.mxu0 0.0
        %2026 = vmatprep.subr.mxu0 0.0
        %2027 = vmatpush1.msra.mxu0 0.0
        %2028 = vmatprep.subr.mxu0 0.0
        %2029 = vmatpush1.msra.mxu0 0.0
        %2030 = vmatprep.mubr.f32.mxu0 0.0
        %2031 = vmatmul.mubr.f32.gmra.mrb[0].mxu0 %v1964
        %v2032 = vpop.f32.mrb[0].mxu0
        %v2033 = vadd.f32 0.0, %v2032
        %v2034 = vpop.f32.mrb[0].mxu0
        %2035 = vdwg.mxu0
        %v2036 = vmul.f32 %v562, %v2033
        %v2037 = vrcp.pop %v1889
        %v2038 = vmul.f32 1.0, %v2037
        %v2039 = vmul.f32 %v2036, %v2038
        %v2041 = vsel %vm407, %v2039, 0
        %2043 = vmatprep.subr.mxu0 0.0
        %2044 = vmatpush1.msra.mxu0 %v397
        %2045 = vmatprep.subr.mxu0 0.0
        %2046 = vmatpush1.msra.mxu0 %v398
        %2047 = vmatprep.subr.mxu0 0.0
        %2048 = vmatpush1.msra.mxu0 %v399
        %2049 = vmatprep.subr.mxu0 0.0
        %2050 = vmatpush1.msra.mxu0 %v400
        %2051 = vmatprep.subr.mxu0 0.0
        %2052 = vmatpush1.msra.mxu0 0.0
        %2053 = vmatprep.subr.mxu0 0.0
        %2054 = vmatpush1.msra.mxu0 0.0
        %2055 = vmatprep.subr.mxu0 0.0
        %2056 = vmatpush1.msra.mxu0 0.0
        %2057 = vmatprep.subr.mxu0 0.0
        %2058 = vmatpush1.msra.mxu0 0.0
        %2059 = vmatprep.subr.mxu0 0.0
        %2060 = vmatpush1.msra.mxu0 0.0
        %2061 = vmatprep.subr.mxu0 0.0
        %2062 = vmatpush1.msra.mxu0 0.0
        %2063 = vmatprep.subr.mxu0 0.0
        %2064 = vmatpush1.msra.mxu0 0.0
        %2065 = vmatprep.subr.mxu0 0.0
        %2066 = vmatpush1.msra.mxu0 0.0
        %2067 = vmatprep.subr.mxu0 0.0
        %2068 = vmatpush1.msra.mxu0 0.0
        %2069 = vmatprep.subr.mxu0 0.0
        %2070 = vmatpush1.msra.mxu0 0.0
        %2071 = vmatprep.subr.mxu0 0.0
        %2072 = vmatpush1.msra.mxu0 0.0
        %2073 = vmatprep.subr.mxu0 0.0
        %2074 = vmatpush1.msra.mxu0 0.0
        %2075 = vmatprep.subr.mxu0 0.0
        %2076 = vmatpush1.msra.mxu0 0.0
        %2077 = vmatprep.subr.mxu0 0.0
        %2078 = vmatpush1.msra.mxu0 0.0
        %2079 = vmatprep.subr.mxu0 0.0
        %2080 = vmatpush1.msra.mxu0 0.0
        %2081 = vmatprep.subr.mxu0 0.0
        %2082 = vmatpush1.msra.mxu0 0.0
        %2083 = vmatprep.subr.mxu0 0.0
        %2084 = vmatpush1.msra.mxu0 0.0
        %2085 = vmatprep.subr.mxu0 0.0
        %2086 = vmatpush1.msra.mxu0 0.0
        %2087 = vmatprep.subr.mxu0 0.0
        %2088 = vmatpush1.msra.mxu0 0.0
        %2089 = vmatprep.subr.mxu0 0.0
        %2090 = vmatpush1.msra.mxu0 0.0
        %2091 = vmatprep.subr.mxu0 0.0
        %2092 = vmatpush1.msra.mxu0 0.0
        %2093 = vmatprep.subr.mxu0 0.0
        %2094 = vmatpush1.msra.mxu0 0.0
        %2095 = vmatprep.subr.mxu0 0.0
        %2096 = vmatpush1.msra.mxu0 0.0
        %2097 = vmatprep.subr.mxu0 0.0
        %2098 = vmatpush1.msra.mxu0 0.0
        %2099 = vmatprep.subr.mxu0 0.0
        %2100 = vmatpush1.msra.mxu0 0.0
        %2101 = vmatprep.subr.mxu0 0.0
        %2102 = vmatpush1.msra.mxu0 0.0
        %2103 = vmatprep.subr.mxu0 0.0
        %2104 = vmatpush1.msra.mxu0 0.0
        %2105 = vmatprep.subr.mxu0 0.0
        %2106 = vmatpush1.msra.mxu0 0.0
        %2107 = vmatprep.mubr.f32.mxu0 0.0
        %2108 = vmatmul.mubr.f32.gmra.mrb[0].mxu0 %v2041
        %v2109 = vpop.f32.mrb[0].mxu0
        %v2110 = vadd.f32 0.0, %v2109
        %v2111 = vpop.f32.mrb[0].mxu0
        %2112 = vdwg.mxu0
        %2113 = vmatprep.subr.mxu0 0.0
        %2114 = vmatpush1.msra.mxu0 %v2110
        %2115 = vmatprep.subr.mxu0 0.0
        %2116 = vmatpush1.msra.mxu0 0.0
        %2117 = vmatprep.subr.mxu0 0.0
        %2118 = vmatpush1.msra.mxu0 0.0
        %2119 = vmatprep.subr.mxu0 0.0
        %2120 = vmatpush1.msra.mxu0 0.0
        %2121 = vmatprep.subr.mxu0 0.0
        %2122 = vmatpush1.msra.mxu0 0.0
        %2123 = vmatprep.subr.mxu0 0.0
        %2124 = vmatpush1.msra.mxu0 0.0
        %2125 = vmatprep.subr.mxu0 0.0
        %2126 = vmatpush1.msra.mxu0 0.0
        %2127 = vmatprep.subr.mxu0 0.0
        %2128 = vmatpush1.msra.mxu0 0.0
        %2129 = vmatprep.subr.mxu0 0.0
        %2130 = vmatpush1.msra.mxu0 0.0
        %2131 = vmatprep.subr.mxu0 0.0
        %2132 = vmatpush1.msra.mxu0 0.0
        %2133 = vmatprep.subr.mxu0 0.0
        %2134 = vmatpush1.msra.mxu0 0.0
        %2135 = vmatprep.subr.mxu0 0.0
        %2136 = vmatpush1.msra.mxu0 0.0
        %2137 = vmatprep.subr.mxu0 0.0
        %2138 = vmatpush1.msra.mxu0 0.0
        %2139 = vmatprep.subr.mxu0 0.0
        %2140 = vmatpush1.msra.mxu0 0.0
        %2141 = vmatprep.subr.mxu0 0.0
        %2142 = vmatpush1.msra.mxu0 0.0
        %2143 = vmatprep.subr.mxu0 0.0
        %2144 = vmatpush1.msra.mxu0 0.0
        %2145 = vmatprep.subr.mxu0 0.0
        %2146 = vmatpush1.msra.mxu0 0.0
        %2147 = vmatprep.subr.mxu0 0.0
        %2148 = vmatpush1.msra.mxu0 0.0
        %2149 = vmatprep.subr.mxu0 0.0
        %2150 = vmatpush1.msra.mxu0 0.0
        %2151 = vmatprep.subr.mxu0 0.0
        %2152 = vmatpush1.msra.mxu0 0.0
        %2153 = vmatprep.subr.mxu0 0.0
        %2154 = vmatpush1.msra.mxu0 0.0
        %2155 = vmatprep.subr.mxu0 0.0
        %2156 = vmatpush1.msra.mxu0 0.0
        %2157 = vmatprep.subr.mxu0 0.0
        %2158 = vmatpush1.msra.mxu0 0.0
        %2159 = vmatprep.subr.mxu0 0.0
        %2160 = vmatpush1.msra.mxu0 0.0
        %2161 = vmatprep.subr.mxu0 0.0
        %2162 = vmatpush1.msra.mxu0 0.0
        %2163 = vmatprep.subr.mxu0 0.0
        %2164 = vmatpush1.msra.mxu0 0.0
        %2165 = vmatprep.subr.mxu0 0.0
        %2166 = vmatpush1.msra.mxu0 0.0
        %2167 = vmatprep.subr.mxu0 0.0
        %2168 = vmatpush1.msra.mxu0 0.0
        %2169 = vmatprep.subr.mxu0 0.0
        %2170 = vmatpush1.msra.mxu0 0.0
        %2171 = vmatprep.subr.mxu0 0.0
        %2172 = vmatpush1.msra.mxu0 0.0
        %2173 = vmatprep.subr.mxu0 0.0
        %2174 = vmatpush1.msra.mxu0 0.0
        %2175 = vmatprep.subr.mxu0 0.0
        %2176 = vmatpush1.msra.mxu0 0.0
        %2177 = vmatprep.mubr.f32.mxu0 0.0
        %2178 = vmatmul.mubr.f32.gmra.mrb[0].mxu0 %v935
        %v2179 = vpop.f32.mrb[0].mxu0
        %v2180 = vadd.f32 0.0, %v2179
        %v2181 = vpop.f32.mrb[0].mxu0
        %2182 = vdwg.mxu0
        %v2183 = vmul.f32 %v1745, %v2180
        %v2185 = vsel %vm407, %v2183, 0
        %2187 = vmatprep.subr.mxu0 0.0
        %2188 = vmatpush1.msra.mxu0 %v401
        %2189 = vmatprep.subr.mxu0 0.0
        %2190 = vmatpush1.msra.mxu0 %v402
        %2191 = vmatprep.subr.mxu0 0.0
        %2192 = vmatpush1.msra.mxu0 %v403
        %2193 = vmatprep.subr.mxu0 0.0
        %2194 = vmatpush1.msra.mxu0 %v404
        %2195 = vmatprep.subr.mxu0 0.0
        %2196 = vmatpush1.msra.mxu0 0.0
        %2197 = vmatprep.subr.mxu0 0.0
        %2198 = vmatpush1.msra.mxu0 0.0
        %2199 = vmatprep.subr.mxu0 0.0
        %2200 = vmatpush1.msra.mxu0 0.0
        %2201 = vmatprep.subr.mxu0 0.0
        %2202 = vmatpush1.msra.mxu0 0.0
        %2203 = vmatprep.subr.mxu0 0.0
        %2204 = vmatpush1.msra.mxu0 0.0
        %2205 = vmatprep.subr.mxu0 0.0
        %2206 = vmatpush1.msra.mxu0 0.0
        %2207 = vmatprep.subr.mxu0 0.0
        %2208 = vmatpush1.msra.mxu0 0.0
        %2209 = vmatprep.subr.mxu0 0.0
        %2210 = vmatpush1.msra.mxu0 0.0
        %2211 = vmatprep.subr.mxu0 0.0
        %2212 = vmatpush1.msra.mxu0 0.0
        %2213 = vmatprep.subr.mxu0 0.0
        %2214 = vmatpush1.msra.mxu0 0.0
        %2215 = vmatprep.subr.mxu0 0.0
        %2216 = vmatpush1.msra.mxu0 0.0
        %2217 = vmatprep.subr.mxu0 0.0
        %2218 = vmatpush1.msra.mxu0 0.0
        %2219 = vmatprep.subr.mxu0 0.0
        %2220 = vmatpush1.msra.mxu0 0.0
        %2221 = vmatprep.subr.mxu0 0.0
        %2222 = vmatpush1.msra.mxu0 0.0
        %2223 = vmatprep.subr.mxu0 0.0
        %2224 = vmatpush1.msra.mxu0 0.0
        %2225 = vmatprep.subr.mxu0 0.0
        %2226 = vmatpush1.msra.mxu0 0.0
        %2227 = vmatprep.subr.mxu0 0.0
        %2228 = vmatpush1.msra.mxu0 0.0
        %2229 = vmatprep.subr.mxu0 0.0
        %2230 = vmatpush1.msra.mxu0 0.0
        %2231 = vmatprep.subr.mxu0 0.0
        %2232 = vmatpush1.msra.mxu0 0.0
        %2233 = vmatprep.subr.mxu0 0.0
        %2234 = vmatpush1.msra.mxu0 0.0
        %2235 = vmatprep.subr.mxu0 0.0
        %2236 = vmatpush1.msra.mxu0 0.0
        %2237 = vmatprep.subr.mxu0 0.0
        %2238 = vmatpush1.msra.mxu0 0.0
        %2239 = vmatprep.subr.mxu0 0.0
        %2240 = vmatpush1.msra.mxu0 0.0
        %2241 = vmatprep.subr.mxu0 0.0
        %2242 = vmatpush1.msra.mxu0 0.0
        %2243 = vmatprep.subr.mxu0 0.0
        %2244 = vmatpush1.msra.mxu0 0.0
        %2245 = vmatprep.subr.mxu0 0.0
        %2246 = vmatpush1.msra.mxu0 0.0
        %2247 = vmatprep.subr.mxu0 0.0
        %2248 = vmatpush1.msra.mxu0 0.0
        %2249 = vmatprep.subr.mxu0 0.0
        %2250 = vmatpush1.msra.mxu0 0.0
        %2251 = vmatprep.mubr.f32.mxu0 0.0
        %2252 = vmatmul.mubr.f32.gmra.mrb[0].mxu0 %v2185
        %v2253 = vpop.f32.mrb[0].mxu0
        %v2254 = vadd.f32 0.0, %v2253
        %v2255 = vpop.f32.mrb[0].mxu0
        %2256 = vdwg.mxu0
        %v2257 = vmax.f32 %v2254, 1e-20
        %v2258 = vrcp.pop %v2257
        %v2259 = vmul.f32 1.0, %v2258
        %v2261 = vsel %vm484, %v2259, 0
        %2263 = vmatprep.subr.mxu0 0.0
        %2264 = vmatpush1.msra.mxu0 %v490
        %2265 = vmatprep.subr.mxu0 0.0
        %2266 = vmatpush1.msra.mxu0 0.0
        %2267 = vmatprep.subr.mxu0 0.0
        %2268 = vmatpush1.msra.mxu0 0.0
        %2269 = vmatprep.subr.mxu0 0.0
        %2270 = vmatpush1.msra.mxu0 0.0
        %2271 = vmatprep.subr.mxu0 0.0
        %2272 = vmatpush1.msra.mxu0 0.0
        %2273 = vmatprep.subr.mxu0 0.0
        %2274 = vmatpush1.msra.mxu0 0.0
        %2275 = vmatprep.subr.mxu0 0.0
        %2276 = vmatpush1.msra.mxu0 0.0
        %2277 = vmatprep.subr.mxu0 0.0
        %2278 = vmatpush1.msra.mxu0 0.0
        %2279 = vmatprep.subr.mxu0 0.0
        %2280 = vmatpush1.msra.mxu0 0.0
        %2281 = vmatprep.subr.mxu0 0.0
        %2282 = vmatpush1.msra.mxu0 0.0
        %2283 = vmatprep.subr.mxu0 0.0
        %2284 = vmatpush1.msra.mxu0 0.0
        %2285 = vmatprep.subr.mxu0 0.0
        %2286 = vmatpush1.msra.mxu0 0.0
        %2287 = vmatprep.subr.mxu0 0.0
        %2288 = vmatpush1.msra.mxu0 0.0
        %2289 = vmatprep.subr.mxu0 0.0
        %2290 = vmatpush1.msra.mxu0 0.0
        %2291 = vmatprep.subr.mxu0 0.0
        %2292 = vmatpush1.msra.mxu0 0.0
        %2293 = vmatprep.subr.mxu0 0.0
        %2294 = vmatpush1.msra.mxu0 0.0
        %2295 = vmatprep.subr.mxu0 0.0
        %2296 = vmatpush1.msra.mxu0 0.0
        %2297 = vmatprep.subr.mxu0 0.0
        %2298 = vmatpush1.msra.mxu0 0.0
        %2299 = vmatprep.subr.mxu0 0.0
        %2300 = vmatpush1.msra.mxu0 0.0
        %2301 = vmatprep.subr.mxu0 0.0
        %2302 = vmatpush1.msra.mxu0 0.0
        %2303 = vmatprep.subr.mxu0 0.0
        %2304 = vmatpush1.msra.mxu0 0.0
        %2305 = vmatprep.subr.mxu0 0.0
        %2306 = vmatpush1.msra.mxu0 0.0
        %2307 = vmatprep.subr.mxu0 0.0
        %2308 = vmatpush1.msra.mxu0 0.0
        %2309 = vmatprep.subr.mxu0 0.0
        %2310 = vmatpush1.msra.mxu0 0.0
        %2311 = vmatprep.subr.mxu0 0.0
        %2312 = vmatpush1.msra.mxu0 0.0
        %2313 = vmatprep.subr.mxu0 0.0
        %2314 = vmatpush1.msra.mxu0 0.0
        %2315 = vmatprep.subr.mxu0 0.0
        %2316 = vmatpush1.msra.mxu0 0.0
        %2317 = vmatprep.subr.mxu0 0.0
        %2318 = vmatpush1.msra.mxu0 0.0
        %2319 = vmatprep.subr.mxu0 0.0
        %2320 = vmatpush1.msra.mxu0 0.0
        %2321 = vmatprep.subr.mxu0 0.0
        %2322 = vmatpush1.msra.mxu0 0.0
        %2323 = vmatprep.subr.mxu0 0.0
        %2324 = vmatpush1.msra.mxu0 0.0
        %2325 = vmatprep.subr.mxu0 0.0
        %2326 = vmatpush1.msra.mxu0 0.0
        %2327 = vmatprep.mubr.f32.mxu0 0.0
        %2328 = vmatmul.mubr.f32.gmra.mrb[0].mxu0 %v2261
        %v2329 = vpop.f32.mrb[0].mxu0
        %v2330 = vadd.f32 0.0, %v2329
        %v2331 = vpop.f32.mrb[0].mxu0
        %2332 = vdwg.mxu0
        %v2333 = vmul.f32 %v2183, %v2330
        %v2334 = vld [vmem:[#allocation8] sm:$0xff]
        %v2335 = vld [vmem:[#allocation8 + $0x8] sm:$0xff]
        %v2336 = vld [vmem:[#allocation8 + $0x10] sm:$0xff]
        %v2337 = vld [vmem:[#allocation8 + $0x18] sm:$0xff]
        %v2338 = vld [vmem:[%s8] sm:$0x1]
        %v2340 = vlaneseq
        %v2341 = vshrl.u32 %v2340, 7
        %v2342 = vsub.s32 0, %v2341
        %v2343 = vrot.slane %v2338, %v2342
        %v2346 = vsel %vm407, %v2333, 0
        %2348 = vmatprep.subr.mxu0 0.0
        %2349 = vmatpush1.msra.mxu0 %v2334
        %2350 = vmatprep.subr.mxu0 0.0
        %2351 = vmatpush1.msra.mxu0 %v2335
        %2352 = vmatprep.subr.mxu0 0.0
        %2353 = vmatpush1.msra.mxu0 %v2336
        %2354 = vmatprep.subr.mxu0 0.0
        %2355 = vmatpush1.msra.mxu0 %v2337
        %2356 = vmatprep.subr.mxu0 0.0
        %2357 = vmatpush1.msra.mxu0 0.0
        %2358 = vmatprep.subr.mxu0 0.0
        %2359 = vmatpush1.msra.mxu0 0.0
        %2360 = vmatprep.subr.mxu0 0.0
        %2361 = vmatpush1.msra.mxu0 0.0
        %2362 = vmatprep.subr.mxu0 0.0
        %2363 = vmatpush1.msra.mxu0 0.0
        %2364 = vmatprep.subr.mxu0 0.0
        %2365 = vmatpush1.msra.mxu0 0.0
        %2366 = vmatprep.subr.mxu0 0.0
        %2367 = vmatpush1.msra.mxu0 0.0
        %2368 = vmatprep.subr.mxu0 0.0
        %2369 = vmatpush1.msra.mxu0 0.0
        %2370 = vmatprep.subr.mxu0 0.0
        %2371 = vmatpush1.msra.mxu0 0.0
        %2372 = vmatprep.subr.mxu0 0.0
        %2373 = vmatpush1.msra.mxu0 0.0
        %2374 = vmatprep.subr.mxu0 0.0
        %2375 = vmatpush1.msra.mxu0 0.0
        %2376 = vmatprep.subr.mxu0 0.0
        %2377 = vmatpush1.msra.mxu0 0.0
        %2378 = vmatprep.subr.mxu0 0.0
        %2379 = vmatpush1.msra.mxu0 0.0
        %2380 = vmatprep.subr.mxu0 0.0
        %2381 = vmatpush1.msra.mxu0 0.0
        %2382 = vmatprep.subr.mxu0 0.0
        %2383 = vmatpush1.msra.mxu0 0.0
        %2384 = vmatprep.subr.mxu0 0.0
        %2385 = vmatpush1.msra.mxu0 0.0
        %2386 = vmatprep.subr.mxu0 0.0
        %2387 = vmatpush1.msra.mxu0 0.0
        %2388 = vmatprep.subr.mxu0 0.0
        %2389 = vmatpush1.msra.mxu0 0.0
        %2390 = vmatprep.subr.mxu0 0.0
        %2391 = vmatpush1.msra.mxu0 0.0
        %2392 = vmatprep.subr.mxu0 0.0
        %2393 = vmatpush1.msra.mxu0 0.0
        %2394 = vmatprep.subr.mxu0 0.0
        %2395 = vmatpush1.msra.mxu0 0.0
        %2396 = vmatprep.subr.mxu0 0.0
        %2397 = vmatpush1.msra.mxu0 0.0
        %2398 = vmatprep.subr.mxu0 0.0
        %2399 = vmatpush1.msra.mxu0 0.0
        %2400 = vmatprep.subr.mxu0 0.0
        %2401 = vmatpush1.msra.mxu0 0.0
        %2402 = vmatprep.subr.mxu0 0.0
        %2403 = vmatpush1.msra.mxu0 0.0
        %2404 = vmatprep.subr.mxu0 0.0
        %2405 = vmatpush1.msra.mxu0 0.0
        %2406 = vmatprep.subr.mxu0 0.0
        %2407 = vmatpush1.msra.mxu0 0.0
        %2408 = vmatprep.subr.mxu0 0.0
        %2409 = vmatpush1.msra.mxu0 0.0
        %2410 = vmatprep.subr.mxu0 0.0
        %2411 = vmatpush1.msra.mxu0 0.0
        %2412 = vmatprep.mubr.f32.mxu0 0.0
        %2413 = vmatmul.mubr.f32.gmra.mrb[0].mxu0 %v2346
        %v2414 = vpop.f32.mrb[0].mxu0
        %v2415 = vadd.f32 %v2343, %v2414
        %v2416 = vpop.f32.mrb[0].mxu0
        %2417 = vdwg.mxu0
        %2418 = vst.msk [vmem:[%s389] sm:$0xff] %vm407, %v2415
        %s2419 = sand.u32 %s230, 1
        %s2420 = scalar_lea.sflag [#allocation4], %s2419
        %s2421 = sand.u32 %s230, 1
        %s2422 = smul.addr %s2421, 8
        %s2423 = scalar_lea.vmem [#allocation10], %s2422
        // Predicated region
        $region73: #{tpu_custom_call.1} parent=55 // pred_check
          %p2424 = pneg %p240
        $region74: #{tpu_custom_call.1} parent=55 // pred_check_branch
          %2426 = sbr.rel (%p2424) target = $region76
        $region75: #{tpu_custom_call.1} parent=55 // pred_region
          %s2428 = ssub.s32 128, 128
          %2429 = vsyncadd %s2420, %s2428
          %s2430 = smul.addr %s28, 128
          %s2431 = scalar_lea.hbm %s9, %s2430
          %s2433 = sshll.u32 %s2423, 4
          %s2434 = int_to_ptr.vmem [resolvable:$true] %s2433
          %2436 = dma.vmem_to_hbm [thread:$0]  %s2434, 128, %s2431, %s2420
        $region76: #{tpu_custom_call.1} parent=55 // pred_fallthru
          _
      $region56: #{tpu_custom_call.1} parent=5 // pred_fallthru
        _
      %p2437 = scmp.le.s32.totalorder 2, %s23
      // Predicated region
      $region77: #{tpu_custom_call.1} parent=5 // pred_check
        %p2438 = pneg %p2437
      $region78: #{tpu_custom_call.1} parent=5 // pred_check_branch
        %2440 = sbr.rel (%p2438) target = $region80
      $region79: #{tpu_custom_call.1} parent=5 // pred_region
        %s2441 = ssub.s32 %s23, 2
        // Predicated region
        $region81: #{tpu_custom_call.1} parent=79 // pred_check
          %p2442 = pneg %p246
        $region82: #{tpu_custom_call.1} parent=79 // pred_check_branch
          %2444 = sbr.rel (%p2442) target = $region84
        $region83: #{tpu_custom_call.1} parent=79 // pred_region
          %s2445 = sand.u32 %s231, 1
          %s2446 = scalar_lea.sflag [#allocation4], %s2445
          %s2447 = sand.u32 %s231, 1
          %s2448 = smul.addr %s2447, 8
          %s2449 = scalar_lea.vmem [#allocation10], %s2448
          %2450 = dma.done %s2446, 128
        $region84: #{tpu_custom_call.1} parent=79 // pred_fallthru
          _
      $region80: #{tpu_custom_call.1} parent=5 // pred_fallthru
        _
    $region6: #{tpu_custom_call.1} parent=1 // loop_footer
      %s27 = sadd.s32 1, %s23
    $region7: #{tpu_custom_call.1} parent=1 // loop_footer_branch
      %22 = sbr.rel target = $region3
    $region8: #{tpu_custom_call.1} parent=1 // loop_exit
      _
    %2451 = vsyncpa [#allocation3], 1
    %s2452 = scalar_lea.sflag [#allocation3], 1
    %2453 = vsyncpa %s2452, 1
    %2454 = vsyncpa [#allocation6], 1
    %2455 = vsyncpa [#allocation9], 1
    %2456 = vsyncpa [#allocation4], 1
    %s2457 = scalar_lea.sflag [#allocation4], 1
    %2458 = vsyncpa %s2457, 1

</llo_original>
